<compile_context>
chip_gen: v7x
topology: tpu7x:2x2x1
jax: 0.10.0
libtpu: 0.0.40
codegen_flags: <defaults>
</compile_context>

<pallas_src>
import functools

import jax
import jax.numpy as jnp
from jax.experimental import pallas as pl
from jax.experimental.pallas import tpu as pltpu


# -----------------------------------------------------------------------------
# Fused Pallas kernel (one graph per grid step)
# -----------------------------------------------------------------------------
def _fused_gnn_kernel(treedef, x_ref, e_ref, *rest):
    """Full GNN forward for one graph.

    x_ref : [N, F]   total node features (node feats ++ flavour embedding)
    e_ref : [N, N]   scalar edge feature e[dst, src]
    rest  : flattened weight refs (unflattened via `treedef`) + out_ref last
    """
    out_ref = rest[-1]
    params = jax.tree_util.tree_unflatten(treedef, rest[:-1])

    x = x_ref[...]                       # [N, F]
    e = e_ref[...]                       # [N, N]
    N = x.shape[0]

    h = None                             # node hidden state
    for layer in params['layers']:
        # ---- EdgeNetwork: msg(i,j) = tanh(relu([x_i,h_i,x_j,h_j,e_ij]W1+b1)W2+b2)
        # W1 is pre-split row-wise (dst-x / dst-h / src-x / src-h / edge row),
        # so the per-edge concat is never materialized; b1 folded into dst proj.
        edge = layer['edge']
        a = jnp.dot(x, edge['w1dx'][...],
                    preferred_element_type=jnp.float32) + edge['b1'][...]     # [N, mid]
        s = jnp.dot(x, edge['w1sx'][...],
                    preferred_element_type=jnp.float32)                       # [N, mid]
        if h is not None:
            a = a + jnp.dot(h, edge['w1dh'][...],
                            preferred_element_type=jnp.float32)
            s = s + jnp.dot(h, edge['w1sh'][...],
                            preferred_element_type=jnp.float32)
        w1e = edge['w1e'][...]                                                # [1, mid]
        pre = a[:, None, :] + s[None, :, :] + e[:, :, None] * w1e[None, :, :]  # [N,N,mid]
        hid = jnp.maximum(pre, 0.0).reshape(N * N, -1)                        # [N*N, mid]
        msg = jnp.tanh(
            jnp.dot(hid, edge['w2'][...], preferred_element_type=jnp.float32)
            + edge['b2'][...])                                                # [N*N, Eout]
        mailbox = jnp.sum(msg.reshape(N, N, -1), axis=1)                      # [N, Eout]

        # ---- NodeNetwork: two small MLPs, concat, row-wise L2 normalize.
        node = layer['node']
        h1 = jnp.dot(x, node['w11x'][...],
                     preferred_element_type=jnp.float32) + node['b11'][...]
        if h is not None:
            h1 = h1 + jnp.dot(h, node['w11h'][...],
                              preferred_element_type=jnp.float32)
        h1 = jnp.maximum(h1, 0.0)
        r1 = jnp.tanh(jnp.dot(h1, node['w12'][...],
                              preferred_element_type=jnp.float32) + node['b12'][...])
        h2 = jnp.maximum(
            jnp.dot(mailbox, node['w21'][...],
                    preferred_element_type=jnp.float32) + node['b21'][...], 0.0)
        r2 = jnp.tanh(jnp.dot(h2, node['w22'][...],
                              preferred_element_type=jnp.float32) + node['b22'][...])
        r = jnp.concatenate([r1, r2], axis=1)
        h = r * jax.lax.rsqrt(jnp.sum(r * r, axis=1, keepdims=True) + 1e-12)

    # ---- Jet-efficiency head: first hidden layer consumes [x, h] via split rows.
    jet = params['jet']
    y = (jnp.dot(x, jet[0]['wx'][...], preferred_element_type=jnp.float32)
         + jnp.dot(h, jet[0]['wh'][...], preferred_element_type=jnp.float32)
         + jet[0]['b'][...])
    y = jnp.maximum(y, 0.0)
    for lyr in jet[1:-1]:
        y = jnp.maximum(
            jnp.dot(y, lyr['w'][...], preferred_element_type=jnp.float32)
            + lyr['b'][...], 0.0)
    y = (jnp.dot(y, jet[-1]['w'][...], preferred_element_type=jnp.float32)
         + jet[-1]['b'][...])
    out_ref[...] = y


def fused_forward(kparams, x, edge_feats):
    """x: [B, N, F], edge_feats: [B, N, N] -> [B, N, n_classes]."""
    B, N, F = x.shape
    C = kparams['jet'][-1]['w'].shape[1]
    leaves, treedef = jax.tree_util.tree_flatten(kparams)

    kernel = functools.partial(_fused_gnn_kernel, treedef)
    w_specs = [pl.BlockSpec(leaf.shape, lambda b: (0, 0)) for leaf in leaves]

    return pl.pallas_call(
        kernel,
        out_shape=jax.ShapeDtypeStruct((B, N, C), jnp.float32),
        grid=(B,),
        in_specs=[pl.BlockSpec((None, N, F), lambda b: (b, 0, 0)),
                  pl.BlockSpec((None, N, N), lambda b: (b, 0, 0))] + w_specs,
        out_specs=pl.BlockSpec((None, N, C), lambda b: (b, 0, 0)),
        compiler_params=pltpu.CompilerParams(
            dimension_semantics=("parallel",)),   # v7x: 2 TCs split the batch
    )(x, edge_feats, *leaves)


def gnn_forward(embedding, kparams, node_feats, flavour_idx, edge_feats):
    # Flavour-embedding lookup (data-dependent gather) kept as plain-JAX glue.
    emb = jnp.take(embedding, flavour_idx, axis=0)          # [B, N, D]
    x = jnp.concatenate([node_feats, emb], axis=2)          # [B, N, F]
    return fused_forward(kparams, x, edge_feats)


# -----------------------------------------------------------------------------
# Parameter construction (PyTorch nn.Linear-style uniform init) + row splitting
# -----------------------------------------------------------------------------
def _init_linear(key, fan_in, fan_out):
    k1, k2 = jax.random.split(key)
    bound = 1.0 / float(fan_in) ** 0.5
    W = jax.random.uniform(k1, (fan_in, fan_out), jnp.float32, -bound, bound)
    b = jax.random.uniform(k2, (1, fan_out), jnp.float32, -bound, bound)
    return W, b


def build_params(key, n_node_features, flavour_num_emb, flavour_dim,
                 edge_sizes, node_sizes, jet_hidden, n_classes):
    keys = iter(jax.random.split(key, 64))
    F = n_node_features + flavour_dim
    params = {'embedding': jax.random.normal(next(keys),
                                             (flavour_num_emb, flavour_dim),
                                             jnp.float32)}
    layers = []
    for i in range(len(edge_sizes)):
        H_in = 0 if i == 0 else node_sizes[i - 1]
        E_out, H_out = edge_sizes[i], node_sizes[i]
        # EdgeNetwork
        in_e = 2 * (F + H_in) + 1
        mid_e = (2 * (F + H_in) + E_out) // 2
        W1, b1 = _init_linear(next(keys), in_e, mid_e)
        W2, b2 = _init_linear(next(keys), mid_e, E_out)
        # NodeNetwork
        out_both = H_out // 2
        in1 = F + H_in
        mid1 = (F + H_in + out_both) // 2
        W11, b11 = _init_linear(next(keys), in1, mid1)
        W12, b12 = _init_linear(next(keys), mid1, out_both)
        W21, b21 = _init_linear(next(keys), E_out, out_both)
        W22, b22 = _init_linear(next(keys), out_both, out_both)
        layers.append({'edge': (W1, b1, W2, b2),
                       'node': (W11, b11, W12, b12, W21, b21, W22, b22)})
    params['layers'] = layers

    jet = []
    dims = [F + node_sizes[-1]] + list(jet_hidden) + [n_classes]
    for i in range(len(dims) - 1):
        jet.append(_init_linear(next(keys), dims[i], dims[i + 1]))
    params['jet'] = jet
    return params


def split_params(params, F):
    """Split weight rows so the kernel never needs to concatenate [x, h]."""
    kp = {'layers': [], 'jet': []}
    h_in = 0
    for layer in params['layers']:
        W1, b1, W2, b2 = layer['edge']
        FH = F + h_in
        edge = {'w1dx': W1[:F], 'w1sx': W1[FH:FH + F],
                'w1e': W1[2 * FH:2 * FH + 1], 'b1': b1, 'w2': W2, 'b2': b2}
        if h_in > 0:
            edge['w1dh'] = W1[F:FH]
            edge['w1sh'] = W1[FH + F:2 * FH]
        W11, b11, W12, b12, W21, b21, W22, b22 = layer['node']
        node = {'w11x': W11[:F], 'b11': b11, 'w12': W12, 'b12': b12,
                'w21': W21, 'b21': b21, 'w22': W22, 'b22': b22}
        if h_in > 0:
            node['w11h'] = W11[F:FH]
        kp['layers'].append({'edge': edge, 'node': node})
        h_in = W12.shape[1] + W22.shape[1]

    W0, b0 = params['jet'][0]
    kp['jet'].append({'wx': W0[:F], 'wh': W0[F:], 'b': b0})
    for (W, b) in params['jet'][1:]:
        kp['jet'].append({'w': W, 'b': b})
    return kp


# -----------------------------------------------------------------------------
# Pure-JAX reference (single graph) for correctness check
# -----------------------------------------------------------------------------
def ref_forward_single(params, node_feats, flavour_idx, edge_feats):
    emb = jnp.take(params['embedding'], flavour_idx, axis=0)
    x = jnp.concatenate([node_feats, emb], axis=1)
    N = x.shape[0]
    h = None
    for layer in params['layers']:
        dst_in = x if h is None else jnp.concatenate([x, h], axis=1)
        W1, b1, W2, b2 = layer['edge']
        dst_rep = jnp.broadcast_to(dst_in[:, None, :], (N, N, dst_in.shape[1]))
        src_rep = jnp.broadcast_to(dst_in[None, :, :], (N, N, dst_in.shape[1]))
        inp = jnp.concatenate([dst_rep, src_rep, edge_feats[:, :, None]], axis=2)
        hid = jax.nn.relu(inp @ W1 + b1[0])
        msg = jnp.tanh(hid @ W2 + b2[0])
        mailbox = msg.sum(axis=1)
        W11, b11, W12, b12, W21, b21, W22, b22 = layer['node']
        r1 = jnp.tanh(jax.nn.relu(dst_in @ W11 + b11) @ W12 + b12)
        r2 = jnp.tanh(jax.nn.relu(mailbox @ W21 + b21) @ W22 + b22)
        r = jnp.concatenate([r1, r2], axis=1)
        h = r / jnp.linalg.norm(r, axis=1, keepdims=True)
    y = jnp.concatenate([x, h], axis=1)
    for (W, b) in params['jet'][:-1]:
        y = jax.nn.relu(y @ W + b)
    W, b = params['jet'][-1]
    return y @ W + b


# -----------------------------------------------------------------------------
if __name__ == "__main__":
    # Small, module-consistent config
    B_GRAPHS = 2
    N_NODES = 8
    N_NODE_FEATURES = 4
    FLAVOUR_NUM_EMB, FLAVOUR_DIM = 6, 4          # total node features = 8
    EDGE_SIZES = [8, 8]
    NODE_SIZES = [8, 8]                           # must be even
    JET_HIDDEN = [16, 8]
    N_CLASSES = 3

    key = jax.random.PRNGKey(0)
    k_par, k_x, k_fl, k_e = jax.random.split(key, 4)

    params = build_params(k_par, N_NODE_FEATURES, FLAVOUR_NUM_EMB, FLAVOUR_DIM,
                          EDGE_SIZES, NODE_SIZES, JET_HIDDEN, N_CLASSES)
    F_TOTAL = N_NODE_FEATURES + FLAVOUR_DIM
    kparams = split_params(params, F_TOTAL)

    node_feats = jax.random.normal(
        k_x, (B_GRAPHS, N_NODES, N_NODE_FEATURES), jnp.float32)
    flavour_idx = jax.random.randint(
        k_fl, (B_GRAPHS, N_NODES), 0, FLAVOUR_NUM_EMB, jnp.int32)
    edge_feats = jax.random.normal(
        k_e, (B_GRAPHS, N_NODES, N_NODES), jnp.float32)

    out = jax.jit(gnn_forward)(params['embedding'], kparams,
                               node_feats, flavour_idx, edge_feats)
    out = jax.block_until_ready(out)

    ref = jnp.stack([
        ref_forward_single(params, node_feats[b], flavour_idx[b], edge_feats[b])
        for b in range(B_GRAPHS)
    ])

    assert out.shape == (B_GRAPHS, N_NODES, N_CLASSES), out.shape
    max_err = float(jnp.max(jnp.abs(out - ref)))
    assert max_err < 1e-2, f"mismatch vs reference: {max_err}"

    print("KERNEL_OK")
</pallas_src>

<mosaic_0001>
module attributes {stable_mosaic.version = 11 : i64} {
  func.func @_fused_gnn_kernel(%arg0: i32, %arg1: memref<1x8x8xf32, #tpu.memory_space<vmem>>, %arg2: memref<1x8x8xf32, #tpu.memory_space<vmem>>, %arg3: memref<1x16xf32, #tpu.memory_space<vmem>>, %arg4: memref<8x16xf32, #tpu.memory_space<vmem>>, %arg5: memref<8x16xf32, #tpu.memory_space<vmem>>, %arg6: memref<1x8xf32, #tpu.memory_space<vmem>>, %arg7: memref<16x8xf32, #tpu.memory_space<vmem>>, %arg8: memref<1x3xf32, #tpu.memory_space<vmem>>, %arg9: memref<8x3xf32, #tpu.memory_space<vmem>>, %arg10: memref<1x12xf32, #tpu.memory_space<vmem>>, %arg11: memref<1x8xf32, #tpu.memory_space<vmem>>, %arg12: memref<8x12xf32, #tpu.memory_space<vmem>>, %arg13: memref<1x12xf32, #tpu.memory_space<vmem>>, %arg14: memref<8x12xf32, #tpu.memory_space<vmem>>, %arg15: memref<12x8xf32, #tpu.memory_space<vmem>>, %arg16: memref<1x6xf32, #tpu.memory_space<vmem>>, %arg17: memref<1x4xf32, #tpu.memory_space<vmem>>, %arg18: memref<1x4xf32, #tpu.memory_space<vmem>>, %arg19: memref<1x4xf32, #tpu.memory_space<vmem>>, %arg20: memref<8x6xf32, #tpu.memory_space<vmem>>, %arg21: memref<6x4xf32, #tpu.memory_space<vmem>>, %arg22: memref<8x4xf32, #tpu.memory_space<vmem>>, %arg23: memref<4x4xf32, #tpu.memory_space<vmem>>, %arg24: memref<1x20xf32, #tpu.memory_space<vmem>>, %arg25: memref<1x8xf32, #tpu.memory_space<vmem>>, %arg26: memref<8x20xf32, #tpu.memory_space<vmem>>, %arg27: memref<8x20xf32, #tpu.memory_space<vmem>>, %arg28: memref<1x20xf32, #tpu.memory_space<vmem>>, %arg29: memref<8x20xf32, #tpu.memory_space<vmem>>, %arg30: memref<8x20xf32, #tpu.memory_space<vmem>>, %arg31: memref<20x8xf32, #tpu.memory_space<vmem>>, %arg32: memref<1x10xf32, #tpu.memory_space<vmem>>, %arg33: memref<1x4xf32, #tpu.memory_space<vmem>>, %arg34: memref<1x4xf32, #tpu.memory_space<vmem>>, %arg35: memref<1x4xf32, #tpu.memory_space<vmem>>, %arg36: memref<8x10xf32, #tpu.memory_space<vmem>>, %arg37: memref<8x10xf32, #tpu.memory_space<vmem>>, %arg38: memref<10x4xf32, #tpu.memory_space<vmem>>, %arg39: memref<8x4xf32, #tpu.memory_space<vmem>>, %arg40: memref<4x4xf32, #tpu.memory_space<vmem>>, %arg41: memref<1x8x3xf32, #tpu.memory_space<vmem>>) attributes {dimension_semantics = [#tpu.dimension_semantics<parallel>], iteration_bounds = array<i64: 2>, scalar_prefetch = 0 : i64, scratch_operands = 0 : i64, tpu.core_type = #tpu.core_type<tc>, window_params = [{transform_indices = @transform_0, window_bounds = array<i64: 1, 8, 8>}, {transform_indices = @transform_1, window_bounds = array<i64: 1, 8, 8>}, {pipeline_mode = #tpu.pipeline_mode<synchronous>, transform_indices = @transform_2, window_bounds = array<i64: 1, 16>}, {pipeline_mode = #tpu.pipeline_mode<synchronous>, transform_indices = @transform_3, window_bounds = array<i64: 8, 16>}, {pipeline_mode = #tpu.pipeline_mode<synchronous>, transform_indices = @transform_4, window_bounds = array<i64: 8, 16>}, {pipeline_mode = #tpu.pipeline_mode<synchronous>, transform_indices = @transform_5, window_bounds = array<i64: 1, 8>}, {pipeline_mode = #tpu.pipeline_mode<synchronous>, transform_indices = @transform_6, window_bounds = array<i64: 16, 8>}, {pipeline_mode = #tpu.pipeline_mode<synchronous>, transform_indices = @transform_7, window_bounds = array<i64: 1, 3>}, {pipeline_mode = #tpu.pipeline_mode<synchronous>, transform_indices = @transform_8, window_bounds = array<i64: 8, 3>}, {pipeline_mode = #tpu.pipeline_mode<synchronous>, transform_indices = @transform_9, window_bounds = array<i64: 1, 12>}, {pipeline_mode = #tpu.pipeline_mode<synchronous>, transform_indices = @transform_10, window_bounds = array<i64: 1, 8>}, {pipeline_mode = #tpu.pipeline_mode<synchronous>, transform_indices = @transform_11, window_bounds = array<i64: 8, 12>}, {pipeline_mode = #tpu.pipeline_mode<synchronous>, transform_indices = @transform_12, window_bounds = array<i64: 1, 12>}, {pipeline_mode = #tpu.pipeline_mode<synchronous>, transform_indices = @transform_13, window_bounds = array<i64: 8, 12>}, {pipeline_mode = #tpu.pipeline_mode<synchronous>, transform_indices = @transform_14, window_bounds = array<i64: 12, 8>}, {pipeline_mode = #tpu.pipeline_mode<synchronous>, transform_indices = @transform_15, window_bounds = array<i64: 1, 6>}, {pipeline_mode = #tpu.pipeline_mode<synchronous>, transform_indices = @transform_16, window_bounds = array<i64: 1, 4>}, {pipeline_mode = #tpu.pipeline_mode<synchronous>, transform_indices = @transform_17, window_bounds = array<i64: 1, 4>}, {pipeline_mode = #tpu.pipeline_mode<synchronous>, transform_indices = @transform_18, window_bounds = array<i64: 1, 4>}, {pipeline_mode = #tpu.pipeline_mode<synchronous>, transform_indices = @transform_19, window_bounds = array<i64: 8, 6>}, {pipeline_mode = #tpu.pipeline_mode<synchronous>, transform_indices = @transform_20, window_bounds = array<i64: 6, 4>}, {pipeline_mode = #tpu.pipeline_mode<synchronous>, transform_indices = @transform_21, window_bounds = array<i64: 8, 4>}, {pipeline_mode = #tpu.pipeline_mode<synchronous>, transform_indices = @transform_22, window_bounds = array<i64: 4, 4>}, {pipeline_mode = #tpu.pipeline_mode<synchronous>, transform_indices = @transform_23, window_bounds = array<i64: 1, 20>}, {pipeline_mode = #tpu.pipeline_mode<synchronous>, transform_indices = @transform_24, window_bounds = array<i64: 1, 8>}, {pipeline_mode = #tpu.pipeline_mode<synchronous>, transform_indices = @transform_25, window_bounds = array<i64: 8, 20>}, {pipeline_mode = #tpu.pipeline_mode<synchronous>, transform_indices = @transform_26, window_bounds = array<i64: 8, 20>}, {pipeline_mode = #tpu.pipeline_mode<synchronous>, transform_indices = @transform_27, window_bounds = array<i64: 1, 20>}, {pipeline_mode = #tpu.pipeline_mode<synchronous>, transform_indices = @transform_28, window_bounds = array<i64: 8, 20>}, {pipeline_mode = #tpu.pipeline_mode<synchronous>, transform_indices = @transform_29, window_bounds = array<i64: 8, 20>}, {pipeline_mode = #tpu.pipeline_mode<synchronous>, transform_indices = @transform_30, window_bounds = array<i64: 20, 8>}, {pipeline_mode = #tpu.pipeline_mode<synchronous>, transform_indices = @transform_31, window_bounds = array<i64: 1, 10>}, {pipeline_mode = #tpu.pipeline_mode<synchronous>, transform_indices = @transform_32, window_bounds = array<i64: 1, 4>}, {pipeline_mode = #tpu.pipeline_mode<synchronous>, transform_indices = @transform_33, window_bounds = array<i64: 1, 4>}, {pipeline_mode = #tpu.pipeline_mode<synchronous>, transform_indices = @transform_34, window_bounds = array<i64: 1, 4>}, {pipeline_mode = #tpu.pipeline_mode<synchronous>, transform_indices = @transform_35, window_bounds = array<i64: 8, 10>}, {pipeline_mode = #tpu.pipeline_mode<synchronous>, transform_indices = @transform_36, window_bounds = array<i64: 8, 10>}, {pipeline_mode = #tpu.pipeline_mode<synchronous>, transform_indices = @transform_37, window_bounds = array<i64: 10, 4>}, {pipeline_mode = #tpu.pipeline_mode<synchronous>, transform_indices = @transform_38, window_bounds = array<i64: 8, 4>}, {pipeline_mode = #tpu.pipeline_mode<synchronous>, transform_indices = @transform_39, window_bounds = array<i64: 4, 4>}, {transform_indices = @transform_40, window_bounds = array<i64: 1, 8, 3>}]} {
    %c0 = arith.constant 0 : index
    %c0_0 = arith.constant 0 : index
    %c0_1 = arith.constant 0 : index
    %0 = vector.load %arg1[%c0, %c0_0, %c0_1] : memref<1x8x8xf32, #tpu.memory_space<vmem>>, vector<1x8x8xf32>
    %1 = vector.shape_cast %0 : vector<1x8x8xf32> to vector<8x8xf32>
    %c0_2 = arith.constant 0 : index
    %c0_3 = arith.constant 0 : index
    %c0_4 = arith.constant 0 : index
    %2 = vector.load %arg2[%c0_2, %c0_3, %c0_4] : memref<1x8x8xf32, #tpu.memory_space<vmem>>, vector<1x8x8xf32>
    %3 = vector.shape_cast %2 : vector<1x8x8xf32> to vector<8x8xf32>
    %c0_5 = arith.constant 0 : index
    %c0_6 = arith.constant 0 : index
    %4 = vector.load %arg12[%c0_5, %c0_6] : memref<8x12xf32, #tpu.memory_space<vmem>>, vector<8x12xf32>
    %cst = arith.constant dense<0.000000e+00> : vector<8x12xf32>
    %5 = tpu.matmul %1, %4, %cst {dimension_numbers = #tpu.dot_dimension_numbers<[1], [0], [0], [1], [0, 0, 1, 1], [], []>} : vector<8x8xf32>, vector<8x12xf32>, vector<8x12xf32> -> vector<8x12xf32>
    %c0_7 = arith.constant 0 : index
    %c0_8 = arith.constant 0 : index
    %6 = vector.load %arg10[%c0_7, %c0_8] : memref<1x12xf32, #tpu.memory_space<vmem>>, vector<1x12xf32>
    %7 = vector.broadcast %6 : vector<1x12xf32> to vector<8x12xf32>
    %8 = arith.addf %5, %7 : vector<8x12xf32>
    %c0_9 = arith.constant 0 : index
    %c0_10 = arith.constant 0 : index
    %9 = vector.load %arg14[%c0_9, %c0_10] : memref<8x12xf32, #tpu.memory_space<vmem>>, vector<8x12xf32>
    %cst_11 = arith.constant dense<0.000000e+00> : vector<8x12xf32>
    %10 = tpu.matmul %1, %9, %cst_11 {dimension_numbers = #tpu.dot_dimension_numbers<[1], [0], [0], [1], [0, 0, 1, 1], [], []>} : vector<8x8xf32>, vector<8x12xf32>, vector<8x12xf32> -> vector<8x12xf32>
    %c0_12 = arith.constant 0 : index
    %c0_13 = arith.constant 0 : index
    %11 = vector.load %arg13[%c0_12, %c0_13] : memref<1x12xf32, #tpu.memory_space<vmem>>, vector<1x12xf32>
    %12 = vector.shape_cast %8 : vector<8x12xf32> to vector<8x1x12xf32>
    %13 = vector.shape_cast %10 : vector<8x12xf32> to vector<1x8x12xf32>
    %14 = vector.broadcast %12 : vector<8x1x12xf32> to vector<8x8x12xf32>
    %15 = vector.broadcast %13 : vector<1x8x12xf32> to vector<8x8x12xf32>
    %16 = arith.addf %14, %15 : vector<8x8x12xf32>
    %17 = vector.shape_cast %3 : vector<8x8xf32> to vector<8x8x1xf32>
    %18 = vector.shape_cast %11 : vector<1x12xf32> to vector<1x1x12xf32>
    %19 = vector.broadcast %17 : vector<8x8x1xf32> to vector<8x8x12xf32>
    %20 = vector.broadcast %18 : vector<1x1x12xf32> to vector<8x8x12xf32>
    %21 = arith.mulf %19, %20 : vector<8x8x12xf32>
    %22 = arith.addf %16, %21 : vector<8x8x12xf32>
    %cst_14 = arith.constant 0.000000e+00 : f32
    %23 = vector.broadcast %cst_14 : f32 to vector<8x8x12xf32>
    %24 = arith.maximumf %22, %23 : vector<8x8x12xf32>
    %25 = vector.shape_cast %24 : vector<8x8x12xf32> to vector<64x12xf32>
    %c0_15 = arith.constant 0 : index
    %c0_16 = arith.constant 0 : index
    %26 = vector.load %arg15[%c0_15, %c0_16] : memref<12x8xf32, #tpu.memory_space<vmem>>, vector<12x8xf32>
    %cst_17 = arith.constant dense<0.000000e+00> : vector<64x8xf32>
    %27 = tpu.matmul %25, %26, %cst_17 {dimension_numbers = #tpu.dot_dimension_numbers<[1], [0], [0], [1], [0, 0, 1, 1], [], []>} : vector<64x12xf32>, vector<12x8xf32>, vector<64x8xf32> -> vector<64x8xf32>
    %c0_18 = arith.constant 0 : index
    %c0_19 = arith.constant 0 : index
    %28 = vector.load %arg11[%c0_18, %c0_19] : memref<1x8xf32, #tpu.memory_space<vmem>>, vector<1x8xf32>
    %29 = vector.broadcast %28 : vector<1x8xf32> to vector<64x8xf32>
    %30 = arith.addf %27, %29 : vector<64x8xf32>
    %31 = math.tanh %30 : vector<64x8xf32>
    %32 = vector.shape_cast %31 : vector<64x8xf32> to vector<8x8x8xf32>
    %cst_20 = arith.constant dense<0.000000e+00> : vector<8x8xf32>
    %33 = vector.multi_reduction <add>, %32, %cst_20 [1] : vector<8x8x8xf32> to vector<8x8xf32>
    %c0_21 = arith.constant 0 : index
    %c0_22 = arith.constant 0 : index
    %34 = vector.load %arg20[%c0_21, %c0_22] : memref<8x6xf32, #tpu.memory_space<vmem>>, vector<8x6xf32>
    %cst_23 = arith.constant dense<0.000000e+00> : vector<8x6xf32>
    %35 = tpu.matmul %1, %34, %cst_23 {dimension_numbers = #tpu.dot_dimension_numbers<[1], [0], [0], [1], [0, 0, 1, 1], [], []>} : vector<8x8xf32>, vector<8x6xf32>, vector<8x6xf32> -> vector<8x6xf32>
    %c0_24 = arith.constant 0 : index
    %c0_25 = arith.constant 0 : index
    %36 = vector.load %arg16[%c0_24, %c0_25] : memref<1x6xf32, #tpu.memory_space<vmem>>, vector<1x6xf32>
    %37 = vector.broadcast %36 : vector<1x6xf32> to vector<8x6xf32>
    %38 = arith.addf %35, %37 : vector<8x6xf32>
    %cst_26 = arith.constant 0.000000e+00 : f32
    %39 = vector.broadcast %cst_26 : f32 to vector<8x6xf32>
    %40 = arith.maximumf %38, %39 : vector<8x6xf32>
    %c0_27 = arith.constant 0 : index
    %c0_28 = arith.constant 0 : index
    %41 = vector.load %arg21[%c0_27, %c0_28] : memref<6x4xf32, #tpu.memory_space<vmem>>, vector<6x4xf32>
    %cst_29 = arith.constant dense<0.000000e+00> : vector<8x4xf32>
    %42 = tpu.matmul %40, %41, %cst_29 {dimension_numbers = #tpu.dot_dimension_numbers<[1], [0], [0], [1], [0, 0, 1, 1], [], []>} : vector<8x6xf32>, vector<6x4xf32>, vector<8x4xf32> -> vector<8x4xf32>
    %c0_30 = arith.constant 0 : index
    %c0_31 = arith.constant 0 : index
    %43 = vector.load %arg17[%c0_30, %c0_31] : memref<1x4xf32, #tpu.memory_space<vmem>>, vector<1x4xf32>
    %44 = vector.broadcast %43 : vector<1x4xf32> to vector<8x4xf32>
    %45 = arith.addf %42, %44 : vector<8x4xf32>
    %46 = math.tanh %45 : vector<8x4xf32>
    %c0_32 = arith.constant 0 : index
    %c0_33 = arith.constant 0 : index
    %47 = vector.load %arg22[%c0_32, %c0_33] : memref<8x4xf32, #tpu.memory_space<vmem>>, vector<8x4xf32>
    %cst_34 = arith.constant dense<0.000000e+00> : vector<8x4xf32>
    %48 = tpu.matmul %33, %47, %cst_34 {dimension_numbers = #tpu.dot_dimension_numbers<[1], [0], [0], [1], [0, 0, 1, 1], [], []>} : vector<8x8xf32>, vector<8x4xf32>, vector<8x4xf32> -> vector<8x4xf32>
    %c0_35 = arith.constant 0 : index
    %c0_36 = arith.constant 0 : index
    %49 = vector.load %arg18[%c0_35, %c0_36] : memref<1x4xf32, #tpu.memory_space<vmem>>, vector<1x4xf32>
    %50 = vector.broadcast %49 : vector<1x4xf32> to vector<8x4xf32>
    %51 = arith.addf %48, %50 : vector<8x4xf32>
    %cst_37 = arith.constant 0.000000e+00 : f32
    %52 = vector.broadcast %cst_37 : f32 to vector<8x4xf32>
    %53 = arith.maximumf %51, %52 : vector<8x4xf32>
    %c0_38 = arith.constant 0 : index
    %c0_39 = arith.constant 0 : index
    %54 = vector.load %arg23[%c0_38, %c0_39] : memref<4x4xf32, #tpu.memory_space<vmem>>, vector<4x4xf32>
    %cst_40 = arith.constant dense<0.000000e+00> : vector<8x4xf32>
    %55 = tpu.matmul %53, %54, %cst_40 {dimension_numbers = #tpu.dot_dimension_numbers<[1], [0], [0], [1], [0, 0, 1, 1], [], []>} : vector<8x4xf32>, vector<4x4xf32>, vector<8x4xf32> -> vector<8x4xf32>
    %c0_41 = arith.constant 0 : index
    %c0_42 = arith.constant 0 : index
    %56 = vector.load %arg19[%c0_41, %c0_42] : memref<1x4xf32, #tpu.memory_space<vmem>>, vector<1x4xf32>
    %57 = vector.broadcast %56 : vector<1x4xf32> to vector<8x4xf32>
    %58 = arith.addf %55, %57 : vector<8x4xf32>
    %59 = math.tanh %58 : vector<8x4xf32>
    %60 = tpu.concatenate %46, %59 in 1 : vector<8x4xf32>, vector<8x4xf32> -> vector<8x8xf32>
    %61 = arith.mulf %60, %60 : vector<8x8xf32>
    %cst_43 = arith.constant dense<0.000000e+00> : vector<8xf32>
    %62 = vector.multi_reduction <add>, %61, %cst_43 [1] : vector<8x8xf32> to vector<8xf32>
    %63 = vector.shape_cast %62 : vector<8xf32> to vector<8x1xf32>
    %cst_44 = arith.constant 9.99999996E-13 : f32
    %64 = vector.broadcast %cst_44 : f32 to vector<8x1xf32>
    %65 = arith.addf %63, %64 : vector<8x1xf32>
    %66 = math.rsqrt %65 : vector<8x1xf32>
    %67 = vector.broadcast %66 : vector<8x1xf32> to vector<8x8xf32>
    %68 = arith.mulf %60, %67 : vector<8x8xf32>
    %c0_45 = arith.constant 0 : index
    %c0_46 = arith.constant 0 : index
    %69 = vector.load %arg27[%c0_45, %c0_46] : memref<8x20xf32, #tpu.memory_space<vmem>>, vector<8x20xf32>
    %cst_47 = arith.constant dense<0.000000e+00> : vector<8x20xf32>
    %70 = tpu.matmul %1, %69, %cst_47 {dimension_numbers = #tpu.dot_dimension_numbers<[1], [0], [0], [1], [0, 0, 1, 1], [], []>} : vector<8x8xf32>, vector<8x20xf32>, vector<8x20xf32> -> vector<8x20xf32>
    %c0_48 = arith.constant 0 : index
    %c0_49 = arith.constant 0 : index
    %71 = vector.load %arg24[%c0_48, %c0_49] : memref<1x20xf32, #tpu.memory_space<vmem>>, vector<1x20xf32>
    %72 = vector.broadcast %71 : vector<1x20xf32> to vector<8x20xf32>
    %73 = arith.addf %70, %72 : vector<8x20xf32>
    %c0_50 = arith.constant 0 : index
    %c0_51 = arith.constant 0 : index
    %74 = vector.load %arg30[%c0_50, %c0_51] : memref<8x20xf32, #tpu.memory_space<vmem>>, vector<8x20xf32>
    %cst_52 = arith.constant dense<0.000000e+00> : vector<8x20xf32>
    %75 = tpu.matmul %1, %74, %cst_52 {dimension_numbers = #tpu.dot_dimension_numbers<[1], [0], [0], [1], [0, 0, 1, 1], [], []>} : vector<8x8xf32>, vector<8x20xf32>, vector<8x20xf32> -> vector<8x20xf32>
    %c0_53 = arith.constant 0 : index
    %c0_54 = arith.constant 0 : index
    %76 = vector.load %arg26[%c0_53, %c0_54] : memref<8x20xf32, #tpu.memory_space<vmem>>, vector<8x20xf32>
    %cst_55 = arith.constant dense<0.000000e+00> : vector<8x20xf32>
    %77 = tpu.matmul %68, %76, %cst_55 {dimension_numbers = #tpu.dot_dimension_numbers<[1], [0], [0], [1], [0, 0, 1, 1], [], []>} : vector<8x8xf32>, vector<8x20xf32>, vector<8x20xf32> -> vector<8x20xf32>
    %78 = arith.addf %73, %77 : vector<8x20xf32>
    %c0_56 = arith.constant 0 : index
    %c0_57 = arith.constant 0 : index
    %79 = vector.load %arg29[%c0_56, %c0_57] : memref<8x20xf32, #tpu.memory_space<vmem>>, vector<8x20xf32>
    %cst_58 = arith.constant dense<0.000000e+00> : vector<8x20xf32>
    %80 = tpu.matmul %68, %79, %cst_58 {dimension_numbers = #tpu.dot_dimension_numbers<[1], [0], [0], [1], [0, 0, 1, 1], [], []>} : vector<8x8xf32>, vector<8x20xf32>, vector<8x20xf32> -> vector<8x20xf32>
    %81 = arith.addf %75, %80 : vector<8x20xf32>
    %c0_59 = arith.constant 0 : index
    %c0_60 = arith.constant 0 : index
    %82 = vector.load %arg28[%c0_59, %c0_60] : memref<1x20xf32, #tpu.memory_space<vmem>>, vector<1x20xf32>
    %83 = vector.shape_cast %78 : vector<8x20xf32> to vector<8x1x20xf32>
    %84 = vector.shape_cast %81 : vector<8x20xf32> to vector<1x8x20xf32>
    %85 = vector.broadcast %83 : vector<8x1x20xf32> to vector<8x8x20xf32>
    %86 = vector.broadcast %84 : vector<1x8x20xf32> to vector<8x8x20xf32>
    %87 = arith.addf %85, %86 : vector<8x8x20xf32>
    %88 = vector.shape_cast %3 : vector<8x8xf32> to vector<8x8x1xf32>
    %89 = vector.shape_cast %82 : vector<1x20xf32> to vector<1x1x20xf32>
    %90 = vector.broadcast %88 : vector<8x8x1xf32> to vector<8x8x20xf32>
    %91 = vector.broadcast %89 : vector<1x1x20xf32> to vector<8x8x20xf32>
    %92 = arith.mulf %90, %91 : vector<8x8x20xf32>
    %93 = arith.addf %87, %92 : vector<8x8x20xf32>
    %cst_61 = arith.constant 0.000000e+00 : f32
    %94 = vector.broadcast %cst_61 : f32 to vector<8x8x20xf32>
    %95 = arith.maximumf %93, %94 : vector<8x8x20xf32>
    %96 = vector.shape_cast %95 : vector<8x8x20xf32> to vector<64x20xf32>
    %c0_62 = arith.constant 0 : index
    %c0_63 = arith.constant 0 : index
    %97 = vector.load %arg31[%c0_62, %c0_63] : memref<20x8xf32, #tpu.memory_space<vmem>>, vector<20x8xf32>
    %cst_64 = arith.constant dense<0.000000e+00> : vector<64x8xf32>
    %98 = tpu.matmul %96, %97, %cst_64 {dimension_numbers = #tpu.dot_dimension_numbers<[1], [0], [0], [1], [0, 0, 1, 1], [], []>} : vector<64x20xf32>, vector<20x8xf32>, vector<64x8xf32> -> vector<64x8xf32>
    %c0_65 = arith.constant 0 : index
    %c0_66 = arith.constant 0 : index
    %99 = vector.load %arg25[%c0_65, %c0_66] : memref<1x8xf32, #tpu.memory_space<vmem>>, vector<1x8xf32>
    %100 = vector.broadcast %99 : vector<1x8xf32> to vector<64x8xf32>
    %101 = arith.addf %98, %100 : vector<64x8xf32>
    %102 = math.tanh %101 : vector<64x8xf32>
    %103 = vector.shape_cast %102 : vector<64x8xf32> to vector<8x8x8xf32>
    %cst_67 = arith.constant dense<0.000000e+00> : vector<8x8xf32>
    %104 = vector.multi_reduction <add>, %103, %cst_67 [1] : vector<8x8x8xf32> to vector<8x8xf32>
    %c0_68 = arith.constant 0 : index
    %c0_69 = arith.constant 0 : index
    %105 = vector.load %arg37[%c0_68, %c0_69] : memref<8x10xf32, #tpu.memory_space<vmem>>, vector<8x10xf32>
    %cst_70 = arith.constant dense<0.000000e+00> : vector<8x10xf32>
    %106 = tpu.matmul %1, %105, %cst_70 {dimension_numbers = #tpu.dot_dimension_numbers<[1], [0], [0], [1], [0, 0, 1, 1], [], []>} : vector<8x8xf32>, vector<8x10xf32>, vector<8x10xf32> -> vector<8x10xf32>
    %c0_71 = arith.constant 0 : index
    %c0_72 = arith.constant 0 : index
    %107 = vector.load %arg32[%c0_71, %c0_72] : memref<1x10xf32, #tpu.memory_space<vmem>>, vector<1x10xf32>
    %108 = vector.broadcast %107 : vector<1x10xf32> to vector<8x10xf32>
    %109 = arith.addf %106, %108 : vector<8x10xf32>
    %c0_73 = arith.constant 0 : index
    %c0_74 = arith.constant 0 : index
    %110 = vector.load %arg36[%c0_73, %c0_74] : memref<8x10xf32, #tpu.memory_space<vmem>>, vector<8x10xf32>
    %cst_75 = arith.constant dense<0.000000e+00> : vector<8x10xf32>
    %111 = tpu.matmul %68, %110, %cst_75 {dimension_numbers = #tpu.dot_dimension_numbers<[1], [0], [0], [1], [0, 0, 1, 1], [], []>} : vector<8x8xf32>, vector<8x10xf32>, vector<8x10xf32> -> vector<8x10xf32>
    %112 = arith.addf %109, %111 : vector<8x10xf32>
    %cst_76 = arith.constant 0.000000e+00 : f32
    %113 = vector.broadcast %cst_76 : f32 to vector<8x10xf32>
    %114 = arith.maximumf %112, %113 : vector<8x10xf32>
    %c0_77 = arith.constant 0 : index
    %c0_78 = arith.constant 0 : index
    %115 = vector.load %arg38[%c0_77, %c0_78] : memref<10x4xf32, #tpu.memory_space<vmem>>, vector<10x4xf32>
    %cst_79 = arith.constant dense<0.000000e+00> : vector<8x4xf32>
    %116 = tpu.matmul %114, %115, %cst_79 {dimension_numbers = #tpu.dot_dimension_numbers<[1], [0], [0], [1], [0, 0, 1, 1], [], []>} : vector<8x10xf32>, vector<10x4xf32>, vector<8x4xf32> -> vector<8x4xf32>
    %c0_80 = arith.constant 0 : index
    %c0_81 = arith.constant 0 : index
    %117 = vector.load %arg33[%c0_80, %c0_81] : memref<1x4xf32, #tpu.memory_space<vmem>>, vector<1x4xf32>
    %118 = vector.broadcast %117 : vector<1x4xf32> to vector<8x4xf32>
    %119 = arith.addf %116, %118 : vector<8x4xf32>
    %120 = math.tanh %119 : vector<8x4xf32>
    %c0_82 = arith.constant 0 : index
    %c0_83 = arith.constant 0 : index
    %121 = vector.load %arg39[%c0_82, %c0_83] : memref<8x4xf32, #tpu.memory_space<vmem>>, vector<8x4xf32>
    %cst_84 = arith.constant dense<0.000000e+00> : vector<8x4xf32>
    %122 = tpu.matmul %104, %121, %cst_84 {dimension_numbers = #tpu.dot_dimension_numbers<[1], [0], [0], [1], [0, 0, 1, 1], [], []>} : vector<8x8xf32>, vector<8x4xf32>, vector<8x4xf32> -> vector<8x4xf32>
    %c0_85 = arith.constant 0 : index
    %c0_86 = arith.constant 0 : index
    %123 = vector.load %arg34[%c0_85, %c0_86] : memref<1x4xf32, #tpu.memory_space<vmem>>, vector<1x4xf32>
    %124 = vector.broadcast %123 : vector<1x4xf32> to vector<8x4xf32>
    %125 = arith.addf %122, %124 : vector<8x4xf32>
    %cst_87 = arith.constant 0.000000e+00 : f32
    %126 = vector.broadcast %cst_87 : f32 to vector<8x4xf32>
    %127 = arith.maximumf %125, %126 : vector<8x4xf32>
    %c0_88 = arith.constant 0 : index
    %c0_89 = arith.constant 0 : index
    %128 = vector.load %arg40[%c0_88, %c0_89] : memref<4x4xf32, #tpu.memory_space<vmem>>, vector<4x4xf32>
    %cst_90 = arith.constant dense<0.000000e+00> : vector<8x4xf32>
    %129 = tpu.matmul %127, %128, %cst_90 {dimension_numbers = #tpu.dot_dimension_numbers<[1], [0], [0], [1], [0, 0, 1, 1], [], []>} : vector<8x4xf32>, vector<4x4xf32>, vector<8x4xf32> -> vector<8x4xf32>
    %c0_91 = arith.constant 0 : index
    %c0_92 = arith.constant 0 : index
    %130 = vector.load %arg35[%c0_91, %c0_92] : memref<1x4xf32, #tpu.memory_space<vmem>>, vector<1x4xf32>
    %131 = vector.broadcast %130 : vector<1x4xf32> to vector<8x4xf32>
    %132 = arith.addf %129, %131 : vector<8x4xf32>
    %133 = math.tanh %132 : vector<8x4xf32>
    %134 = tpu.concatenate %120, %133 in 1 : vector<8x4xf32>, vector<8x4xf32> -> vector<8x8xf32>
    %135 = arith.mulf %134, %134 : vector<8x8xf32>
    %cst_93 = arith.constant dense<0.000000e+00> : vector<8xf32>
    %136 = vector.multi_reduction <add>, %135, %cst_93 [1] : vector<8x8xf32> to vector<8xf32>
    %137 = vector.shape_cast %136 : vector<8xf32> to vector<8x1xf32>
    %cst_94 = arith.constant 9.99999996E-13 : f32
    %138 = vector.broadcast %cst_94 : f32 to vector<8x1xf32>
    %139 = arith.addf %137, %138 : vector<8x1xf32>
    %140 = math.rsqrt %139 : vector<8x1xf32>
    %141 = vector.broadcast %140 : vector<8x1xf32> to vector<8x8xf32>
    %142 = arith.mulf %134, %141 : vector<8x8xf32>
    %c0_95 = arith.constant 0 : index
    %c0_96 = arith.constant 0 : index
    %143 = vector.load %arg5[%c0_95, %c0_96] : memref<8x16xf32, #tpu.memory_space<vmem>>, vector<8x16xf32>
    %cst_97 = arith.constant dense<0.000000e+00> : vector<8x16xf32>
    %144 = tpu.matmul %1, %143, %cst_97 {dimension_numbers = #tpu.dot_dimension_numbers<[1], [0], [0], [1], [0, 0, 1, 1], [], []>} : vector<8x8xf32>, vector<8x16xf32>, vector<8x16xf32> -> vector<8x16xf32>
    %c0_98 = arith.constant 0 : index
    %c0_99 = arith.constant 0 : index
    %145 = vector.load %arg4[%c0_98, %c0_99] : memref<8x16xf32, #tpu.memory_space<vmem>>, vector<8x16xf32>
    %cst_100 = arith.constant dense<0.000000e+00> : vector<8x16xf32>
    %146 = tpu.matmul %142, %145, %cst_100 {dimension_numbers = #tpu.dot_dimension_numbers<[1], [0], [0], [1], [0, 0, 1, 1], [], []>} : vector<8x8xf32>, vector<8x16xf32>, vector<8x16xf32> -> vector<8x16xf32>
    %147 = arith.addf %144, %146 : vector<8x16xf32>
    %c0_101 = arith.constant 0 : index
    %c0_102 = arith.constant 0 : index
    %148 = vector.load %arg3[%c0_101, %c0_102] : memref<1x16xf32, #tpu.memory_space<vmem>>, vector<1x16xf32>
    %149 = vector.broadcast %148 : vector<1x16xf32> to vector<8x16xf32>
    %150 = arith.addf %147, %149 : vector<8x16xf32>
    %cst_103 = arith.constant 0.000000e+00 : f32
    %151 = vector.broadcast %cst_103 : f32 to vector<8x16xf32>
    %152 = arith.maximumf %150, %151 : vector<8x16xf32>
    %c0_104 = arith.constant 0 : index
    %c0_105 = arith.constant 0 : index
    %153 = vector.load %arg7[%c0_104, %c0_105] : memref<16x8xf32, #tpu.memory_space<vmem>>, vector<16x8xf32>
    %cst_106 = arith.constant dense<0.000000e+00> : vector<8x8xf32>
    %154 = tpu.matmul %152, %153, %cst_106 {dimension_numbers = #tpu.dot_dimension_numbers<[1], [0], [0], [1], [0, 0, 1, 1], [], []>} : vector<8x16xf32>, vector<16x8xf32>, vector<8x8xf32> -> vector<8x8xf32>
    %c0_107 = arith.constant 0 : index
    %c0_108 = arith.constant 0 : index
    %155 = vector.load %arg6[%c0_107, %c0_108] : memref<1x8xf32, #tpu.memory_space<vmem>>, vector<1x8xf32>
    %156 = vector.broadcast %155 : vector<1x8xf32> to vector<8x8xf32>
    %157 = arith.addf %154, %156 : vector<8x8xf32>
    %cst_109 = arith.constant 0.000000e+00 : f32
    %158 = vector.broadcast %cst_109 : f32 to vector<8x8xf32>
    %159 = arith.maximumf %157, %158 : vector<8x8xf32>
    %c0_110 = arith.constant 0 : index
    %c0_111 = arith.constant 0 : index
    %160 = vector.load %arg9[%c0_110, %c0_111] : memref<8x3xf32, #tpu.memory_space<vmem>>, vector<8x3xf32>
    %cst_112 = arith.constant dense<0.000000e+00> : vector<8x3xf32>
    %161 = tpu.matmul %159, %160, %cst_112 {dimension_numbers = #tpu.dot_dimension_numbers<[1], [0], [0], [1], [0, 0, 1, 1], [], []>} : vector<8x8xf32>, vector<8x3xf32>, vector<8x3xf32> -> vector<8x3xf32>
    %c0_113 = arith.constant 0 : index
    %c0_114 = arith.constant 0 : index
    %162 = vector.load %arg8[%c0_113, %c0_114] : memref<1x3xf32, #tpu.memory_space<vmem>>, vector<1x3xf32>
    %163 = vector.broadcast %162 : vector<1x3xf32> to vector<8x3xf32>
    %164 = arith.addf %161, %163 : vector<8x3xf32>
    %c0_115 = arith.constant 0 : index
    %c0_116 = arith.constant 0 : index
    %c0_117 = arith.constant 0 : index
    %165 = vector.load %arg41[%c0_115, %c0_116, %c0_117] : memref<1x8x3xf32, #tpu.memory_space<vmem>>, vector<1x8x3xf32>
    %166 = vector.shape_cast %165 : vector<1x8x3xf32> to vector<8x3xf32>
    %167 = vector.shape_cast %164 : vector<8x3xf32> to vector<1x8x3xf32>
    tpu.vector_store %arg41[%c0_115, %c0_116, %c0_117], %167 {strides = array<i32>} : memref<1x8x3xf32, #tpu.memory_space<vmem>>, vector<1x8x3xf32>,
    return
  }
  func.func @transform_0(%arg0: i32) -> (i32, i32, i32) {
    %c0_i32 = arith.constant 0 : i32
    %c0_i32_0 = arith.constant 0 : i32
    %c0_i32_1 = arith.constant 0 : i32
    return %arg0, %c0_i32, %c0_i32_0 : i32, i32, i32
  }
  func.func @transform_1(%arg0: i32) -> (i32, i32, i32) {
    %c0_i32 = arith.constant 0 : i32
    %c0_i32_0 = arith.constant 0 : i32
    %c0_i32_1 = arith.constant 0 : i32
    return %arg0, %c0_i32, %c0_i32_0 : i32, i32, i32
  }
  func.func @transform_2(%arg0: i32) -> (i32, i32) {
    %c0_i32 = arith.constant 0 : i32
    %c0_i32_0 = arith.constant 0 : i32
    %c0_i32_1 = arith.constant 0 : i32
    return %c0_i32, %c0_i32_0 : i32, i32
  }
  func.func @transform_3(%arg0: i32) -> (i32, i32) {
    %c0_i32 = arith.constant 0 : i32
    %c0_i32_0 = arith.constant 0 : i32
    %c0_i32_1 = arith.constant 0 : i32
    return %c0_i32, %c0_i32_0 : i32, i32
  }
  func.func @transform_4(%arg0: i32) -> (i32, i32) {
    %c0_i32 = arith.constant 0 : i32
    %c0_i32_0 = arith.constant 0 : i32
    %c0_i32_1 = arith.constant 0 : i32
    return %c0_i32, %c0_i32_0 : i32, i32
  }
  func.func @transform_5(%arg0: i32) -> (i32, i32) {
    %c0_i32 = arith.constant 0 : i32
    %c0_i32_0 = arith.constant 0 : i32
    %c0_i32_1 = arith.constant 0 : i32
    return %c0_i32, %c0_i32_0 : i32, i32
  }
  func.func @transform_6(%arg0: i32) -> (i32, i32) {
    %c0_i32 = arith.constant 0 : i32
    %c0_i32_0 = arith.constant 0 : i32
    %c0_i32_1 = arith.constant 0 : i32
    return %c0_i32, %c0_i32_0 : i32, i32
  }
  func.func @transform_7(%arg0: i32) -> (i32, i32) {
    %c0_i32 = arith.constant 0 : i32
    %c0_i32_0 = arith.constant 0 : i32
    %c0_i32_1 = arith.constant 0 : i32
    return %c0_i32, %c0_i32_0 : i32, i32
  }
  func.func @transform_8(%arg0: i32) -> (i32, i32) {
    %c0_i32 = arith.constant 0 : i32
    %c0_i32_0 = arith.constant 0 : i32
    %c0_i32_1 = arith.constant 0 : i32
    return %c0_i32, %c0_i32_0 : i32, i32
  }
  func.func @transform_9(%arg0: i32) -> (i32, i32) {
    %c0_i32 = arith.constant 0 : i32
    %c0_i32_0 = arith.constant 0 : i32
    %c0_i32_1 = arith.constant 0 : i32
    return %c0_i32, %c0_i32_0 : i32, i32
  }
  func.func @transform_10(%arg0: i32) -> (i32, i32) {
    %c0_i32 = arith.constant 0 : i32
    %c0_i32_0 = arith.constant 0 : i32
    %c0_i32_1 = arith.constant 0 : i32
    return %c0_i32, %c0_i32_0 : i32, i32
  }
  func.func @transform_11(%arg0: i32) -> (i32, i32) {
    %c0_i32 = arith.constant 0 : i32
    %c0_i32_0 = arith.constant 0 : i32
    %c0_i32_1 = arith.constant 0 : i32
    return %c0_i32, %c0_i32_0 : i32, i32
  }
  func.func @transform_12(%arg0: i32) -> (i32, i32) {
    %c0_i32 = arith.constant 0 : i32
    %c0_i32_0 = arith.constant 0 : i32
    %c0_i32_1 = arith.constant 0 : i32
    return %c0_i32, %c0_i32_0 : i32, i32
  }
  func.func @transform_13(%arg0: i32) -> (i32, i32) {
    %c0_i32 = arith.constant 0 : i32
    %c0_i32_0 = arith.constant 0 : i32
    %c0_i32_1 = arith.constant 0 : i32
    return %c0_i32, %c0_i32_0 : i32, i32
  }
  func.func @transform_14(%arg0: i32) -> (i32, i32) {
    %c0_i32 = arith.constant 0 : i32
    %c0_i32_0 = arith.constant 0 : i32
    %c0_i32_1 = arith.constant 0 : i32
    return %c0_i32, %c0_i32_0 : i32, i32
  }
  func.func @transform_15(%arg0: i32) -> (i32, i32) {
    %c0_i32 = arith.constant 0 : i32
    %c0_i32_0 = arith.constant 0 : i32
    %c0_i32_1 = arith.constant 0 : i32
    return %c0_i32, %c0_i32_0 : i32, i32
  }
  func.func @transform_16(%arg0: i32) -> (i32, i32) {
    %c0_i32 = arith.constant 0 : i32
    %c0_i32_0 = arith.constant 0 : i32
    %c0_i32_1 = arith.constant 0 : i32
    return %c0_i32, %c0_i32_0 : i32, i32
  }
  func.func @transform_17(%arg0: i32) -> (i32, i32) {
    %c0_i32 = arith.constant 0 : i32
    %c0_i32_0 = arith.constant 0 : i32
    %c0_i32_1 = arith.constant 0 : i32
    return %c0_i32, %c0_i32_0 : i32, i32
  }
  func.func @transform_18(%arg0: i32) -> (i32, i32) {
    %c0_i32 = arith.constant 0 : i32
    %c0_i32_0 = arith.constant 0 : i32
    %c0_i32_1 = arith.constant 0 : i32
    return %c0_i32, %c0_i32_0 : i32, i32
  }
  func.func @transform_19(%arg0: i32) -> (i32, i32) {
    %c0_i32 = arith.constant 0 : i32
    %c0_i32_0 = arith.constant 0 : i32
    %c0_i32_1 = arith.constant 0 : i32
    return %c0_i32, %c0_i32_0 : i32, i32
  }
  func.func @transform_20(%arg0: i32) -> (i32, i32) {
    %c0_i32 = arith.constant 0 : i32
    %c0_i32_0 = arith.constant 0 : i32
    %c0_i32_1 = arith.constant 0 : i32
    return %c0_i32, %c0_i32_0 : i32, i32
  }
  func.func @transform_21(%arg0: i32) -> (i32, i32) {
    %c0_i32 = arith.constant 0 : i32
    %c0_i32_0 = arith.constant 0 : i32
    %c0_i32_1 = arith.constant 0 : i32
    return %c0_i32, %c0_i32_0 : i32, i32
  }
  func.func @transform_22(%arg0: i32) -> (i32, i32) {
    %c0_i32 = arith.constant 0 : i32
    %c0_i32_0 = arith.constant 0 : i32
    %c0_i32_1 = arith.constant 0 : i32
    return %c0_i32, %c0_i32_0 : i32, i32
  }
  func.func @transform_23(%arg0: i32) -> (i32, i32) {
    %c0_i32 = arith.constant 0 : i32
    %c0_i32_0 = arith.constant 0 : i32
    %c0_i32_1 = arith.constant 0 : i32
    return %c0_i32, %c0_i32_0 : i32, i32
  }
  func.func @transform_24(%arg0: i32) -> (i32, i32) {
    %c0_i32 = arith.constant 0 : i32
    %c0_i32_0 = arith.constant 0 : i32
    %c0_i32_1 = arith.constant 0 : i32
    return %c0_i32, %c0_i32_0 : i32, i32
  }
  func.func @transform_25(%arg0: i32) -> (i32, i32) {
    %c0_i32 = arith.constant 0 : i32
    %c0_i32_0 = arith.constant 0 : i32
    %c0_i32_1 = arith.constant 0 : i32
    return %c0_i32, %c0_i32_0 : i32, i32
  }
  func.func @transform_26(%arg0: i32) -> (i32, i32) {
    %c0_i32 = arith.constant 0 : i32
    %c0_i32_0 = arith.constant 0 : i32
    %c0_i32_1 = arith.constant 0 : i32
    return %c0_i32, %c0_i32_0 : i32, i32
  }
  func.func @transform_27(%arg0: i32) -> (i32, i32) {
    %c0_i32 = arith.constant 0 : i32
    %c0_i32_0 = arith.constant 0 : i32
    %c0_i32_1 = arith.constant 0 : i32
    return %c0_i32, %c0_i32_0 : i32, i32
  }
  func.func @transform_28(%arg0: i32) -> (i32, i32) {
    %c0_i32 = arith.constant 0 : i32
    %c0_i32_0 = arith.constant 0 : i32
    %c0_i32_1 = arith.constant 0 : i32
    return %c0_i32, %c0_i32_0 : i32, i32
  }
  func.func @transform_29(%arg0: i32) -> (i32, i32) {
    %c0_i32 = arith.constant 0 : i32
    %c0_i32_0 = arith.constant 0 : i32
    %c0_i32_1 = arith.constant 0 : i32
    return %c0_i32, %c0_i32_0 : i32, i32
  }
  func.func @transform_30(%arg0: i32) -> (i32, i32) {
    %c0_i32 = arith.constant 0 : i32
    %c0_i32_0 = arith.constant 0 : i32
    %c0_i32_1 = arith.constant 0 : i32
    return %c0_i32, %c0_i32_0 : i32, i32
  }
  func.func @transform_31(%arg0: i32) -> (i32, i32) {
    %c0_i32 = arith.constant 0 : i32
    %c0_i32_0 = arith.constant 0 : i32
    %c0_i32_1 = arith.constant 0 : i32
    return %c0_i32, %c0_i32_0 : i32, i32
  }
  func.func @transform_32(%arg0: i32) -> (i32, i32) {
    %c0_i32 = arith.constant 0 : i32
    %c0_i32_0 = arith.constant 0 : i32
    %c0_i32_1 = arith.constant 0 : i32
    return %c0_i32, %c0_i32_0 : i32, i32
  }
  func.func @transform_33(%arg0: i32) -> (i32, i32) {
    %c0_i32 = arith.constant 0 : i32
    %c0_i32_0 = arith.constant 0 : i32
    %c0_i32_1 = arith.constant 0 : i32
    return %c0_i32, %c0_i32_0 : i32, i32
  }
  func.func @transform_34(%arg0: i32) -> (i32, i32) {
    %c0_i32 = arith.constant 0 : i32
    %c0_i32_0 = arith.constant 0 : i32
    %c0_i32_1 = arith.constant 0 : i32
    return %c0_i32, %c0_i32_0 : i32, i32
  }
  func.func @transform_35(%arg0: i32) -> (i32, i32) {
    %c0_i32 = arith.constant 0 : i32
    %c0_i32_0 = arith.constant 0 : i32
    %c0_i32_1 = arith.constant 0 : i32
    return %c0_i32, %c0_i32_0 : i32, i32
  }
  func.func @transform_36(%arg0: i32) -> (i32, i32) {
    %c0_i32 = arith.constant 0 : i32
    %c0_i32_0 = arith.constant 0 : i32
    %c0_i32_1 = arith.constant 0 : i32
    return %c0_i32, %c0_i32_0 : i32, i32
  }
  func.func @transform_37(%arg0: i32) -> (i32, i32) {
    %c0_i32 = arith.constant 0 : i32
    %c0_i32_0 = arith.constant 0 : i32
    %c0_i32_1 = arith.constant 0 : i32
    return %c0_i32, %c0_i32_0 : i32, i32
  }
  func.func @transform_38(%arg0: i32) -> (i32, i32) {
    %c0_i32 = arith.constant 0 : i32
    %c0_i32_0 = arith.constant 0 : i32
    %c0_i32_1 = arith.constant 0 : i32
    return %c0_i32, %c0_i32_0 : i32, i32
  }
  func.func @transform_39(%arg0: i32) -> (i32, i32) {
    %c0_i32 = arith.constant 0 : i32
    %c0_i32_0 = arith.constant 0 : i32
    %c0_i32_1 = arith.constant 0 : i32
    return %c0_i32, %c0_i32_0 : i32, i32
  }
  func.func @transform_40(%arg0: i32) -> (i32, i32, i32) {
    %c0_i32 = arith.constant 0 : i32
    %c0_i32_0 = arith.constant 0 : i32
    %c0_i32_1 = arith.constant 0 : i32
    return %arg0, %c0_i32, %c0_i32_0 : i32, i32, i32
  }
}

</mosaic_0001>

<llo_original>
// kernel: gnn_forward.1
$region0: #{gnn_forward.1}
  #allocation0 [shape = 'u32[]', space=smem, size = 0x4, offset = 0x4, fixed_abs, tag = 'smem constant byte address 0x4 - core index']
  #allocation1 [shape = 'u32[144,128]{1,0:T(1,128)}', space=vmem, size = 0x12000, scoped, tag = 'internal scratch']
  %s0 = inlined_call_operand.smem [shape: u32[41], index: -1, kind: input, shape index: {}]
  %s1 = sld [smem:[%s0]]
  %s2 = scalar_lea.smem %s0, 1
  %s3 = sld [smem:[%s2]]
  %s4 = scalar_lea.smem %s0, 2
  %s5 = sld [smem:[%s4]]
  %s6 = scalar_lea.smem %s0, 3
  %s7 = sld [smem:[%s6]]
  %s8 = scalar_lea.smem %s0, 4
  %s9 = sld [smem:[%s8]]
  %s10 = scalar_lea.smem %s0, 5
  %s11 = sld [smem:[%s10]]
  %s12 = scalar_lea.smem %s0, 6
  %s13 = sld [smem:[%s12]]
  %s14 = scalar_lea.smem %s0, 7
  %s15 = sld [smem:[%s14]]
  %s16 = scalar_lea.smem %s0, 8
  %s17 = sld [smem:[%s16]]
  %s18 = scalar_lea.smem %s0, 9
  %s19 = sld [smem:[%s18]]
  %s20 = scalar_lea.smem %s0, 10
  %s21 = sld [smem:[%s20]]
  %s22 = scalar_lea.smem %s0, 11
  %s23 = sld [smem:[%s22]]
  %s24 = scalar_lea.smem %s0, 12
  %s25 = sld [smem:[%s24]]
  %s26 = scalar_lea.smem %s0, 13
  %s27 = sld [smem:[%s26]]
  %s28 = scalar_lea.smem %s0, 14
  %s29 = sld [smem:[%s28]]
  %s30 = scalar_lea.smem %s0, 15
  %s31 = sld [smem:[%s30]]
  %s32 = scalar_lea.smem %s0, 16
  %s33 = sld [smem:[%s32]]
  %s34 = scalar_lea.smem %s0, 17
  %s35 = sld [smem:[%s34]]
  %s36 = scalar_lea.smem %s0, 18
  %s37 = sld [smem:[%s36]]
  %s38 = scalar_lea.smem %s0, 19
  %s39 = sld [smem:[%s38]]
  %s40 = scalar_lea.smem %s0, 20
  %s41 = sld [smem:[%s40]]
  %s42 = scalar_lea.smem %s0, 21
  %s43 = sld [smem:[%s42]]
  %s44 = scalar_lea.smem %s0, 22
  %s45 = sld [smem:[%s44]]
  %s46 = scalar_lea.smem %s0, 23
  %s47 = sld [smem:[%s46]]
  %s48 = scalar_lea.smem %s0, 24
  %s49 = sld [smem:[%s48]]
  %s50 = scalar_lea.smem %s0, 25
  %s51 = sld [smem:[%s50]]
  %s52 = scalar_lea.smem %s0, 26
  %s53 = sld [smem:[%s52]]
  %s54 = scalar_lea.smem %s0, 27
  %s55 = sld [smem:[%s54]]
  %s56 = scalar_lea.smem %s0, 28
  %s57 = sld [smem:[%s56]]
  %s58 = scalar_lea.smem %s0, 29
  %s59 = sld [smem:[%s58]]
  %s60 = scalar_lea.smem %s0, 30
  %s61 = sld [smem:[%s60]]
  %s62 = scalar_lea.smem %s0, 31
  %s63 = sld [smem:[%s62]]
  %s64 = scalar_lea.smem %s0, 32
  %s65 = sld [smem:[%s64]]
  %s66 = scalar_lea.smem %s0, 33
  %s67 = sld [smem:[%s66]]
  %s68 = scalar_lea.smem %s0, 34
  %s69 = sld [smem:[%s68]]
  %s70 = scalar_lea.smem %s0, 35
  %s71 = sld [smem:[%s70]]
  %s72 = scalar_lea.smem %s0, 36
  %s73 = sld [smem:[%s72]]
  %s74 = scalar_lea.smem %s0, 37
  %s75 = sld [smem:[%s74]]
  %s76 = scalar_lea.smem %s0, 38
  %s77 = sld [smem:[%s76]]
  %s78 = scalar_lea.smem %s0, 39
  %s79 = sld [smem:[%s78]]
  %s80 = scalar_lea.smem %s0, 40
  %s81 = sld [smem:[%s80]]
  %s82 = sld [smem:[#allocation0]]
  $region193: #{gnn_forward.1} parent=0
    _
  %s84 = ssub.s32 1, %s82
  %s85 = scalar_select 0, %s84, %s82
  loop: start=0, step=1, limit=4
  $region2: #{gnn_forward.1} parent=0 // loop_pre_header
    _
  $region3: #{gnn_forward.1} parent=0 // loop_header
    %s87 = sphi 0, %s91
    %p88 = scmp.ge.s32.totalorder %s87, 4
    %s97 = sphi 0, %s99
    %s100 = sphi 0, %s97
    %s101 = sphi 0, %s100
    %s117 = sphi 0, %s101
    %s123 = sphi 0, %s125
    %s126 = sphi 0, %s123
    %s127 = sphi 0, %s126
    %s143 = sphi 0, %s127
    %s147 = sphi 0, %s147
    %s149 = sphi 0, %s147
    %s150 = sphi 0, %s149
    %s164 = sphi 0, %s150
    %s168 = sphi 0, %s168
    %s170 = sphi 0, %s168
    %s171 = sphi 0, %s170
    %s185 = sphi 0, %s171
    %s189 = sphi 0, %s189
    %s191 = sphi 0, %s189
    %s192 = sphi 0, %s191
    %s206 = sphi 0, %s192
    %s210 = sphi 0, %s210
    %s212 = sphi 0, %s210
    %s213 = sphi 0, %s212
    %s227 = sphi 0, %s213
    %s231 = sphi 0, %s231
    %s233 = sphi 0, %s231
    %s234 = sphi 0, %s233
    %s248 = sphi 0, %s234
    %s252 = sphi 0, %s252
    %s254 = sphi 0, %s252
    %s255 = sphi 0, %s254
    %s269 = sphi 0, %s255
    %s273 = sphi 0, %s273
    %s275 = sphi 0, %s273
    %s276 = sphi 0, %s275
    %s290 = sphi 0, %s276
    %s294 = sphi 0, %s294
    %s296 = sphi 0, %s294
    %s297 = sphi 0, %s296
    %s311 = sphi 0, %s297
    %s315 = sphi 0, %s315
    %s317 = sphi 0, %s315
    %s318 = sphi 0, %s317
    %s332 = sphi 0, %s318
    %s336 = sphi 0, %s336
    %s338 = sphi 0, %s336
    %s339 = sphi 0, %s338
    %s353 = sphi 0, %s339
    %s357 = sphi 0, %s357
    %s359 = sphi 0, %s357
    %s360 = sphi 0, %s359
    %s374 = sphi 0, %s360
    %s378 = sphi 0, %s378
    %s380 = sphi 0, %s378
    %s381 = sphi 0, %s380
    %s395 = sphi 0, %s381
    %s399 = sphi 0, %s399
    %s401 = sphi 0, %s399
    %s402 = sphi 0, %s401
    %s416 = sphi 0, %s402
    %s420 = sphi 0, %s420
    %s422 = sphi 0, %s420
    %s423 = sphi 0, %s422
    %s437 = sphi 0, %s423
    %s441 = sphi 0, %s441
    %s443 = sphi 0, %s441
    %s444 = sphi 0, %s443
    %s458 = sphi 0, %s444
    %s462 = sphi 0, %s462
    %s464 = sphi 0, %s462
    %s465 = sphi 0, %s464
    %s479 = sphi 0, %s465
    %s483 = sphi 0, %s483
    %s485 = sphi 0, %s483
    %s486 = sphi 0, %s485
    %s500 = sphi 0, %s486
    %s504 = sphi 0, %s504
    %s506 = sphi 0, %s504
    %s507 = sphi 0, %s506
    %s521 = sphi 0, %s507
    %s525 = sphi 0, %s525
    %s527 = sphi 0, %s525
    %s528 = sphi 0, %s527
    %s542 = sphi 0, %s528
    %s546 = sphi 0, %s546
    %s548 = sphi 0, %s546
    %s549 = sphi 0, %s548
    %s563 = sphi 0, %s549
    %s567 = sphi 0, %s567
    %s569 = sphi 0, %s567
    %s570 = sphi 0, %s569
    %s584 = sphi 0, %s570
    %s588 = sphi 0, %s588
    %s590 = sphi 0, %s588
    %s591 = sphi 0, %s590
    %s605 = sphi 0, %s591
    %s609 = sphi 0, %s609
    %s611 = sphi 0, %s609
    %s612 = sphi 0, %s611
    %s626 = sphi 0, %s612
    %s630 = sphi 0, %s630
    %s632 = sphi 0, %s630
    %s633 = sphi 0, %s632
    %s647 = sphi 0, %s633
    %s651 = sphi 0, %s651
    %s653 = sphi 0, %s651
    %s654 = sphi 0, %s653
    %s668 = sphi 0, %s654
    %s672 = sphi 0, %s672
    %s674 = sphi 0, %s672
    %s675 = sphi 0, %s674
    %s689 = sphi 0, %s675
    %s693 = sphi 0, %s693
    %s695 = sphi 0, %s693
    %s696 = sphi 0, %s695
    %s710 = sphi 0, %s696
    %s714 = sphi 0, %s714
    %s716 = sphi 0, %s714
    %s717 = sphi 0, %s716
    %s731 = sphi 0, %s717
    %s735 = sphi 0, %s735
    %s737 = sphi 0, %s735
    %s738 = sphi 0, %s737
    %s752 = sphi 0, %s738
    %s756 = sphi 0, %s756
    %s758 = sphi 0, %s756
    %s759 = sphi 0, %s758
    %s773 = sphi 0, %s759
    %s777 = sphi 0, %s777
    %s779 = sphi 0, %s777
    %s780 = sphi 0, %s779
    %s794 = sphi 0, %s780
    %s798 = sphi 0, %s798
    %s800 = sphi 0, %s798
    %s801 = sphi 0, %s800
    %s815 = sphi 0, %s801
    %s819 = sphi 0, %s819
    %s821 = sphi 0, %s819
    %s822 = sphi 0, %s821
    %s836 = sphi 0, %s822
    %s840 = sphi 0, %s840
    %s842 = sphi 0, %s840
    %s843 = sphi 0, %s842
    %s857 = sphi 0, %s843
    %s861 = sphi 0, %s861
    %s863 = sphi 0, %s861
    %s864 = sphi 0, %s863
    %s878 = sphi 0, %s864
    %s882 = sphi 0, %s882
    %s884 = sphi 0, %s882
    %s885 = sphi 0, %s884
    %s899 = sphi 0, %s885
    %s903 = sphi 0, %s903
    %s905 = sphi 0, %s903
    %s906 = sphi 0, %s905
    %s920 = sphi 0, %s906
    %s924 = sphi 0, %s924
    %s926 = sphi 0, %s924
    %s927 = sphi 0, %s926
    %s941 = sphi 0, %s927
    %s947 = sphi 0, %s949
    %s950 = sphi 0, %s947
    %s951 = sphi 0, %s950
    %s967 = sphi 0, %s951
  $region4: #{gnn_forward.1} parent=0 // loop_header_branch
    %90 = sbr.rel (%p88) target = $region8
  $region5: #{gnn_forward.1} parent=0 // loop_body
    %s92 = ssub.s32 %s87, 1
    %s93 = ssub.s32 %s87, 2
    %s94 = sadd.s32 %s87, 1
    %s95 = ssub.s32 %s87, %s94
    %p96 = scmp.eq.s32.totalorder %s95, 0
    %s98 = sadd.s32 %s97, 1
    %s99 = scalar_select %p96, %s97, %s98
    %p102 = pneg %p96
    %p103 = scmp.eq.s32.totalorder %s87, 1
    %p104 = por %p102, %p103
    %p105 = scmp.ne.s32.totalorder %s97, %s100
    %p106 = scmp.eq.s32.totalorder %s87, 0
    %p107 = por %p105, %p106
    %p108 = scmp.ne.s32.totalorder %s97, %s100
    %p109 = scmp.eq.s32.totalorder %s92, 1
    %p110 = por %p108, %p109
    %p111 = scmp.ne.s32.totalorder %s100, %s101
    %p112 = scmp.eq.s32.totalorder %s92, 0
    %p113 = por %p111, %p112
    %p114 = scmp.ne.s32.totalorder %s100, %s101
    %p115 = scmp.eq.s32.totalorder %s93, 1
    %p116 = por %p114, %p115
    %p118 = scmp.ne.s32.totalorder %s101, %s117
    %p119 = scmp.eq.s32.totalorder %s93, 0
    %p120 = por %p118, %p119
    %s121 = ssub.s32 %s87, %s94
    %p122 = scmp.eq.s32.totalorder %s121, 0
    %s124 = sadd.s32 %s123, 1
    %s125 = scalar_select %p122, %s123, %s124
    %p128 = pneg %p122
    %p129 = scmp.eq.s32.totalorder %s87, 1
    %p130 = por %p128, %p129
    %p131 = scmp.ne.s32.totalorder %s123, %s126
    %p132 = scmp.eq.s32.totalorder %s87, 0
    %p133 = por %p131, %p132
    %p134 = scmp.ne.s32.totalorder %s123, %s126
    %p135 = scmp.eq.s32.totalorder %s92, 1
    %p136 = por %p134, %p135
    %p137 = scmp.ne.s32.totalorder %s126, %s127
    %p138 = scmp.eq.s32.totalorder %s92, 0
    %p139 = por %p137, %p138
    %p140 = scmp.ne.s32.totalorder %s126, %s127
    %p141 = scmp.eq.s32.totalorder %s93, 1
    %p142 = por %p140, %p141
    %p144 = scmp.ne.s32.totalorder %s127, %s143
    %p145 = scmp.eq.s32.totalorder %s93, 0
    %p146 = por %p144, %p145
    %s148 = sadd.s32 %s147, 1
    %p151 = scmp.eq.s32.totalorder %s87, 1
    %p152 = scmp.ne.s32.totalorder %s147, %s149
    %p153 = scmp.eq.s32.totalorder %s87, 0
    %p154 = por %p152, %p153
    %p155 = scmp.ne.s32.totalorder %s147, %s149
    %p156 = scmp.eq.s32.totalorder %s92, 1
    %p157 = por %p155, %p156
    %p158 = scmp.ne.s32.totalorder %s149, %s150
    %p159 = scmp.eq.s32.totalorder %s92, 0
    %p160 = por %p158, %p159
    %p161 = scmp.ne.s32.totalorder %s149, %s150
    %p162 = scmp.eq.s32.totalorder %s93, 1
    %p163 = por %p161, %p162
    %p165 = scmp.ne.s32.totalorder %s150, %s164
    %p166 = scmp.eq.s32.totalorder %s93, 0
    %p167 = por %p165, %p166
    %s169 = sadd.s32 %s168, 1
    %p172 = scmp.eq.s32.totalorder %s87, 1
    %p173 = scmp.ne.s32.totalorder %s168, %s170
    %p174 = scmp.eq.s32.totalorder %s87, 0
    %p175 = por %p173, %p174
    %p176 = scmp.ne.s32.totalorder %s168, %s170
    %p177 = scmp.eq.s32.totalorder %s92, 1
    %p178 = por %p176, %p177
    %p179 = scmp.ne.s32.totalorder %s170, %s171
    %p180 = scmp.eq.s32.totalorder %s92, 0
    %p181 = por %p179, %p180
    %p182 = scmp.ne.s32.totalorder %s170, %s171
    %p183 = scmp.eq.s32.totalorder %s93, 1
    %p184 = por %p182, %p183
    %p186 = scmp.ne.s32.totalorder %s171, %s185
    %p187 = scmp.eq.s32.totalorder %s93, 0
    %p188 = por %p186, %p187
    %s190 = sadd.s32 %s189, 1
    %p193 = scmp.eq.s32.totalorder %s87, 1
    %p194 = scmp.ne.s32.totalorder %s189, %s191
    %p195 = scmp.eq.s32.totalorder %s87, 0
    %p196 = por %p194, %p195
    %p197 = scmp.ne.s32.totalorder %s189, %s191
    %p198 = scmp.eq.s32.totalorder %s92, 1
    %p199 = por %p197, %p198
    %p200 = scmp.ne.s32.totalorder %s191, %s192
    %p201 = scmp.eq.s32.totalorder %s92, 0
    %p202 = por %p200, %p201
    %p203 = scmp.ne.s32.totalorder %s191, %s192
    %p204 = scmp.eq.s32.totalorder %s93, 1
    %p205 = por %p203, %p204
    %p207 = scmp.ne.s32.totalorder %s192, %s206
    %p208 = scmp.eq.s32.totalorder %s93, 0
    %p209 = por %p207, %p208
    %s211 = sadd.s32 %s210, 1
    %p214 = scmp.eq.s32.totalorder %s87, 1
    %p215 = scmp.ne.s32.totalorder %s210, %s212
    %p216 = scmp.eq.s32.totalorder %s87, 0
    %p217 = por %p215, %p216
    %p218 = scmp.ne.s32.totalorder %s210, %s212
    %p219 = scmp.eq.s32.totalorder %s92, 1
    %p220 = por %p218, %p219
    %p221 = scmp.ne.s32.totalorder %s212, %s213
    %p222 = scmp.eq.s32.totalorder %s92, 0
    %p223 = por %p221, %p222
    %p224 = scmp.ne.s32.totalorder %s212, %s213
    %p225 = scmp.eq.s32.totalorder %s93, 1
    %p226 = por %p224, %p225
    %p228 = scmp.ne.s32.totalorder %s213, %s227
    %p229 = scmp.eq.s32.totalorder %s93, 0
    %p230 = por %p228, %p229
    %s232 = sadd.s32 %s231, 1
    %p235 = scmp.eq.s32.totalorder %s87, 1
    %p236 = scmp.ne.s32.totalorder %s231, %s233
    %p237 = scmp.eq.s32.totalorder %s87, 0
    %p238 = por %p236, %p237
    %p239 = scmp.ne.s32.totalorder %s231, %s233
    %p240 = scmp.eq.s32.totalorder %s92, 1
    %p241 = por %p239, %p240
    %p242 = scmp.ne.s32.totalorder %s233, %s234
    %p243 = scmp.eq.s32.totalorder %s92, 0
    %p244 = por %p242, %p243
    %p245 = scmp.ne.s32.totalorder %s233, %s234
    %p246 = scmp.eq.s32.totalorder %s93, 1
    %p247 = por %p245, %p246
    %p249 = scmp.ne.s32.totalorder %s234, %s248
    %p250 = scmp.eq.s32.totalorder %s93, 0
    %p251 = por %p249, %p250
    %s253 = sadd.s32 %s252, 1
    %p256 = scmp.eq.s32.totalorder %s87, 1
    %p257 = scmp.ne.s32.totalorder %s252, %s254
    %p258 = scmp.eq.s32.totalorder %s87, 0
    %p259 = por %p257, %p258
    %p260 = scmp.ne.s32.totalorder %s252, %s254
    %p261 = scmp.eq.s32.totalorder %s92, 1
    %p262 = por %p260, %p261
    %p263 = scmp.ne.s32.totalorder %s254, %s255
    %p264 = scmp.eq.s32.totalorder %s92, 0
    %p265 = por %p263, %p264
    %p266 = scmp.ne.s32.totalorder %s254, %s255
    %p267 = scmp.eq.s32.totalorder %s93, 1
    %p268 = por %p266, %p267
    %p270 = scmp.ne.s32.totalorder %s255, %s269
    %p271 = scmp.eq.s32.totalorder %s93, 0
    %p272 = por %p270, %p271
    %s274 = sadd.s32 %s273, 1
    %p277 = scmp.eq.s32.totalorder %s87, 1
    %p278 = scmp.ne.s32.totalorder %s273, %s275
    %p279 = scmp.eq.s32.totalorder %s87, 0
    %p280 = por %p278, %p279
    %p281 = scmp.ne.s32.totalorder %s273, %s275
    %p282 = scmp.eq.s32.totalorder %s92, 1
    %p283 = por %p281, %p282
    %p284 = scmp.ne.s32.totalorder %s275, %s276
    %p285 = scmp.eq.s32.totalorder %s92, 0
    %p286 = por %p284, %p285
    %p287 = scmp.ne.s32.totalorder %s275, %s276
    %p288 = scmp.eq.s32.totalorder %s93, 1
    %p289 = por %p287, %p288
    %p291 = scmp.ne.s32.totalorder %s276, %s290
    %p292 = scmp.eq.s32.totalorder %s93, 0
    %p293 = por %p291, %p292
    %s295 = sadd.s32 %s294, 1
    %p298 = scmp.eq.s32.totalorder %s87, 1
    %p299 = scmp.ne.s32.totalorder %s294, %s296
    %p300 = scmp.eq.s32.totalorder %s87, 0
    %p301 = por %p299, %p300
    %p302 = scmp.ne.s32.totalorder %s294, %s296
    %p303 = scmp.eq.s32.totalorder %s92, 1
    %p304 = por %p302, %p303
    %p305 = scmp.ne.s32.totalorder %s296, %s297
    %p306 = scmp.eq.s32.totalorder %s92, 0
    %p307 = por %p305, %p306
    %p308 = scmp.ne.s32.totalorder %s296, %s297
    %p309 = scmp.eq.s32.totalorder %s93, 1
    %p310 = por %p308, %p309
    %p312 = scmp.ne.s32.totalorder %s297, %s311
    %p313 = scmp.eq.s32.totalorder %s93, 0
    %p314 = por %p312, %p313
    %s316 = sadd.s32 %s315, 1
    %p319 = scmp.eq.s32.totalorder %s87, 1
    %p320 = scmp.ne.s32.totalorder %s315, %s317
    %p321 = scmp.eq.s32.totalorder %s87, 0
    %p322 = por %p320, %p321
    %p323 = scmp.ne.s32.totalorder %s315, %s317
    %p324 = scmp.eq.s32.totalorder %s92, 1
    %p325 = por %p323, %p324
    %p326 = scmp.ne.s32.totalorder %s317, %s318
    %p327 = scmp.eq.s32.totalorder %s92, 0
    %p328 = por %p326, %p327
    %p329 = scmp.ne.s32.totalorder %s317, %s318
    %p330 = scmp.eq.s32.totalorder %s93, 1
    %p331 = por %p329, %p330
    %p333 = scmp.ne.s32.totalorder %s318, %s332
    %p334 = scmp.eq.s32.totalorder %s93, 0
    %p335 = por %p333, %p334
    %s337 = sadd.s32 %s336, 1
    %p340 = scmp.eq.s32.totalorder %s87, 1
    %p341 = scmp.ne.s32.totalorder %s336, %s338
    %p342 = scmp.eq.s32.totalorder %s87, 0
    %p343 = por %p341, %p342
    %p344 = scmp.ne.s32.totalorder %s336, %s338
    %p345 = scmp.eq.s32.totalorder %s92, 1
    %p346 = por %p344, %p345
    %p347 = scmp.ne.s32.totalorder %s338, %s339
    %p348 = scmp.eq.s32.totalorder %s92, 0
    %p349 = por %p347, %p348
    %p350 = scmp.ne.s32.totalorder %s338, %s339
    %p351 = scmp.eq.s32.totalorder %s93, 1
    %p352 = por %p350, %p351
    %p354 = scmp.ne.s32.totalorder %s339, %s353
    %p355 = scmp.eq.s32.totalorder %s93, 0
    %p356 = por %p354, %p355
    %s358 = sadd.s32 %s357, 1
    %p361 = scmp.eq.s32.totalorder %s87, 1
    %p362 = scmp.ne.s32.totalorder %s357, %s359
    %p363 = scmp.eq.s32.totalorder %s87, 0
    %p364 = por %p362, %p363
    %p365 = scmp.ne.s32.totalorder %s357, %s359
    %p366 = scmp.eq.s32.totalorder %s92, 1
    %p367 = por %p365, %p366
    %p368 = scmp.ne.s32.totalorder %s359, %s360
    %p369 = scmp.eq.s32.totalorder %s92, 0
    %p370 = por %p368, %p369
    %p371 = scmp.ne.s32.totalorder %s359, %s360
    %p372 = scmp.eq.s32.totalorder %s93, 1
    %p373 = por %p371, %p372
    %p375 = scmp.ne.s32.totalorder %s360, %s374
    %p376 = scmp.eq.s32.totalorder %s93, 0
    %p377 = por %p375, %p376
    %s379 = sadd.s32 %s378, 1
    %p382 = scmp.eq.s32.totalorder %s87, 1
    %p383 = scmp.ne.s32.totalorder %s378, %s380
    %p384 = scmp.eq.s32.totalorder %s87, 0
    %p385 = por %p383, %p384
    %p386 = scmp.ne.s32.totalorder %s378, %s380
    %p387 = scmp.eq.s32.totalorder %s92, 1
    %p388 = por %p386, %p387
    %p389 = scmp.ne.s32.totalorder %s380, %s381
    %p390 = scmp.eq.s32.totalorder %s92, 0
    %p391 = por %p389, %p390
    %p392 = scmp.ne.s32.totalorder %s380, %s381
    %p393 = scmp.eq.s32.totalorder %s93, 1
    %p394 = por %p392, %p393
    %p396 = scmp.ne.s32.totalorder %s381, %s395
    %p397 = scmp.eq.s32.totalorder %s93, 0
    %p398 = por %p396, %p397
    %s400 = sadd.s32 %s399, 1
    %p403 = scmp.eq.s32.totalorder %s87, 1
    %p404 = scmp.ne.s32.totalorder %s399, %s401
    %p405 = scmp.eq.s32.totalorder %s87, 0
    %p406 = por %p404, %p405
    %p407 = scmp.ne.s32.totalorder %s399, %s401
    %p408 = scmp.eq.s32.totalorder %s92, 1
    %p409 = por %p407, %p408
    %p410 = scmp.ne.s32.totalorder %s401, %s402
    %p411 = scmp.eq.s32.totalorder %s92, 0
    %p412 = por %p410, %p411
    %p413 = scmp.ne.s32.totalorder %s401, %s402
    %p414 = scmp.eq.s32.totalorder %s93, 1
    %p415 = por %p413, %p414
    %p417 = scmp.ne.s32.totalorder %s402, %s416
    %p418 = scmp.eq.s32.totalorder %s93, 0
    %p419 = por %p417, %p418
    %s421 = sadd.s32 %s420, 1
    %p424 = scmp.eq.s32.totalorder %s87, 1
    %p425 = scmp.ne.s32.totalorder %s420, %s422
    %p426 = scmp.eq.s32.totalorder %s87, 0
    %p427 = por %p425, %p426
    %p428 = scmp.ne.s32.totalorder %s420, %s422
    %p429 = scmp.eq.s32.totalorder %s92, 1
    %p430 = por %p428, %p429
    %p431 = scmp.ne.s32.totalorder %s422, %s423
    %p432 = scmp.eq.s32.totalorder %s92, 0
    %p433 = por %p431, %p432
    %p434 = scmp.ne.s32.totalorder %s422, %s423
    %p435 = scmp.eq.s32.totalorder %s93, 1
    %p436 = por %p434, %p435
    %p438 = scmp.ne.s32.totalorder %s423, %s437
    %p439 = scmp.eq.s32.totalorder %s93, 0
    %p440 = por %p438, %p439
    %s442 = sadd.s32 %s441, 1
    %p445 = scmp.eq.s32.totalorder %s87, 1
    %p446 = scmp.ne.s32.totalorder %s441, %s443
    %p447 = scmp.eq.s32.totalorder %s87, 0
    %p448 = por %p446, %p447
    %p449 = scmp.ne.s32.totalorder %s441, %s443
    %p450 = scmp.eq.s32.totalorder %s92, 1
    %p451 = por %p449, %p450
    %p452 = scmp.ne.s32.totalorder %s443, %s444
    %p453 = scmp.eq.s32.totalorder %s92, 0
    %p454 = por %p452, %p453
    %p455 = scmp.ne.s32.totalorder %s443, %s444
    %p456 = scmp.eq.s32.totalorder %s93, 1
    %p457 = por %p455, %p456
    %p459 = scmp.ne.s32.totalorder %s444, %s458
    %p460 = scmp.eq.s32.totalorder %s93, 0
    %p461 = por %p459, %p460
    %s463 = sadd.s32 %s462, 1
    %p466 = scmp.eq.s32.totalorder %s87, 1
    %p467 = scmp.ne.s32.totalorder %s462, %s464
    %p468 = scmp.eq.s32.totalorder %s87, 0
    %p469 = por %p467, %p468
    %p470 = scmp.ne.s32.totalorder %s462, %s464
    %p471 = scmp.eq.s32.totalorder %s92, 1
    %p472 = por %p470, %p471
    %p473 = scmp.ne.s32.totalorder %s464, %s465
    %p474 = scmp.eq.s32.totalorder %s92, 0
    %p475 = por %p473, %p474
    %p476 = scmp.ne.s32.totalorder %s464, %s465
    %p477 = scmp.eq.s32.totalorder %s93, 1
    %p478 = por %p476, %p477
    %p480 = scmp.ne.s32.totalorder %s465, %s479
    %p481 = scmp.eq.s32.totalorder %s93, 0
    %p482 = por %p480, %p481
    %s484 = sadd.s32 %s483, 1
    %p487 = scmp.eq.s32.totalorder %s87, 1
    %p488 = scmp.ne.s32.totalorder %s483, %s485
    %p489 = scmp.eq.s32.totalorder %s87, 0
    %p490 = por %p488, %p489
    %p491 = scmp.ne.s32.totalorder %s483, %s485
    %p492 = scmp.eq.s32.totalorder %s92, 1
    %p493 = por %p491, %p492
    %p494 = scmp.ne.s32.totalorder %s485, %s486
    %p495 = scmp.eq.s32.totalorder %s92, 0
    %p496 = por %p494, %p495
    %p497 = scmp.ne.s32.totalorder %s485, %s486
    %p498 = scmp.eq.s32.totalorder %s93, 1
    %p499 = por %p497, %p498
    %p501 = scmp.ne.s32.totalorder %s486, %s500
    %p502 = scmp.eq.s32.totalorder %s93, 0
    %p503 = por %p501, %p502
    %s505 = sadd.s32 %s504, 1
    %p508 = scmp.eq.s32.totalorder %s87, 1
    %p509 = scmp.ne.s32.totalorder %s504, %s506
    %p510 = scmp.eq.s32.totalorder %s87, 0
    %p511 = por %p509, %p510
    %p512 = scmp.ne.s32.totalorder %s504, %s506
    %p513 = scmp.eq.s32.totalorder %s92, 1
    %p514 = por %p512, %p513
    %p515 = scmp.ne.s32.totalorder %s506, %s507
    %p516 = scmp.eq.s32.totalorder %s92, 0
    %p517 = por %p515, %p516
    %p518 = scmp.ne.s32.totalorder %s506, %s507
    %p519 = scmp.eq.s32.totalorder %s93, 1
    %p520 = por %p518, %p519
    %p522 = scmp.ne.s32.totalorder %s507, %s521
    %p523 = scmp.eq.s32.totalorder %s93, 0
    %p524 = por %p522, %p523
    %s526 = sadd.s32 %s525, 1
    %p529 = scmp.eq.s32.totalorder %s87, 1
    %p530 = scmp.ne.s32.totalorder %s525, %s527
    %p531 = scmp.eq.s32.totalorder %s87, 0
    %p532 = por %p530, %p531
    %p533 = scmp.ne.s32.totalorder %s525, %s527
    %p534 = scmp.eq.s32.totalorder %s92, 1
    %p535 = por %p533, %p534
    %p536 = scmp.ne.s32.totalorder %s527, %s528
    %p537 = scmp.eq.s32.totalorder %s92, 0
    %p538 = por %p536, %p537
    %p539 = scmp.ne.s32.totalorder %s527, %s528
    %p540 = scmp.eq.s32.totalorder %s93, 1
    %p541 = por %p539, %p540
    %p543 = scmp.ne.s32.totalorder %s528, %s542
    %p544 = scmp.eq.s32.totalorder %s93, 0
    %p545 = por %p543, %p544
    %s547 = sadd.s32 %s546, 1
    %p550 = scmp.eq.s32.totalorder %s87, 1
    %p551 = scmp.ne.s32.totalorder %s546, %s548
    %p552 = scmp.eq.s32.totalorder %s87, 0
    %p553 = por %p551, %p552
    %p554 = scmp.ne.s32.totalorder %s546, %s548
    %p555 = scmp.eq.s32.totalorder %s92, 1
    %p556 = por %p554, %p555
    %p557 = scmp.ne.s32.totalorder %s548, %s549
    %p558 = scmp.eq.s32.totalorder %s92, 0
    %p559 = por %p557, %p558
    %p560 = scmp.ne.s32.totalorder %s548, %s549
    %p561 = scmp.eq.s32.totalorder %s93, 1
    %p562 = por %p560, %p561
    %p564 = scmp.ne.s32.totalorder %s549, %s563
    %p565 = scmp.eq.s32.totalorder %s93, 0
    %p566 = por %p564, %p565
    %s568 = sadd.s32 %s567, 1
    %p571 = scmp.eq.s32.totalorder %s87, 1
    %p572 = scmp.ne.s32.totalorder %s567, %s569
    %p573 = scmp.eq.s32.totalorder %s87, 0
    %p574 = por %p572, %p573
    %p575 = scmp.ne.s32.totalorder %s567, %s569
    %p576 = scmp.eq.s32.totalorder %s92, 1
    %p577 = por %p575, %p576
    %p578 = scmp.ne.s32.totalorder %s569, %s570
    %p579 = scmp.eq.s32.totalorder %s92, 0
    %p580 = por %p578, %p579
    %p581 = scmp.ne.s32.totalorder %s569, %s570
    %p582 = scmp.eq.s32.totalorder %s93, 1
    %p583 = por %p581, %p582
    %p585 = scmp.ne.s32.totalorder %s570, %s584
    %p586 = scmp.eq.s32.totalorder %s93, 0
    %p587 = por %p585, %p586
    %s589 = sadd.s32 %s588, 1
    %p592 = scmp.eq.s32.totalorder %s87, 1
    %p593 = scmp.ne.s32.totalorder %s588, %s590
    %p594 = scmp.eq.s32.totalorder %s87, 0
    %p595 = por %p593, %p594
    %p596 = scmp.ne.s32.totalorder %s588, %s590
    %p597 = scmp.eq.s32.totalorder %s92, 1
    %p598 = por %p596, %p597
    %p599 = scmp.ne.s32.totalorder %s590, %s591
    %p600 = scmp.eq.s32.totalorder %s92, 0
    %p601 = por %p599, %p600
    %p602 = scmp.ne.s32.totalorder %s590, %s591
    %p603 = scmp.eq.s32.totalorder %s93, 1
    %p604 = por %p602, %p603
    %p606 = scmp.ne.s32.totalorder %s591, %s605
    %p607 = scmp.eq.s32.totalorder %s93, 0
    %p608 = por %p606, %p607
    %s610 = sadd.s32 %s609, 1
    %p613 = scmp.eq.s32.totalorder %s87, 1
    %p614 = scmp.ne.s32.totalorder %s609, %s611
    %p615 = scmp.eq.s32.totalorder %s87, 0
    %p616 = por %p614, %p615
    %p617 = scmp.ne.s32.totalorder %s609, %s611
    %p618 = scmp.eq.s32.totalorder %s92, 1
    %p619 = por %p617, %p618
    %p620 = scmp.ne.s32.totalorder %s611, %s612
    %p621 = scmp.eq.s32.totalorder %s92, 0
    %p622 = por %p620, %p621
    %p623 = scmp.ne.s32.totalorder %s611, %s612
    %p624 = scmp.eq.s32.totalorder %s93, 1
    %p625 = por %p623, %p624
    %p627 = scmp.ne.s32.totalorder %s612, %s626
    %p628 = scmp.eq.s32.totalorder %s93, 0
    %p629 = por %p627, %p628
    %s631 = sadd.s32 %s630, 1
    %p634 = scmp.eq.s32.totalorder %s87, 1
    %p635 = scmp.ne.s32.totalorder %s630, %s632
    %p636 = scmp.eq.s32.totalorder %s87, 0
    %p637 = por %p635, %p636
    %p638 = scmp.ne.s32.totalorder %s630, %s632
    %p639 = scmp.eq.s32.totalorder %s92, 1
    %p640 = por %p638, %p639
    %p641 = scmp.ne.s32.totalorder %s632, %s633
    %p642 = scmp.eq.s32.totalorder %s92, 0
    %p643 = por %p641, %p642
    %p644 = scmp.ne.s32.totalorder %s632, %s633
    %p645 = scmp.eq.s32.totalorder %s93, 1
    %p646 = por %p644, %p645
    %p648 = scmp.ne.s32.totalorder %s633, %s647
    %p649 = scmp.eq.s32.totalorder %s93, 0
    %p650 = por %p648, %p649
    %s652 = sadd.s32 %s651, 1
    %p655 = scmp.eq.s32.totalorder %s87, 1
    %p656 = scmp.ne.s32.totalorder %s651, %s653
    %p657 = scmp.eq.s32.totalorder %s87, 0
    %p658 = por %p656, %p657
    %p659 = scmp.ne.s32.totalorder %s651, %s653
    %p660 = scmp.eq.s32.totalorder %s92, 1
    %p661 = por %p659, %p660
    %p662 = scmp.ne.s32.totalorder %s653, %s654
    %p663 = scmp.eq.s32.totalorder %s92, 0
    %p664 = por %p662, %p663
    %p665 = scmp.ne.s32.totalorder %s653, %s654
    %p666 = scmp.eq.s32.totalorder %s93, 1
    %p667 = por %p665, %p666
    %p669 = scmp.ne.s32.totalorder %s654, %s668
    %p670 = scmp.eq.s32.totalorder %s93, 0
    %p671 = por %p669, %p670
    %s673 = sadd.s32 %s672, 1
    %p676 = scmp.eq.s32.totalorder %s87, 1
    %p677 = scmp.ne.s32.totalorder %s672, %s674
    %p678 = scmp.eq.s32.totalorder %s87, 0
    %p679 = por %p677, %p678
    %p680 = scmp.ne.s32.totalorder %s672, %s674
    %p681 = scmp.eq.s32.totalorder %s92, 1
    %p682 = por %p680, %p681
    %p683 = scmp.ne.s32.totalorder %s674, %s675
    %p684 = scmp.eq.s32.totalorder %s92, 0
    %p685 = por %p683, %p684
    %p686 = scmp.ne.s32.totalorder %s674, %s675
    %p687 = scmp.eq.s32.totalorder %s93, 1
    %p688 = por %p686, %p687
    %p690 = scmp.ne.s32.totalorder %s675, %s689
    %p691 = scmp.eq.s32.totalorder %s93, 0
    %p692 = por %p690, %p691
    %s694 = sadd.s32 %s693, 1
    %p697 = scmp.eq.s32.totalorder %s87, 1
    %p698 = scmp.ne.s32.totalorder %s693, %s695
    %p699 = scmp.eq.s32.totalorder %s87, 0
    %p700 = por %p698, %p699
    %p701 = scmp.ne.s32.totalorder %s693, %s695
    %p702 = scmp.eq.s32.totalorder %s92, 1
    %p703 = por %p701, %p702
    %p704 = scmp.ne.s32.totalorder %s695, %s696
    %p705 = scmp.eq.s32.totalorder %s92, 0
    %p706 = por %p704, %p705
    %p707 = scmp.ne.s32.totalorder %s695, %s696
    %p708 = scmp.eq.s32.totalorder %s93, 1
    %p709 = por %p707, %p708
    %p711 = scmp.ne.s32.totalorder %s696, %s710
    %p712 = scmp.eq.s32.totalorder %s93, 0
    %p713 = por %p711, %p712
    %s715 = sadd.s32 %s714, 1
    %p718 = scmp.eq.s32.totalorder %s87, 1
    %p719 = scmp.ne.s32.totalorder %s714, %s716
    %p720 = scmp.eq.s32.totalorder %s87, 0
    %p721 = por %p719, %p720
    %p722 = scmp.ne.s32.totalorder %s714, %s716
    %p723 = scmp.eq.s32.totalorder %s92, 1
    %p724 = por %p722, %p723
    %p725 = scmp.ne.s32.totalorder %s716, %s717
    %p726 = scmp.eq.s32.totalorder %s92, 0
    %p727 = por %p725, %p726
    %p728 = scmp.ne.s32.totalorder %s716, %s717
    %p729 = scmp.eq.s32.totalorder %s93, 1
    %p730 = por %p728, %p729
    %p732 = scmp.ne.s32.totalorder %s717, %s731
    %p733 = scmp.eq.s32.totalorder %s93, 0
    %p734 = por %p732, %p733
    %s736 = sadd.s32 %s735, 1
    %p739 = scmp.eq.s32.totalorder %s87, 1
    %p740 = scmp.ne.s32.totalorder %s735, %s737
    %p741 = scmp.eq.s32.totalorder %s87, 0
    %p742 = por %p740, %p741
    %p743 = scmp.ne.s32.totalorder %s735, %s737
    %p744 = scmp.eq.s32.totalorder %s92, 1
    %p745 = por %p743, %p744
    %p746 = scmp.ne.s32.totalorder %s737, %s738
    %p747 = scmp.eq.s32.totalorder %s92, 0
    %p748 = por %p746, %p747
    %p749 = scmp.ne.s32.totalorder %s737, %s738
    %p750 = scmp.eq.s32.totalorder %s93, 1
    %p751 = por %p749, %p750
    %p753 = scmp.ne.s32.totalorder %s738, %s752
    %p754 = scmp.eq.s32.totalorder %s93, 0
    %p755 = por %p753, %p754
    %s757 = sadd.s32 %s756, 1
    %p760 = scmp.eq.s32.totalorder %s87, 1
    %p761 = scmp.ne.s32.totalorder %s756, %s758
    %p762 = scmp.eq.s32.totalorder %s87, 0
    %p763 = por %p761, %p762
    %p764 = scmp.ne.s32.totalorder %s756, %s758
    %p765 = scmp.eq.s32.totalorder %s92, 1
    %p766 = por %p764, %p765
    %p767 = scmp.ne.s32.totalorder %s758, %s759
    %p768 = scmp.eq.s32.totalorder %s92, 0
    %p769 = por %p767, %p768
    %p770 = scmp.ne.s32.totalorder %s758, %s759
    %p771 = scmp.eq.s32.totalorder %s93, 1
    %p772 = por %p770, %p771
    %p774 = scmp.ne.s32.totalorder %s759, %s773
    %p775 = scmp.eq.s32.totalorder %s93, 0
    %p776 = por %p774, %p775
    %s778 = sadd.s32 %s777, 1
    %p781 = scmp.eq.s32.totalorder %s87, 1
    %p782 = scmp.ne.s32.totalorder %s777, %s779
    %p783 = scmp.eq.s32.totalorder %s87, 0
    %p784 = por %p782, %p783
    %p785 = scmp.ne.s32.totalorder %s777, %s779
    %p786 = scmp.eq.s32.totalorder %s92, 1
    %p787 = por %p785, %p786
    %p788 = scmp.ne.s32.totalorder %s779, %s780
    %p789 = scmp.eq.s32.totalorder %s92, 0
    %p790 = por %p788, %p789
    %p791 = scmp.ne.s32.totalorder %s779, %s780
    %p792 = scmp.eq.s32.totalorder %s93, 1
    %p793 = por %p791, %p792
    %p795 = scmp.ne.s32.totalorder %s780, %s794
    %p796 = scmp.eq.s32.totalorder %s93, 0
    %p797 = por %p795, %p796
    %s799 = sadd.s32 %s798, 1
    %p802 = scmp.eq.s32.totalorder %s87, 1
    %p803 = scmp.ne.s32.totalorder %s798, %s800
    %p804 = scmp.eq.s32.totalorder %s87, 0
    %p805 = por %p803, %p804
    %p806 = scmp.ne.s32.totalorder %s798, %s800
    %p807 = scmp.eq.s32.totalorder %s92, 1
    %p808 = por %p806, %p807
    %p809 = scmp.ne.s32.totalorder %s800, %s801
    %p810 = scmp.eq.s32.totalorder %s92, 0
    %p811 = por %p809, %p810
    %p812 = scmp.ne.s32.totalorder %s800, %s801
    %p813 = scmp.eq.s32.totalorder %s93, 1
    %p814 = por %p812, %p813
    %p816 = scmp.ne.s32.totalorder %s801, %s815
    %p817 = scmp.eq.s32.totalorder %s93, 0
    %p818 = por %p816, %p817
    %s820 = sadd.s32 %s819, 1
    %p823 = scmp.eq.s32.totalorder %s87, 1
    %p824 = scmp.ne.s32.totalorder %s819, %s821
    %p825 = scmp.eq.s32.totalorder %s87, 0
    %p826 = por %p824, %p825
    %p827 = scmp.ne.s32.totalorder %s819, %s821
    %p828 = scmp.eq.s32.totalorder %s92, 1
    %p829 = por %p827, %p828
    %p830 = scmp.ne.s32.totalorder %s821, %s822
    %p831 = scmp.eq.s32.totalorder %s92, 0
    %p832 = por %p830, %p831
    %p833 = scmp.ne.s32.totalorder %s821, %s822
    %p834 = scmp.eq.s32.totalorder %s93, 1
    %p835 = por %p833, %p834
    %p837 = scmp.ne.s32.totalorder %s822, %s836
    %p838 = scmp.eq.s32.totalorder %s93, 0
    %p839 = por %p837, %p838
    %s841 = sadd.s32 %s840, 1
    %p844 = scmp.eq.s32.totalorder %s87, 1
    %p845 = scmp.ne.s32.totalorder %s840, %s842
    %p846 = scmp.eq.s32.totalorder %s87, 0
    %p847 = por %p845, %p846
    %p848 = scmp.ne.s32.totalorder %s840, %s842
    %p849 = scmp.eq.s32.totalorder %s92, 1
    %p850 = por %p848, %p849
    %p851 = scmp.ne.s32.totalorder %s842, %s843
    %p852 = scmp.eq.s32.totalorder %s92, 0
    %p853 = por %p851, %p852
    %p854 = scmp.ne.s32.totalorder %s842, %s843
    %p855 = scmp.eq.s32.totalorder %s93, 1
    %p856 = por %p854, %p855
    %p858 = scmp.ne.s32.totalorder %s843, %s857
    %p859 = scmp.eq.s32.totalorder %s93, 0
    %p860 = por %p858, %p859
    %s862 = sadd.s32 %s861, 1
    %p865 = scmp.eq.s32.totalorder %s87, 1
    %p866 = scmp.ne.s32.totalorder %s861, %s863
    %p867 = scmp.eq.s32.totalorder %s87, 0
    %p868 = por %p866, %p867
    %p869 = scmp.ne.s32.totalorder %s861, %s863
    %p870 = scmp.eq.s32.totalorder %s92, 1
    %p871 = por %p869, %p870
    %p872 = scmp.ne.s32.totalorder %s863, %s864
    %p873 = scmp.eq.s32.totalorder %s92, 0
    %p874 = por %p872, %p873
    %p875 = scmp.ne.s32.totalorder %s863, %s864
    %p876 = scmp.eq.s32.totalorder %s93, 1
    %p877 = por %p875, %p876
    %p879 = scmp.ne.s32.totalorder %s864, %s878
    %p880 = scmp.eq.s32.totalorder %s93, 0
    %p881 = por %p879, %p880
    %s883 = sadd.s32 %s882, 1
    %p886 = scmp.eq.s32.totalorder %s87, 1
    %p887 = scmp.ne.s32.totalorder %s882, %s884
    %p888 = scmp.eq.s32.totalorder %s87, 0
    %p889 = por %p887, %p888
    %p890 = scmp.ne.s32.totalorder %s882, %s884
    %p891 = scmp.eq.s32.totalorder %s92, 1
    %p892 = por %p890, %p891
    %p893 = scmp.ne.s32.totalorder %s884, %s885
    %p894 = scmp.eq.s32.totalorder %s92, 0
    %p895 = por %p893, %p894
    %p896 = scmp.ne.s32.totalorder %s884, %s885
    %p897 = scmp.eq.s32.totalorder %s93, 1
    %p898 = por %p896, %p897
    %p900 = scmp.ne.s32.totalorder %s885, %s899
    %p901 = scmp.eq.s32.totalorder %s93, 0
    %p902 = por %p900, %p901
    %s904 = sadd.s32 %s903, 1
    %p907 = scmp.eq.s32.totalorder %s87, 1
    %p908 = scmp.ne.s32.totalorder %s903, %s905
    %p909 = scmp.eq.s32.totalorder %s87, 0
    %p910 = por %p908, %p909
    %p911 = scmp.ne.s32.totalorder %s903, %s905
    %p912 = scmp.eq.s32.totalorder %s92, 1
    %p913 = por %p911, %p912
    %p914 = scmp.ne.s32.totalorder %s905, %s906
    %p915 = scmp.eq.s32.totalorder %s92, 0
    %p916 = por %p914, %p915
    %p917 = scmp.ne.s32.totalorder %s905, %s906
    %p918 = scmp.eq.s32.totalorder %s93, 1
    %p919 = por %p917, %p918
    %p921 = scmp.ne.s32.totalorder %s906, %s920
    %p922 = scmp.eq.s32.totalorder %s93, 0
    %p923 = por %p921, %p922
    %s925 = sadd.s32 %s924, 1
    %p928 = scmp.eq.s32.totalorder %s87, 1
    %p929 = scmp.ne.s32.totalorder %s924, %s926
    %p930 = scmp.eq.s32.totalorder %s87, 0
    %p931 = por %p929, %p930
    %p932 = scmp.ne.s32.totalorder %s924, %s926
    %p933 = scmp.eq.s32.totalorder %s92, 1
    %p934 = por %p932, %p933
    %p935 = scmp.ne.s32.totalorder %s926, %s927
    %p936 = scmp.eq.s32.totalorder %s92, 0
    %p937 = por %p935, %p936
    %p938 = scmp.ne.s32.totalorder %s926, %s927
    %p939 = scmp.eq.s32.totalorder %s93, 1
    %p940 = por %p938, %p939
    %p942 = scmp.ne.s32.totalorder %s927, %s941
    %p943 = scmp.eq.s32.totalorder %s93, 0
    %p944 = por %p942, %p943
    %s945 = ssub.s32 %s87, %s94
    %p946 = scmp.eq.s32.totalorder %s945, 0
    %s948 = sadd.s32 %s947, 1
    %s949 = scalar_select %p946, %s947, %s948
    %p952 = pneg %p946
    %p953 = scmp.eq.s32.totalorder %s87, 1
    %p954 = por %p952, %p953
    %p955 = scmp.ne.s32.totalorder %s947, %s950
    %p956 = scmp.eq.s32.totalorder %s87, 0
    %p957 = por %p955, %p956
    %p958 = scmp.ne.s32.totalorder %s947, %s950
    %p959 = scmp.eq.s32.totalorder %s92, 1
    %p960 = por %p958, %p959
    %p961 = scmp.ne.s32.totalorder %s950, %s951
    %p962 = scmp.eq.s32.totalorder %s92, 0
    %p963 = por %p961, %p962
    %p964 = scmp.ne.s32.totalorder %s950, %s951
    %p965 = scmp.eq.s32.totalorder %s93, 1
    %p966 = por %p964, %p965
    %p968 = scmp.ne.s32.totalorder %s951, %s967
    %p969 = scmp.eq.s32.totalorder %s93, 0
    %p970 = por %p968, %p969
    %p971 = scmp.le.s32.totalorder 1, %s87
    %p972 = scmp.lt.s32.totalorder %s87, 3
    %p973 = pnand %p971, %p972
    %p974 = pneg %p973
    // Predicated region
    $region9: #{gnn_forward.1} parent=5 // pred_check
      _
    $region10: #{gnn_forward.1} parent=5 // pred_check_branch
      %976 = sbr.rel (%p973) target = $region12
    $region11: #{gnn_forward.1} parent=5 // pred_region
      %s977 = ssub.s32 %s87, 1
      // Predicated region
      $region13: #{gnn_forward.1} parent=11 // pred_check
        %p978 = pneg %p160
      $region14: #{gnn_forward.1} parent=11 // pred_check_branch
        %980 = sbr.rel (%p978) target = $region16
      $region15: #{gnn_forward.1} parent=11 // pred_region
        _
      $region16: #{gnn_forward.1} parent=11 // pred_fallthru
        _
      // Predicated region
      $region17: #{gnn_forward.1} parent=11 // pred_check
        %p981 = pneg %p181
      $region18: #{gnn_forward.1} parent=11 // pred_check_branch
        %983 = sbr.rel (%p981) target = $region20
      $region19: #{gnn_forward.1} parent=11 // pred_region
        _
      $region20: #{gnn_forward.1} parent=11 // pred_fallthru
        _
      // Predicated region
      $region21: #{gnn_forward.1} parent=11 // pred_check
        %p984 = pneg %p202
      $region22: #{gnn_forward.1} parent=11 // pred_check_branch
        %986 = sbr.rel (%p984) target = $region24
      $region23: #{gnn_forward.1} parent=11 // pred_region
        _
      $region24: #{gnn_forward.1} parent=11 // pred_fallthru
        _
      // Predicated region
      $region25: #{gnn_forward.1} parent=11 // pred_check
        %p987 = pneg %p223
      $region26: #{gnn_forward.1} parent=11 // pred_check_branch
        %989 = sbr.rel (%p987) target = $region28
      $region27: #{gnn_forward.1} parent=11 // pred_region
        _
      $region28: #{gnn_forward.1} parent=11 // pred_fallthru
        _
      // Predicated region
      $region29: #{gnn_forward.1} parent=11 // pred_check
        %p990 = pneg %p244
      $region30: #{gnn_forward.1} parent=11 // pred_check_branch
        %992 = sbr.rel (%p990) target = $region32
      $region31: #{gnn_forward.1} parent=11 // pred_region
        _
      $region32: #{gnn_forward.1} parent=11 // pred_fallthru
        _
      // Predicated region
      $region33: #{gnn_forward.1} parent=11 // pred_check
        %p993 = pneg %p265
      $region34: #{gnn_forward.1} parent=11 // pred_check_branch
        %995 = sbr.rel (%p993) target = $region36
      $region35: #{gnn_forward.1} parent=11 // pred_region
        _
      $region36: #{gnn_forward.1} parent=11 // pred_fallthru
        _
      // Predicated region
      $region37: #{gnn_forward.1} parent=11 // pred_check
        %p996 = pneg %p286
      $region38: #{gnn_forward.1} parent=11 // pred_check_branch
        %998 = sbr.rel (%p996) target = $region40
      $region39: #{gnn_forward.1} parent=11 // pred_region
        _
      $region40: #{gnn_forward.1} parent=11 // pred_fallthru
        _
      // Predicated region
      $region41: #{gnn_forward.1} parent=11 // pred_check
        %p999 = pneg %p307
      $region42: #{gnn_forward.1} parent=11 // pred_check_branch
        %1001 = sbr.rel (%p999) target = $region44
      $region43: #{gnn_forward.1} parent=11 // pred_region
        _
      $region44: #{gnn_forward.1} parent=11 // pred_fallthru
        _
      // Predicated region
      $region45: #{gnn_forward.1} parent=11 // pred_check
        %p1002 = pneg %p328
      $region46: #{gnn_forward.1} parent=11 // pred_check_branch
        %1004 = sbr.rel (%p1002) target = $region48
      $region47: #{gnn_forward.1} parent=11 // pred_region
        _
      $region48: #{gnn_forward.1} parent=11 // pred_fallthru
        _
      // Predicated region
      $region49: #{gnn_forward.1} parent=11 // pred_check
        %p1005 = pneg %p349
      $region50: #{gnn_forward.1} parent=11 // pred_check_branch
        %1007 = sbr.rel (%p1005) target = $region52
      $region51: #{gnn_forward.1} parent=11 // pred_region
        _
      $region52: #{gnn_forward.1} parent=11 // pred_fallthru
        _
      // Predicated region
      $region53: #{gnn_forward.1} parent=11 // pred_check
        %p1008 = pneg %p370
      $region54: #{gnn_forward.1} parent=11 // pred_check_branch
        %1010 = sbr.rel (%p1008) target = $region56
      $region55: #{gnn_forward.1} parent=11 // pred_region
        _
      $region56: #{gnn_forward.1} parent=11 // pred_fallthru
        _
      // Predicated region
      $region57: #{gnn_forward.1} parent=11 // pred_check
        %p1011 = pneg %p391
      $region58: #{gnn_forward.1} parent=11 // pred_check_branch
        %1013 = sbr.rel (%p1011) target = $region60
      $region59: #{gnn_forward.1} parent=11 // pred_region
        _
      $region60: #{gnn_forward.1} parent=11 // pred_fallthru
        _
      // Predicated region
      $region61: #{gnn_forward.1} parent=11 // pred_check
        %p1014 = pneg %p412
      $region62: #{gnn_forward.1} parent=11 // pred_check_branch
        %1016 = sbr.rel (%p1014) target = $region64
      $region63: #{gnn_forward.1} parent=11 // pred_region
        _
      $region64: #{gnn_forward.1} parent=11 // pred_fallthru
        _
      // Predicated region
      $region65: #{gnn_forward.1} parent=11 // pred_check
        %p1017 = pneg %p433
      $region66: #{gnn_forward.1} parent=11 // pred_check_branch
        %1019 = sbr.rel (%p1017) target = $region68
      $region67: #{gnn_forward.1} parent=11 // pred_region
        _
      $region68: #{gnn_forward.1} parent=11 // pred_fallthru
        _
      // Predicated region
      $region69: #{gnn_forward.1} parent=11 // pred_check
        %p1020 = pneg %p454
      $region70: #{gnn_forward.1} parent=11 // pred_check_branch
        %1022 = sbr.rel (%p1020) target = $region72
      $region71: #{gnn_forward.1} parent=11 // pred_region
        _
      $region72: #{gnn_forward.1} parent=11 // pred_fallthru
        _
      // Predicated region
      $region73: #{gnn_forward.1} parent=11 // pred_check
        %p1023 = pneg %p475
      $region74: #{gnn_forward.1} parent=11 // pred_check_branch
        %1025 = sbr.rel (%p1023) target = $region76
      $region75: #{gnn_forward.1} parent=11 // pred_region
        _
      $region76: #{gnn_forward.1} parent=11 // pred_fallthru
        _
      // Predicated region
      $region77: #{gnn_forward.1} parent=11 // pred_check
        %p1026 = pneg %p496
      $region78: #{gnn_forward.1} parent=11 // pred_check_branch
        %1028 = sbr.rel (%p1026) target = $region80
      $region79: #{gnn_forward.1} parent=11 // pred_region
        _
      $region80: #{gnn_forward.1} parent=11 // pred_fallthru
        _
      // Predicated region
      $region81: #{gnn_forward.1} parent=11 // pred_check
        %p1029 = pneg %p517
      $region82: #{gnn_forward.1} parent=11 // pred_check_branch
        %1031 = sbr.rel (%p1029) target = $region84
      $region83: #{gnn_forward.1} parent=11 // pred_region
        _
      $region84: #{gnn_forward.1} parent=11 // pred_fallthru
        _
      // Predicated region
      $region85: #{gnn_forward.1} parent=11 // pred_check
        %p1032 = pneg %p538
      $region86: #{gnn_forward.1} parent=11 // pred_check_branch
        %1034 = sbr.rel (%p1032) target = $region88
      $region87: #{gnn_forward.1} parent=11 // pred_region
        _
      $region88: #{gnn_forward.1} parent=11 // pred_fallthru
        _
      // Predicated region
      $region89: #{gnn_forward.1} parent=11 // pred_check
        %p1035 = pneg %p559
      $region90: #{gnn_forward.1} parent=11 // pred_check_branch
        %1037 = sbr.rel (%p1035) target = $region92
      $region91: #{gnn_forward.1} parent=11 // pred_region
        _
      $region92: #{gnn_forward.1} parent=11 // pred_fallthru
        _
      // Predicated region
      $region93: #{gnn_forward.1} parent=11 // pred_check
        %p1038 = pneg %p580
      $region94: #{gnn_forward.1} parent=11 // pred_check_branch
        %1040 = sbr.rel (%p1038) target = $region96
      $region95: #{gnn_forward.1} parent=11 // pred_region
        _
      $region96: #{gnn_forward.1} parent=11 // pred_fallthru
        _
      // Predicated region
      $region97: #{gnn_forward.1} parent=11 // pred_check
        %p1041 = pneg %p601
      $region98: #{gnn_forward.1} parent=11 // pred_check_branch
        %1043 = sbr.rel (%p1041) target = $region100
      $region99: #{gnn_forward.1} parent=11 // pred_region
        _
      $region100: #{gnn_forward.1} parent=11 // pred_fallthru
        _
      // Predicated region
      $region101: #{gnn_forward.1} parent=11 // pred_check
        %p1044 = pneg %p622
      $region102: #{gnn_forward.1} parent=11 // pred_check_branch
        %1046 = sbr.rel (%p1044) target = $region104
      $region103: #{gnn_forward.1} parent=11 // pred_region
        _
      $region104: #{gnn_forward.1} parent=11 // pred_fallthru
        _
      // Predicated region
      $region105: #{gnn_forward.1} parent=11 // pred_check
        %p1047 = pneg %p643
      $region106: #{gnn_forward.1} parent=11 // pred_check_branch
        %1049 = sbr.rel (%p1047) target = $region108
      $region107: #{gnn_forward.1} parent=11 // pred_region
        _
      $region108: #{gnn_forward.1} parent=11 // pred_fallthru
        _
      // Predicated region
      $region109: #{gnn_forward.1} parent=11 // pred_check
        %p1050 = pneg %p664
      $region110: #{gnn_forward.1} parent=11 // pred_check_branch
        %1052 = sbr.rel (%p1050) target = $region112
      $region111: #{gnn_forward.1} parent=11 // pred_region
        _
      $region112: #{gnn_forward.1} parent=11 // pred_fallthru
        _
      // Predicated region
      $region113: #{gnn_forward.1} parent=11 // pred_check
        %p1053 = pneg %p685
      $region114: #{gnn_forward.1} parent=11 // pred_check_branch
        %1055 = sbr.rel (%p1053) target = $region116
      $region115: #{gnn_forward.1} parent=11 // pred_region
        _
      $region116: #{gnn_forward.1} parent=11 // pred_fallthru
        _
      // Predicated region
      $region117: #{gnn_forward.1} parent=11 // pred_check
        %p1056 = pneg %p706
      $region118: #{gnn_forward.1} parent=11 // pred_check_branch
        %1058 = sbr.rel (%p1056) target = $region120
      $region119: #{gnn_forward.1} parent=11 // pred_region
        _
      $region120: #{gnn_forward.1} parent=11 // pred_fallthru
        _
      // Predicated region
      $region121: #{gnn_forward.1} parent=11 // pred_check
        %p1059 = pneg %p727
      $region122: #{gnn_forward.1} parent=11 // pred_check_branch
        %1061 = sbr.rel (%p1059) target = $region124
      $region123: #{gnn_forward.1} parent=11 // pred_region
        _
      $region124: #{gnn_forward.1} parent=11 // pred_fallthru
        _
      // Predicated region
      $region125: #{gnn_forward.1} parent=11 // pred_check
        %p1062 = pneg %p748
      $region126: #{gnn_forward.1} parent=11 // pred_check_branch
        %1064 = sbr.rel (%p1062) target = $region128
      $region127: #{gnn_forward.1} parent=11 // pred_region
        _
      $region128: #{gnn_forward.1} parent=11 // pred_fallthru
        _
      // Predicated region
      $region129: #{gnn_forward.1} parent=11 // pred_check
        %p1065 = pneg %p769
      $region130: #{gnn_forward.1} parent=11 // pred_check_branch
        %1067 = sbr.rel (%p1065) target = $region132
      $region131: #{gnn_forward.1} parent=11 // pred_region
        _
      $region132: #{gnn_forward.1} parent=11 // pred_fallthru
        _
      // Predicated region
      $region133: #{gnn_forward.1} parent=11 // pred_check
        %p1068 = pneg %p790
      $region134: #{gnn_forward.1} parent=11 // pred_check_branch
        %1070 = sbr.rel (%p1068) target = $region136
      $region135: #{gnn_forward.1} parent=11 // pred_region
        _
      $region136: #{gnn_forward.1} parent=11 // pred_fallthru
        _
      // Predicated region
      $region137: #{gnn_forward.1} parent=11 // pred_check
        %p1071 = pneg %p811
      $region138: #{gnn_forward.1} parent=11 // pred_check_branch
        %1073 = sbr.rel (%p1071) target = $region140
      $region139: #{gnn_forward.1} parent=11 // pred_region
        _
      $region140: #{gnn_forward.1} parent=11 // pred_fallthru
        _
      // Predicated region
      $region141: #{gnn_forward.1} parent=11 // pred_check
        %p1074 = pneg %p832
      $region142: #{gnn_forward.1} parent=11 // pred_check_branch
        %1076 = sbr.rel (%p1074) target = $region144
      $region143: #{gnn_forward.1} parent=11 // pred_region
        _
      $region144: #{gnn_forward.1} parent=11 // pred_fallthru
        _
      // Predicated region
      $region145: #{gnn_forward.1} parent=11 // pred_check
        %p1077 = pneg %p853
      $region146: #{gnn_forward.1} parent=11 // pred_check_branch
        %1079 = sbr.rel (%p1077) target = $region148
      $region147: #{gnn_forward.1} parent=11 // pred_region
        _
      $region148: #{gnn_forward.1} parent=11 // pred_fallthru
        _
      // Predicated region
      $region149: #{gnn_forward.1} parent=11 // pred_check
        %p1080 = pneg %p874
      $region150: #{gnn_forward.1} parent=11 // pred_check_branch
        %1082 = sbr.rel (%p1080) target = $region152
      $region151: #{gnn_forward.1} parent=11 // pred_region
        _
      $region152: #{gnn_forward.1} parent=11 // pred_fallthru
        _
      // Predicated region
      $region153: #{gnn_forward.1} parent=11 // pred_check
        %p1083 = pneg %p895
      $region154: #{gnn_forward.1} parent=11 // pred_check_branch
        %1085 = sbr.rel (%p1083) target = $region156
      $region155: #{gnn_forward.1} parent=11 // pred_region
        _
      $region156: #{gnn_forward.1} parent=11 // pred_fallthru
        _
      // Predicated region
      $region157: #{gnn_forward.1} parent=11 // pred_check
        %p1086 = pneg %p916
      $region158: #{gnn_forward.1} parent=11 // pred_check_branch
        %1088 = sbr.rel (%p1086) target = $region160
      $region159: #{gnn_forward.1} parent=11 // pred_region
        _
      $region160: #{gnn_forward.1} parent=11 // pred_fallthru
        _
      // Predicated region
      $region161: #{gnn_forward.1} parent=11 // pred_check
        %p1089 = pneg %p937
      $region162: #{gnn_forward.1} parent=11 // pred_check_branch
        %1091 = sbr.rel (%p1089) target = $region164
      $region163: #{gnn_forward.1} parent=11 // pred_region
        _
      $region164: #{gnn_forward.1} parent=11 // pred_fallthru
        _
    $region12: #{gnn_forward.1} parent=5 // pred_fallthru
      _
    %p1092 = scmp.lt.s32.totalorder %s87, 2
    // Predicated region
    $region165: #{gnn_forward.1} parent=5 // pred_check
      %p1093 = pneg %p1092
    $region166: #{gnn_forward.1} parent=5 // pred_check_branch
      %1095 = sbr.rel (%p1093) target = $region168
    $region167: #{gnn_forward.1} parent=5 // pred_region
      // Predicated region
      $region169: #{gnn_forward.1} parent=167 // pred_check
        %p1096 = pneg %p107
      $region170: #{gnn_forward.1} parent=167 // pred_check_branch
        %1098 = sbr.rel (%p1096) target = $region172
      $region171: #{gnn_forward.1} parent=167 // pred_region
        %p1099 = scmp.lt.s32.totalorder %s87, 1
        %s1100 = scalar_select %p1099, %s87, 1
        %s1101 = smul.addr %s1100, 8
        %s1102 = scalar_lea.vmem %s1, %s1101
      $region172: #{gnn_forward.1} parent=167 // pred_fallthru
        _
      // Predicated region
      $region173: #{gnn_forward.1} parent=167 // pred_check
        %p1103 = pneg %p133
      $region174: #{gnn_forward.1} parent=167 // pred_check_branch
        %1105 = sbr.rel (%p1103) target = $region176
      $region175: #{gnn_forward.1} parent=167 // pred_region
        %p1106 = scmp.lt.s32.totalorder %s87, 1
        %s1107 = scalar_select %p1106, %s87, 1
        %s1108 = smul.addr %s1107, 8
        %s1109 = scalar_lea.vmem %s3, %s1108
      $region176: #{gnn_forward.1} parent=167 // pred_fallthru
        _
    $region168: #{gnn_forward.1} parent=5 // pred_fallthru
      _
    %p1110 = scmp.le.s32.totalorder 1, %s87
    %p1111 = scmp.lt.s32.totalorder %s87, 3
    %p1112 = pnand %p1110, %p1111
    %p1113 = pneg %p1112
    // Predicated region
    $region177: #{gnn_forward.1} parent=5 // pred_check
      _
    $region178: #{gnn_forward.1} parent=5 // pred_check_branch
      %1115 = sbr.rel (%p1112) target = $region180
    $region179: #{gnn_forward.1} parent=5 // pred_region
      %s1116 = ssub.s32 %s87, 1
      %p1117 = scmp.lt.s32.totalorder %s92, 1
      %s1118 = scalar_select %p1117, %s92, 1
      %s1119 = smul.addr %s1118, 8
      %s1120 = scalar_lea.vmem %s1, %s1119
      %p1121 = pneg %p113
      %p1122 = pneg %p110
      %p1123 = scmp.lt.s32.totalorder %s92, 1
      %s1124 = scalar_select %p1123, %s92, 1
      %s1125 = smul.addr %s1124, 8
      %s1126 = scalar_lea.vmem %s3, %s1125
      %p1127 = pneg %p139
      %p1128 = pneg %p136
      %p1129 = pneg %p160
      %p1130 = pneg %p157
      %p1131 = pneg %p181
      %p1132 = pneg %p178
      %p1133 = pneg %p202
      %p1134 = pneg %p199
      %p1135 = pneg %p223
      %p1136 = pneg %p220
      %p1137 = pneg %p244
      %p1138 = pneg %p241
      %p1139 = pneg %p265
      %p1140 = pneg %p262
      %p1141 = pneg %p286
      %p1142 = pneg %p283
      %p1143 = pneg %p307
      %p1144 = pneg %p304
      %p1145 = pneg %p328
      %p1146 = pneg %p325
      %p1147 = pneg %p349
      %p1148 = pneg %p346
      %p1149 = pneg %p370
      %p1150 = pneg %p367
      %p1151 = pneg %p391
      %p1152 = pneg %p388
      %p1153 = pneg %p412
      %p1154 = pneg %p409
      %p1155 = pneg %p433
      %p1156 = pneg %p430
      %p1157 = pneg %p454
      %p1158 = pneg %p451
      %p1159 = pneg %p475
      %p1160 = pneg %p472
      %p1161 = pneg %p496
      %p1162 = pneg %p493
      %p1163 = pneg %p517
      %p1164 = pneg %p514
      %p1165 = pneg %p538
      %p1166 = pneg %p535
      %p1167 = pneg %p559
      %p1168 = pneg %p556
      %p1169 = pneg %p580
      %p1170 = pneg %p577
      %p1171 = pneg %p601
      %p1172 = pneg %p598
      %p1173 = pneg %p622
      %p1174 = pneg %p619
      %p1175 = pneg %p643
      %p1176 = pneg %p640
      %p1177 = pneg %p664
      %p1178 = pneg %p661
      %p1179 = pneg %p685
      %p1180 = pneg %p682
      %p1181 = pneg %p706
      %p1182 = pneg %p703
      %p1183 = pneg %p727
      %p1184 = pneg %p724
      %p1185 = pneg %p748
      %p1186 = pneg %p745
      %p1187 = pneg %p769
      %p1188 = pneg %p766
      %p1189 = pneg %p790
      %p1190 = pneg %p787
      %p1191 = pneg %p811
      %p1192 = pneg %p808
      %p1193 = pneg %p832
      %p1194 = pneg %p829
      %p1195 = pneg %p853
      %p1196 = pneg %p850
      %p1197 = pneg %p874
      %p1198 = pneg %p871
      %p1199 = pneg %p895
      %p1200 = pneg %p892
      %p1201 = pneg %p916
      %p1202 = pneg %p913
      %p1203 = pneg %p937
      %p1204 = pneg %p934
      %p1205 = pneg %p963
      %p1206 = pneg %p960
      %p1207 = scmp.lt.s32.totalorder %s92, 1
      %s1208 = scalar_select %p1207, %s92, 1
      %s1209 = smul.addr %s1208, 8
      %s1210 = scalar_lea.vmem %s81, %s1209
      %p1211 = scmp.lt.s32.totalorder %s92, 1
      %s1212 = scalar_select %p1211, %s92, 1
      %s1213 = smul.addr %s1212, 8
      %s1214 = scalar_lea.vmem %s1, %s1213
      %p1215 = scmp.lt.s32.totalorder %s92, 1
      %s1216 = scalar_select %p1215, %s92, 1
      %s1217 = smul.addr %s1216, 8
      %s1218 = scalar_lea.vmem %s3, %s1217
      %p1219 = scmp.lt.s32.totalorder %s92, 1
      %s1220 = scalar_select %p1219, %s92, 1
      %s1221 = smul.addr %s1220, 8
      %s1222 = scalar_lea.vmem %s81, %s1221
      %v1223 = vld [vmem:[%s1214] sm:$0xff]
      %v1224 = vld [vmem:[%s1218] sm:$0xff]
      %v1225 = vld [vmem:[%s23] sm:$0xff]
      %v1226 = vld [vmem:[%s19] sm:$0x1]
      %v1228 = vlaneseq
      %v1229 = vshrl.u32 %v1228, 7
      %v1230 = vsub.s32 0, %v1229
      %v1231 = vrot.slane %v1226, %v1230
      %vm1233 = vcmask 64512
      %v1235 = vsel %vm1233, %v1223, 0
      %1237 = vmatprep.subr.mxu0 0.0
      %1238 = vmatpush1.msra.mxu0 %v1225
      %1239 = vmatprep.subr.mxu0 0.0
      %1240 = vmatpush1.msra.mxu0 0.0
      %1241 = vmatprep.subr.mxu0 0.0
      %1242 = vmatpush1.msra.mxu0 0.0
      %1243 = vmatprep.subr.mxu0 0.0
      %1244 = vmatpush1.msra.mxu0 0.0
      %1245 = vmatprep.subr.mxu0 0.0
      %1246 = vmatpush1.msra.mxu0 0.0
      %1247 = vmatprep.subr.mxu0 0.0
      %1248 = vmatpush1.msra.mxu0 0.0
      %1249 = vmatprep.subr.mxu0 0.0
      %1250 = vmatpush1.msra.mxu0 0.0
      %1251 = vmatprep.subr.mxu0 0.0
      %1252 = vmatpush1.msra.mxu0 0.0
      %1253 = vmatprep.subr.mxu0 0.0
      %1254 = vmatpush1.msra.mxu0 0.0
      %1255 = vmatprep.subr.mxu0 0.0
      %1256 = vmatpush1.msra.mxu0 0.0
      %1257 = vmatprep.subr.mxu0 0.0
      %1258 = vmatpush1.msra.mxu0 0.0
      %1259 = vmatprep.subr.mxu0 0.0
      %1260 = vmatpush1.msra.mxu0 0.0
      %1261 = vmatprep.subr.mxu0 0.0
      %1262 = vmatpush1.msra.mxu0 0.0
      %1263 = vmatprep.subr.mxu0 0.0
      %1264 = vmatpush1.msra.mxu0 0.0
      %1265 = vmatprep.subr.mxu0 0.0
      %1266 = vmatpush1.msra.mxu0 0.0
      %1267 = vmatprep.subr.mxu0 0.0
      %1268 = vmatpush1.msra.mxu0 0.0
      %1269 = vmatprep.subr.mxu0 0.0
      %1270 = vmatpush1.msra.mxu0 0.0
      %1271 = vmatprep.subr.mxu0 0.0
      %1272 = vmatpush1.msra.mxu0 0.0
      %1273 = vmatprep.subr.mxu0 0.0
      %1274 = vmatpush1.msra.mxu0 0.0
      %1275 = vmatprep.subr.mxu0 0.0
      %1276 = vmatpush1.msra.mxu0 0.0
      %1277 = vmatprep.subr.mxu0 0.0
      %1278 = vmatpush1.msra.mxu0 0.0
      %1279 = vmatprep.subr.mxu0 0.0
      %1280 = vmatpush1.msra.mxu0 0.0
      %1281 = vmatprep.subr.mxu0 0.0
      %1282 = vmatpush1.msra.mxu0 0.0
      %1283 = vmatprep.subr.mxu0 0.0
      %1284 = vmatpush1.msra.mxu0 0.0
      %1285 = vmatprep.subr.mxu0 0.0
      %1286 = vmatpush1.msra.mxu0 0.0
      %1287 = vmatprep.subr.mxu0 0.0
      %1288 = vmatpush1.msra.mxu0 0.0
      %1289 = vmatprep.subr.mxu0 0.0
      %1290 = vmatpush1.msra.mxu0 0.0
      %1291 = vmatprep.subr.mxu0 0.0
      %1292 = vmatpush1.msra.mxu0 0.0
      %1293 = vmatprep.subr.mxu0 0.0
      %1294 = vmatpush1.msra.mxu0 0.0
      %1295 = vmatprep.subr.mxu0 0.0
      %1296 = vmatpush1.msra.mxu0 0.0
      %1297 = vmatprep.subr.mxu0 0.0
      %1298 = vmatpush1.msra.mxu0 0.0
      %1299 = vmatprep.subr.mxu0 0.0
      %1300 = vmatpush1.msra.mxu0 0.0
      %1301 = vmatprep.mubr.f32.mxu0 0.0
      %1302 = vmatmul.mubr.f32.gmra.mrb[0].mxu0 %v1235
      %v1303 = vpop.f32.mrb[0].mxu0
      %v1304 = vadd.f32 %v1231, %v1303
      %v1305 = vpop.f32.mrb[0].mxu0
      %1306 = vdwg.mxu0
      %v1307 = vld [vmem:[%s27] sm:$0xff]
      %1308 = vmatprep.subr.mxu0 0.0
      %1309 = vmatpush1.msra.mxu0 %v1307
      %1310 = vmatprep.subr.mxu0 0.0
      %1311 = vmatpush1.msra.mxu0 0.0
      %1312 = vmatprep.subr.mxu0 0.0
      %1313 = vmatpush1.msra.mxu0 0.0
      %1314 = vmatprep.subr.mxu0 0.0
      %1315 = vmatpush1.msra.mxu0 0.0
      %1316 = vmatprep.subr.mxu0 0.0
      %1317 = vmatpush1.msra.mxu0 0.0
      %1318 = vmatprep.subr.mxu0 0.0
      %1319 = vmatpush1.msra.mxu0 0.0
      %1320 = vmatprep.subr.mxu0 0.0
      %1321 = vmatpush1.msra.mxu0 0.0
      %1322 = vmatprep.subr.mxu0 0.0
      %1323 = vmatpush1.msra.mxu0 0.0
      %1324 = vmatprep.subr.mxu0 0.0
      %1325 = vmatpush1.msra.mxu0 0.0
      %1326 = vmatprep.subr.mxu0 0.0
      %1327 = vmatpush1.msra.mxu0 0.0
      %1328 = vmatprep.subr.mxu0 0.0
      %1329 = vmatpush1.msra.mxu0 0.0
      %1330 = vmatprep.subr.mxu0 0.0
      %1331 = vmatpush1.msra.mxu0 0.0
      %1332 = vmatprep.subr.mxu0 0.0
      %1333 = vmatpush1.msra.mxu0 0.0
      %1334 = vmatprep.subr.mxu0 0.0
      %1335 = vmatpush1.msra.mxu0 0.0
      %1336 = vmatprep.subr.mxu0 0.0
      %1337 = vmatpush1.msra.mxu0 0.0
      %1338 = vmatprep.subr.mxu0 0.0
      %1339 = vmatpush1.msra.mxu0 0.0
      %1340 = vmatprep.subr.mxu0 0.0
      %1341 = vmatpush1.msra.mxu0 0.0
      %1342 = vmatprep.subr.mxu0 0.0
      %1343 = vmatpush1.msra.mxu0 0.0
      %1344 = vmatprep.subr.mxu0 0.0
      %1345 = vmatpush1.msra.mxu0 0.0
      %1346 = vmatprep.subr.mxu0 0.0
      %1347 = vmatpush1.msra.mxu0 0.0
      %1348 = vmatprep.subr.mxu0 0.0
      %1349 = vmatpush1.msra.mxu0 0.0
      %1350 = vmatprep.subr.mxu0 0.0
      %1351 = vmatpush1.msra.mxu0 0.0
      %1352 = vmatprep.subr.mxu0 0.0
      %1353 = vmatpush1.msra.mxu0 0.0
      %1354 = vmatprep.subr.mxu0 0.0
      %1355 = vmatpush1.msra.mxu0 0.0
      %1356 = vmatprep.subr.mxu0 0.0
      %1357 = vmatpush1.msra.mxu0 0.0
      %1358 = vmatprep.subr.mxu0 0.0
      %1359 = vmatpush1.msra.mxu0 0.0
      %1360 = vmatprep.subr.mxu0 0.0
      %1361 = vmatpush1.msra.mxu0 0.0
      %1362 = vmatprep.subr.mxu0 0.0
      %1363 = vmatpush1.msra.mxu0 0.0
      %1364 = vmatprep.subr.mxu0 0.0
      %1365 = vmatpush1.msra.mxu0 0.0
      %1366 = vmatprep.subr.mxu0 0.0
      %1367 = vmatpush1.msra.mxu0 0.0
      %1368 = vmatprep.subr.mxu0 0.0
      %1369 = vmatpush1.msra.mxu0 0.0
      %1370 = vmatprep.subr.mxu0 0.0
      %1371 = vmatpush1.msra.mxu0 0.0
      %1372 = vmatprep.mubr.f32.mxu0 0.0
      %1373 = vmatmul.mubr.f32.gmra.mrb[0].mxu0 %v1235
      %v1374 = vpop.f32.mrb[0].mxu0
      %v1375 = vadd.f32 0.0, %v1374
      %v1376 = vpop.f32.mrb[0].mxu0
      %1377 = vdwg.mxu0
      %v1378 = vld [vmem:[%s25] sm:$0x1]
      %v1380 = vcombine.high %v1304, %v1304
      %v1382 = vunpack.c.l.s4 1966171168
      %v1383 = vunpack.c.0.s8 %v1382
      %v1384 = vlaneseq
      %v1385 = vshrl.u32 %v1384, 7
      %v1386 = vsub.s32 %v1383, %v1385
      %v1387 = vrot.slane %v1304, %v1386
      %v1389 = vunpack.c.l.s4 1966171168
      %v1390 = vunpack.c.0.s8 %v1389
      %v1391 = vlaneseq
      %v1392 = vshrl.u32 %v1391, 7
      %v1393 = vsub.s32 %v1390, %v1392
      %v1394 = vrot.slane %v1380, %v1393
      %v1395 = vcombine.high %v1387, %v1387
      %v1396 = vcombine.high %v1394, %v1394
      %v1398 = vunpack.c.l.s4 1966171168
      %v1399 = vunpack.c.0.s8 %v1398
      %v1400 = vlaneseq
      %v1401 = vshrl.u32 %v1400, 7
      %v1402 = vsub.s32 %v1399, %v1401
      %v1403 = vrot.slane %v1387, %v1402
      %v1405 = vunpack.c.l.s4 1966171168
      %v1406 = vunpack.c.0.s8 %v1405
      %v1407 = vlaneseq
      %v1408 = vshrl.u32 %v1407, 7
      %v1409 = vsub.s32 %v1406, %v1408
      %v1410 = vrot.slane %v1394, %v1409
      %v1412 = vunpack.c.l.s4 1966171168
      %v1413 = vunpack.c.0.s8 %v1412
      %v1414 = vlaneseq
      %v1415 = vshrl.u32 %v1414, 7
      %v1416 = vsub.s32 %v1413, %v1415
      %v1417 = vrot.slane %v1395, %v1416
      %v1419 = vunpack.c.l.s4 1966171168
      %v1420 = vunpack.c.0.s8 %v1419
      %v1421 = vlaneseq
      %v1422 = vshrl.u32 %v1421, 7
      %v1423 = vsub.s32 %v1420, %v1422
      %v1424 = vrot.slane %v1396, %v1423
      %v1425 = vcombine.high %v1403, %v1403
      %v1426 = vcombine.high %v1410, %v1410
      %v1427 = vcombine.high %v1417, %v1417
      %v1428 = vcombine.high %v1424, %v1424
      %v1429 = vlaneseq
      %v1430 = vshrl.u32 %v1429, 7
      %v1431 = vsub.s32 0, %v1430
      %v1432 = vrot.slane %v1403, %v1431
      %v1433 = vlaneseq
      %v1434 = vshrl.u32 %v1433, 7
      %v1435 = vsub.s32 0, %v1434
      %v1436 = vrot.slane %v1417, %v1435
      %v1437 = vlaneseq
      %v1438 = vshrl.u32 %v1437, 7
      %v1439 = vsub.s32 0, %v1438
      %v1440 = vrot.slane %v1425, %v1439
      %v1441 = vlaneseq
      %v1442 = vshrl.u32 %v1441, 7
      %v1443 = vsub.s32 0, %v1442
      %v1444 = vrot.slane %v1427, %v1443
      %v1445 = vlaneseq
      %v1446 = vshrl.u32 %v1445, 7
      %v1447 = vsub.s32 0, %v1446
      %v1448 = vrot.slane %v1410, %v1447
      %v1449 = vlaneseq
      %v1450 = vshrl.u32 %v1449, 7
      %v1451 = vsub.s32 0, %v1450
      %v1452 = vrot.slane %v1424, %v1451
      %v1453 = vlaneseq
      %v1454 = vshrl.u32 %v1453, 7
      %v1455 = vsub.s32 0, %v1454
      %v1456 = vrot.slane %v1426, %v1455
      %v1457 = vlaneseq
      %v1458 = vshrl.u32 %v1457, 7
      %v1459 = vsub.s32 0, %v1458
      %v1460 = vrot.slane %v1428, %v1459
      %v1469 = vadd.f32 %v1432, %v1375
      %v1470 = vadd.f32 %v1436, %v1375
      %v1471 = vadd.f32 %v1440, %v1375
      %v1472 = vadd.f32 %v1444, %v1375
      %v1473 = vadd.f32 %v1448, %v1375
      %v1474 = vadd.f32 %v1452, %v1375
      %v1475 = vadd.f32 %v1456, %v1375
      %v1476 = vadd.f32 %v1460, %v1375
      %v1477 = vlaneseq
      %v1478 = vshrl.u32 %v1477, 7
      %v1479 = vsub.s32 0, %v1478
      %v1480 = vrot.slane %v1224, %v1479
      %1482 = vbcast.lane.b32.xlu0 %v1480, 256
      %v1483 = vpop.permute.xlu0 %1482
      %v1484 = vlaneseq
      %v1485 = vshrl.u32 %v1484, 7
      %v1486 = vsub.s32 1, %v1485
      %v1487 = vrot.slane %v1224, %v1486
      %1489 = vbcast.lane.b32.xlu0 %v1487, 256
      %v1490 = vpop.permute.xlu0 %1489
      %v1491 = vlaneseq
      %v1492 = vshrl.u32 %v1491, 7
      %v1493 = vsub.s32 2, %v1492
      %v1494 = vrot.slane %v1224, %v1493
      %1496 = vbcast.lane.b32.xlu0 %v1494, 256
      %v1497 = vpop.permute.xlu0 %1496
      %v1498 = vlaneseq
      %v1499 = vshrl.u32 %v1498, 7
      %v1500 = vsub.s32 3, %v1499
      %v1501 = vrot.slane %v1224, %v1500
      %1503 = vbcast.lane.b32.xlu0 %v1501, 256
      %v1504 = vpop.permute.xlu0 %1503
      %v1505 = vlaneseq
      %v1506 = vshrl.u32 %v1505, 7
      %v1507 = vsub.s32 4, %v1506
      %v1508 = vrot.slane %v1224, %v1507
      %1510 = vbcast.lane.b32.xlu0 %v1508, 256
      %v1511 = vpop.permute.xlu0 %1510
      %v1512 = vlaneseq
      %v1513 = vshrl.u32 %v1512, 7
      %v1514 = vsub.s32 5, %v1513
      %v1515 = vrot.slane %v1224, %v1514
      %1517 = vbcast.lane.b32.xlu0 %v1515, 256
      %v1518 = vpop.permute.xlu0 %1517
      %v1519 = vlaneseq
      %v1520 = vshrl.u32 %v1519, 7
      %v1521 = vsub.s32 6, %v1520
      %v1522 = vrot.slane %v1224, %v1521
      %1524 = vbcast.lane.b32.xlu0 %v1522, 256
      %v1525 = vpop.permute.xlu0 %1524
      %v1526 = vlaneseq
      %v1527 = vshrl.u32 %v1526, 7
      %v1528 = vsub.s32 7, %v1527
      %v1529 = vrot.slane %v1224, %v1528
      %1531 = vbcast.lane.b32.xlu0 %v1529, 256
      %v1532 = vpop.permute.xlu0 %1531
      %v1534 = vlaneseq
      %v1535 = vshrl.u32 %v1534, 7
      %v1536 = vsub.s32 0, %v1535
      %v1537 = vrot.slane %v1378, %v1536
      %v1539 = vmul.f32 %v1483, %v1537
      %v1540 = vmul.f32 %v1490, %v1537
      %v1541 = vmul.f32 %v1497, %v1537
      %v1542 = vmul.f32 %v1504, %v1537
      %v1543 = vmul.f32 %v1511, %v1537
      %v1544 = vmul.f32 %v1518, %v1537
      %v1545 = vmul.f32 %v1525, %v1537
      %v1546 = vmul.f32 %v1532, %v1537
      %v1547 = vadd.f32 %v1469, %v1539
      %v1548 = vadd.f32 %v1470, %v1540
      %v1549 = vadd.f32 %v1471, %v1541
      %v1550 = vadd.f32 %v1472, %v1542
      %v1551 = vadd.f32 %v1473, %v1543
      %v1552 = vadd.f32 %v1474, %v1544
      %v1553 = vadd.f32 %v1475, %v1545
      %v1554 = vadd.f32 %v1476, %v1546
      %v1555 = vmax.f32 %v1547, 0.0
      %v1556 = vmax.f32 %v1548, 0.0
      %v1557 = vmax.f32 %v1549, 0.0
      %v1558 = vmax.f32 %v1550, 0.0
      %v1559 = vmax.f32 %v1551, 0.0
      %v1560 = vmax.f32 %v1552, 0.0
      %v1561 = vmax.f32 %v1553, 0.0
      %v1562 = vmax.f32 %v1554, 0.0
      %v1563 = vld [vmem:[%s29] sm:$0xff]
      %v1564 = vld [vmem:[%s29 + $0x8] sm:$0xf]
      %v1565 = vld [vmem:[%s21] sm:$0x1]
      %v1567 = vlaneseq
      %v1568 = vshrl.u32 %v1567, 7
      %v1569 = vsub.s32 0, %v1568
      %v1570 = vrot.slane %v1565, %v1569
      %vm1572 = vcmask 97280
      %v1574 = vsel %vm1572, %v1555, 0
      %v1577 = vsel %vm1572, %v1556, 0
      %v1580 = vsel %vm1572, %v1557, 0
      %v1583 = vsel %vm1572, %v1558, 0
      %v1586 = vsel %vm1572, %v1559, 0
      %v1589 = vsel %vm1572, %v1560, 0
      %v1592 = vsel %vm1572, %v1561, 0
      %v1595 = vsel %vm1572, %v1562, 0
      %vm1597 = vcmask 1043456
      %v1599 = vsel %vm1597, %v1564, 0
      %1601 = vmatprep.subr.mxu0 0.0
      %1602 = vmatpush1.msra.mxu0 %v1563
      %1603 = vmatprep.subr.mxu0 0.0
      %1604 = vmatpush1.msra.mxu0 %v1599
      %1605 = vmatprep.subr.mxu0 0.0
      %1606 = vmatpush1.msra.mxu0 0.0
      %1607 = vmatprep.subr.mxu0 0.0
      %1608 = vmatpush1.msra.mxu0 0.0
      %1609 = vmatprep.subr.mxu0 0.0
      %1610 = vmatpush1.msra.mxu0 0.0
      %1611 = vmatprep.subr.mxu0 0.0
      %1612 = vmatpush1.msra.mxu0 0.0
      %1613 = vmatprep.subr.mxu0 0.0
      %1614 = vmatpush1.msra.mxu0 0.0
      %1615 = vmatprep.subr.mxu0 0.0
      %1616 = vmatpush1.msra.mxu0 0.0
      %1617 = vmatprep.subr.mxu0 0.0
      %1618 = vmatpush1.msra.mxu0 0.0
      %1619 = vmatprep.subr.mxu0 0.0
      %1620 = vmatpush1.msra.mxu0 0.0
      %1621 = vmatprep.subr.mxu0 0.0
      %1622 = vmatpush1.msra.mxu0 0.0
      %1623 = vmatprep.subr.mxu0 0.0
      %1624 = vmatpush1.msra.mxu0 0.0
      %1625 = vmatprep.subr.mxu0 0.0
      %1626 = vmatpush1.msra.mxu0 0.0
      %1627 = vmatprep.subr.mxu0 0.0
      %1628 = vmatpush1.msra.mxu0 0.0
      %1629 = vmatprep.subr.mxu0 0.0
      %1630 = vmatpush1.msra.mxu0 0.0
      %1631 = vmatprep.subr.mxu0 0.0
      %1632 = vmatpush1.msra.mxu0 0.0
      %1633 = vmatprep.subr.mxu0 0.0
      %1634 = vmatpush1.msra.mxu0 0.0
      %1635 = vmatprep.subr.mxu0 0.0
      %1636 = vmatpush1.msra.mxu0 0.0
      %1637 = vmatprep.subr.mxu0 0.0
      %1638 = vmatpush1.msra.mxu0 0.0
      %1639 = vmatprep.subr.mxu0 0.0
      %1640 = vmatpush1.msra.mxu0 0.0
      %1641 = vmatprep.subr.mxu0 0.0
      %1642 = vmatpush1.msra.mxu0 0.0
      %1643 = vmatprep.subr.mxu0 0.0
      %1644 = vmatpush1.msra.mxu0 0.0
      %1645 = vmatprep.subr.mxu0 0.0
      %1646 = vmatpush1.msra.mxu0 0.0
      %1647 = vmatprep.subr.mxu0 0.0
      %1648 = vmatpush1.msra.mxu0 0.0
      %1649 = vmatprep.subr.mxu0 0.0
      %1650 = vmatpush1.msra.mxu0 0.0
      %1651 = vmatprep.subr.mxu0 0.0
      %1652 = vmatpush1.msra.mxu0 0.0
      %1653 = vmatprep.subr.mxu0 0.0
      %1654 = vmatpush1.msra.mxu0 0.0
      %1655 = vmatprep.subr.mxu0 0.0
      %1656 = vmatpush1.msra.mxu0 0.0
      %1657 = vmatprep.subr.mxu0 0.0
      %1658 = vmatpush1.msra.mxu0 0.0
      %1659 = vmatprep.subr.mxu0 0.0
      %1660 = vmatpush1.msra.mxu0 0.0
      %1661 = vmatprep.subr.mxu0 0.0
      %1662 = vmatpush1.msra.mxu0 0.0
      %1663 = vmatprep.subr.mxu0 0.0
      %1664 = vmatpush1.msra.mxu0 0.0
      %1665 = vmatprep.mubr.f32.mxu0 0.0
      %1666 = vmatmul.mubr.f32.gmra.mrb[0].mxu0 %v1574
      %v1667 = vpop.f32.mrb[0].mxu0
      %v1668 = vadd.f32 %v1570, %v1667
      %v1669 = vpop.f32.mrb[0].mxu0
      %1670 = vmatprep.mubr.f32.mxu0 0.0
      %1671 = vmatmul.mubr.f32.gmra.mrb[0].mxu0 %v1577
      %v1672 = vpop.f32.mrb[0].mxu0
      %v1673 = vadd.f32 %v1570, %v1672
      %v1674 = vpop.f32.mrb[0].mxu0
      %1675 = vmatprep.mubr.f32.mxu0 0.0
      %1676 = vmatmul.mubr.f32.gmra.mrb[0].mxu0 %v1580
      %v1677 = vpop.f32.mrb[0].mxu0
      %v1678 = vadd.f32 %v1570, %v1677
      %v1679 = vpop.f32.mrb[0].mxu0
      %1680 = vmatprep.mubr.f32.mxu0 0.0
      %1681 = vmatmul.mubr.f32.gmra.mrb[0].mxu0 %v1583
      %v1682 = vpop.f32.mrb[0].mxu0
      %v1683 = vadd.f32 %v1570, %v1682
      %v1684 = vpop.f32.mrb[0].mxu0
      %1685 = vmatprep.mubr.f32.mxu0 0.0
      %1686 = vmatmul.mubr.f32.gmra.mrb[0].mxu0 %v1586
      %v1687 = vpop.f32.mrb[0].mxu0
      %v1688 = vadd.f32 %v1570, %v1687
      %v1689 = vpop.f32.mrb[0].mxu0
      %1690 = vmatprep.mubr.f32.mxu0 0.0
      %1691 = vmatmul.mubr.f32.gmra.mrb[0].mxu0 %v1589
      %v1692 = vpop.f32.mrb[0].mxu0
      %v1693 = vadd.f32 %v1570, %v1692
      %v1694 = vpop.f32.mrb[0].mxu0
      %1695 = vmatprep.mubr.f32.mxu0 0.0
      %1696 = vmatmul.mubr.f32.gmra.mrb[0].mxu0 %v1592
      %v1697 = vpop.f32.mrb[0].mxu0
      %v1698 = vadd.f32 %v1570, %v1697
      %v1699 = vpop.f32.mrb[0].mxu0
      %1700 = vmatprep.mubr.f32.mxu0 0.0
      %1701 = vmatmul.mubr.f32.gmra.mrb[0].mxu0 %v1595
      %v1702 = vpop.f32.mrb[0].mxu0
      %v1703 = vadd.f32 %v1570, %v1702
      %v1704 = vpop.f32.mrb[0].mxu0
      %1705 = vdwg.mxu0
      %v1706 = vtanh.pop %v1668
      %v1707 = vtanh.pop %v1673
      %v1708 = vtanh.pop %v1678
      %v1709 = vtanh.pop %v1683
      %v1710 = vtanh.pop %v1688
      %v1711 = vtanh.pop %v1693
      %v1712 = vtanh.pop %v1698
      %v1713 = vtanh.pop %v1703
      %v1714 = vsel %vm1233, %v1706, 0.0
      %v1715 = vrot.slane %v1714, 4
      %v1716 = vadd.f32 %v1714, %v1715
      %v1717 = vrot.slane %v1716, 2
      %v1718 = vadd.f32 %v1716, %v1717
      %v1719 = vrot.slane %v1718, 1
      %v1720 = vadd.f32 %v1718, %v1719
      %v1721 = vsel %vm1233, %v1707, 0.0
      %v1722 = vrot.slane %v1721, 4
      %v1723 = vadd.f32 %v1721, %v1722
      %v1724 = vrot.slane %v1723, 2
      %v1725 = vadd.f32 %v1723, %v1724
      %v1726 = vrot.slane %v1725, 1
      %v1727 = vadd.f32 %v1725, %v1726
      %v1728 = vsel %vm1233, %v1708, 0.0
      %v1729 = vrot.slane %v1728, 4
      %v1730 = vadd.f32 %v1728, %v1729
      %v1731 = vrot.slane %v1730, 2
      %v1732 = vadd.f32 %v1730, %v1731
      %v1733 = vrot.slane %v1732, 1
      %v1734 = vadd.f32 %v1732, %v1733
      %v1735 = vsel %vm1233, %v1709, 0.0
      %v1736 = vrot.slane %v1735, 4
      %v1737 = vadd.f32 %v1735, %v1736
      %v1738 = vrot.slane %v1737, 2
      %v1739 = vadd.f32 %v1737, %v1738
      %v1740 = vrot.slane %v1739, 1
      %v1741 = vadd.f32 %v1739, %v1740
      %v1742 = vsel %vm1233, %v1710, 0.0
      %v1743 = vrot.slane %v1742, 4
      %v1744 = vadd.f32 %v1742, %v1743
      %v1745 = vrot.slane %v1744, 2
      %v1746 = vadd.f32 %v1744, %v1745
      %v1747 = vrot.slane %v1746, 1
      %v1748 = vadd.f32 %v1746, %v1747
      %v1749 = vsel %vm1233, %v1711, 0.0
      %v1750 = vrot.slane %v1749, 4
      %v1751 = vadd.f32 %v1749, %v1750
      %v1752 = vrot.slane %v1751, 2
      %v1753 = vadd.f32 %v1751, %v1752
      %v1754 = vrot.slane %v1753, 1
      %v1755 = vadd.f32 %v1753, %v1754
      %v1756 = vsel %vm1233, %v1712, 0.0
      %v1757 = vrot.slane %v1756, 4
      %v1758 = vadd.f32 %v1756, %v1757
      %v1759 = vrot.slane %v1758, 2
      %v1760 = vadd.f32 %v1758, %v1759
      %v1761 = vrot.slane %v1760, 1
      %v1762 = vadd.f32 %v1760, %v1761
      %v1763 = vsel %vm1233, %v1713, 0.0
      %v1764 = vrot.slane %v1763, 4
      %v1765 = vadd.f32 %v1763, %v1764
      %v1766 = vrot.slane %v1765, 2
      %v1767 = vadd.f32 %v1765, %v1766
      %v1768 = vrot.slane %v1767, 1
      %v1769 = vadd.f32 %v1767, %v1768
      %v1770 = vld [vmem:[%s39] sm:$0xff]
      %v1771 = vld [vmem:[%s31] sm:$0x1]
      %v1773 = vlaneseq
      %v1774 = vshrl.u32 %v1773, 7
      %v1775 = vsub.s32 0, %v1774
      %v1776 = vrot.slane %v1771, %v1775
      %1778 = vmatprep.subr.mxu0 0.0
      %1779 = vmatpush1.msra.mxu0 %v1770
      %1780 = vmatprep.subr.mxu0 0.0
      %1781 = vmatpush1.msra.mxu0 0.0
      %1782 = vmatprep.subr.mxu0 0.0
      %1783 = vmatpush1.msra.mxu0 0.0
      %1784 = vmatprep.subr.mxu0 0.0
      %1785 = vmatpush1.msra.mxu0 0.0
      %1786 = vmatprep.subr.mxu0 0.0
      %1787 = vmatpush1.msra.mxu0 0.0
      %1788 = vmatprep.subr.mxu0 0.0
      %1789 = vmatpush1.msra.mxu0 0.0
      %1790 = vmatprep.subr.mxu0 0.0
      %1791 = vmatpush1.msra.mxu0 0.0
      %1792 = vmatprep.subr.mxu0 0.0
      %1793 = vmatpush1.msra.mxu0 0.0
      %1794 = vmatprep.subr.mxu0 0.0
      %1795 = vmatpush1.msra.mxu0 0.0
      %1796 = vmatprep.subr.mxu0 0.0
      %1797 = vmatpush1.msra.mxu0 0.0
      %1798 = vmatprep.subr.mxu0 0.0
      %1799 = vmatpush1.msra.mxu0 0.0
      %1800 = vmatprep.subr.mxu0 0.0
      %1801 = vmatpush1.msra.mxu0 0.0
      %1802 = vmatprep.subr.mxu0 0.0
      %1803 = vmatpush1.msra.mxu0 0.0
      %1804 = vmatprep.subr.mxu0 0.0
      %1805 = vmatpush1.msra.mxu0 0.0
      %1806 = vmatprep.subr.mxu0 0.0
      %1807 = vmatpush1.msra.mxu0 0.0
      %1808 = vmatprep.subr.mxu0 0.0
      %1809 = vmatpush1.msra.mxu0 0.0
      %1810 = vmatprep.subr.mxu0 0.0
      %1811 = vmatpush1.msra.mxu0 0.0
      %1812 = vmatprep.subr.mxu0 0.0
      %1813 = vmatpush1.msra.mxu0 0.0
      %1814 = vmatprep.subr.mxu0 0.0
      %1815 = vmatpush1.msra.mxu0 0.0
      %1816 = vmatprep.subr.mxu0 0.0
      %1817 = vmatpush1.msra.mxu0 0.0
      %1818 = vmatprep.subr.mxu0 0.0
      %1819 = vmatpush1.msra.mxu0 0.0
      %1820 = vmatprep.subr.mxu0 0.0
      %1821 = vmatpush1.msra.mxu0 0.0
      %1822 = vmatprep.subr.mxu0 0.0
      %1823 = vmatpush1.msra.mxu0 0.0
      %1824 = vmatprep.subr.mxu0 0.0
      %1825 = vmatpush1.msra.mxu0 0.0
      %1826 = vmatprep.subr.mxu0 0.0
      %1827 = vmatpush1.msra.mxu0 0.0
      %1828 = vmatprep.subr.mxu0 0.0
      %1829 = vmatpush1.msra.mxu0 0.0
      %1830 = vmatprep.subr.mxu0 0.0
      %1831 = vmatpush1.msra.mxu0 0.0
      %1832 = vmatprep.subr.mxu0 0.0
      %1833 = vmatpush1.msra.mxu0 0.0
      %1834 = vmatprep.subr.mxu0 0.0
      %1835 = vmatpush1.msra.mxu0 0.0
      %1836 = vmatprep.subr.mxu0 0.0
      %1837 = vmatpush1.msra.mxu0 0.0
      %1838 = vmatprep.subr.mxu0 0.0
      %1839 = vmatpush1.msra.mxu0 0.0
      %1840 = vmatprep.subr.mxu0 0.0
      %1841 = vmatpush1.msra.mxu0 0.0
      %1842 = vmatprep.mubr.f32.mxu0 0.0
      %1843 = vmatmul.mubr.f32.gmra.mrb[0].mxu0 %v1235
      %v1844 = vpop.f32.mrb[0].mxu0
      %v1845 = vadd.f32 %v1776, %v1844
      %v1846 = vpop.f32.mrb[0].mxu0
      %1847 = vdwg.mxu0
      %v1848 = vmax.f32 %v1845, 0.0
      %v1849 = vld [vmem:[%s41] sm:$0x3f]
      %v1850 = vld [vmem:[%s33] sm:$0x1]
      %v1852 = vlaneseq
      %v1853 = vshrl.u32 %v1852, 7
      %v1854 = vsub.s32 0, %v1853
      %v1855 = vrot.slane %v1850, %v1854
      %vm1857 = vcmask 48128
      %v1859 = vsel %vm1857, %v1848, 0
      %vm1861 = vcmask 1045504
      %v1863 = vsel %vm1861, %v1849, 0
      %1865 = vmatprep.subr.mxu0 0.0
      %1866 = vmatpush1.msra.mxu0 %v1863
      %1867 = vmatprep.subr.mxu0 0.0
      %1868 = vmatpush1.msra.mxu0 0.0
      %1869 = vmatprep.subr.mxu0 0.0
      %1870 = vmatpush1.msra.mxu0 0.0
      %1871 = vmatprep.subr.mxu0 0.0
      %1872 = vmatpush1.msra.mxu0 0.0
      %1873 = vmatprep.subr.mxu0 0.0
      %1874 = vmatpush1.msra.mxu0 0.0
      %1875 = vmatprep.subr.mxu0 0.0
      %1876 = vmatpush1.msra.mxu0 0.0
      %1877 = vmatprep.subr.mxu0 0.0
      %1878 = vmatpush1.msra.mxu0 0.0
      %1879 = vmatprep.subr.mxu0 0.0
      %1880 = vmatpush1.msra.mxu0 0.0
      %1881 = vmatprep.subr.mxu0 0.0
      %1882 = vmatpush1.msra.mxu0 0.0
      %1883 = vmatprep.subr.mxu0 0.0
      %1884 = vmatpush1.msra.mxu0 0.0
      %1885 = vmatprep.subr.mxu0 0.0
      %1886 = vmatpush1.msra.mxu0 0.0
      %1887 = vmatprep.subr.mxu0 0.0
      %1888 = vmatpush1.msra.mxu0 0.0
      %1889 = vmatprep.subr.mxu0 0.0
      %1890 = vmatpush1.msra.mxu0 0.0
      %1891 = vmatprep.subr.mxu0 0.0
      %1892 = vmatpush1.msra.mxu0 0.0
      %1893 = vmatprep.subr.mxu0 0.0
      %1894 = vmatpush1.msra.mxu0 0.0
      %1895 = vmatprep.subr.mxu0 0.0
      %1896 = vmatpush1.msra.mxu0 0.0
      %1897 = vmatprep.subr.mxu0 0.0
      %1898 = vmatpush1.msra.mxu0 0.0
      %1899 = vmatprep.subr.mxu0 0.0
      %1900 = vmatpush1.msra.mxu0 0.0
      %1901 = vmatprep.subr.mxu0 0.0
      %1902 = vmatpush1.msra.mxu0 0.0
      %1903 = vmatprep.subr.mxu0 0.0
      %1904 = vmatpush1.msra.mxu0 0.0
      %1905 = vmatprep.subr.mxu0 0.0
      %1906 = vmatpush1.msra.mxu0 0.0
      %1907 = vmatprep.subr.mxu0 0.0
      %1908 = vmatpush1.msra.mxu0 0.0
      %1909 = vmatprep.subr.mxu0 0.0
      %1910 = vmatpush1.msra.mxu0 0.0
      %1911 = vmatprep.subr.mxu0 0.0
      %1912 = vmatpush1.msra.mxu0 0.0
      %1913 = vmatprep.subr.mxu0 0.0
      %1914 = vmatpush1.msra.mxu0 0.0
      %1915 = vmatprep.subr.mxu0 0.0
      %1916 = vmatpush1.msra.mxu0 0.0
      %1917 = vmatprep.subr.mxu0 0.0
      %1918 = vmatpush1.msra.mxu0 0.0
      %1919 = vmatprep.subr.mxu0 0.0
      %1920 = vmatpush1.msra.mxu0 0.0
      %1921 = vmatprep.subr.mxu0 0.0
      %1922 = vmatpush1.msra.mxu0 0.0
      %1923 = vmatprep.subr.mxu0 0.0
      %1924 = vmatpush1.msra.mxu0 0.0
      %1925 = vmatprep.subr.mxu0 0.0
      %1926 = vmatpush1.msra.mxu0 0.0
      %1927 = vmatprep.subr.mxu0 0.0
      %1928 = vmatpush1.msra.mxu0 0.0
      %1929 = vmatprep.mubr.f32.mxu0 0.0
      %1930 = vmatmul.mubr.f32.gmra.mrb[0].mxu0 %v1859
      %v1931 = vpop.f32.mrb[0].mxu0
      %v1932 = vadd.f32 %v1855, %v1931
      %v1933 = vpop.f32.mrb[0].mxu0
      %1934 = vdwg.mxu0
      %v1935 = vtanh.pop %v1932
      %v1936 = vld [vmem:[%s43] sm:$0xff]
      %v1937 = vld [vmem:[%s35] sm:$0x1]
      %v1939 = vlaneseq
      %v1940 = vshrl.u32 %v1939, 7
      %v1941 = vsub.s32 0, %v1940
      %v1942 = vrot.slane %v1937, %v1941
      %vm1952 = vcmask 1041409
      %v1953 = vsel %vm1952, %v1727, %v1720
      %vm1954 = vcmask 1042434
      %v1955 = vsel %vm1954, %v1734, %v1953
      %vm1956 = vcmask 1043459
      %v1957 = vsel %vm1956, %v1741, %v1955
      %vm1958 = vcmask 1044484
      %v1959 = vsel %vm1958, %v1748, %v1957
      %vm1960 = vcmask 1045509
      %v1961 = vsel %vm1960, %v1755, %v1959
      %vm1962 = vcmask 1046534
      %v1963 = vsel %vm1962, %v1762, %v1961
      %vm1964 = vcmask 1047559
      %v1965 = vsel %vm1964, %v1769, %v1963
      %v1966 = vsel %vm1233, %v1965, 0
      %1968 = vmatprep.subr.mxu0 0.0
      %1969 = vmatpush1.msra.mxu0 %v1936
      %1970 = vmatprep.subr.mxu0 0.0
      %1971 = vmatpush1.msra.mxu0 0.0
      %1972 = vmatprep.subr.mxu0 0.0
      %1973 = vmatpush1.msra.mxu0 0.0
      %1974 = vmatprep.subr.mxu0 0.0
      %1975 = vmatpush1.msra.mxu0 0.0
      %1976 = vmatprep.subr.mxu0 0.0
      %1977 = vmatpush1.msra.mxu0 0.0
      %1978 = vmatprep.subr.mxu0 0.0
      %1979 = vmatpush1.msra.mxu0 0.0
      %1980 = vmatprep.subr.mxu0 0.0
      %1981 = vmatpush1.msra.mxu0 0.0
      %1982 = vmatprep.subr.mxu0 0.0
      %1983 = vmatpush1.msra.mxu0 0.0
      %1984 = vmatprep.subr.mxu0 0.0
      %1985 = vmatpush1.msra.mxu0 0.0
      %1986 = vmatprep.subr.mxu0 0.0
      %1987 = vmatpush1.msra.mxu0 0.0
      %1988 = vmatprep.subr.mxu0 0.0
      %1989 = vmatpush1.msra.mxu0 0.0
      %1990 = vmatprep.subr.mxu0 0.0
      %1991 = vmatpush1.msra.mxu0 0.0
      %1992 = vmatprep.subr.mxu0 0.0
      %1993 = vmatpush1.msra.mxu0 0.0
      %1994 = vmatprep.subr.mxu0 0.0
      %1995 = vmatpush1.msra.mxu0 0.0
      %1996 = vmatprep.subr.mxu0 0.0
      %1997 = vmatpush1.msra.mxu0 0.0
      %1998 = vmatprep.subr.mxu0 0.0
      %1999 = vmatpush1.msra.mxu0 0.0
      %2000 = vmatprep.subr.mxu0 0.0
      %2001 = vmatpush1.msra.mxu0 0.0
      %2002 = vmatprep.subr.mxu0 0.0
      %2003 = vmatpush1.msra.mxu0 0.0
      %2004 = vmatprep.subr.mxu0 0.0
      %2005 = vmatpush1.msra.mxu0 0.0
      %2006 = vmatprep.subr.mxu0 0.0
      %2007 = vmatpush1.msra.mxu0 0.0
      %2008 = vmatprep.subr.mxu0 0.0
      %2009 = vmatpush1.msra.mxu0 0.0
      %2010 = vmatprep.subr.mxu0 0.0
      %2011 = vmatpush1.msra.mxu0 0.0
      %2012 = vmatprep.subr.mxu0 0.0
      %2013 = vmatpush1.msra.mxu0 0.0
      %2014 = vmatprep.subr.mxu0 0.0
      %2015 = vmatpush1.msra.mxu0 0.0
      %2016 = vmatprep.subr.mxu0 0.0
      %2017 = vmatpush1.msra.mxu0 0.0
      %2018 = vmatprep.subr.mxu0 0.0
      %2019 = vmatpush1.msra.mxu0 0.0
      %2020 = vmatprep.subr.mxu0 0.0
      %2021 = vmatpush1.msra.mxu0 0.0
      %2022 = vmatprep.subr.mxu0 0.0
      %2023 = vmatpush1.msra.mxu0 0.0
      %2024 = vmatprep.subr.mxu0 0.0
      %2025 = vmatpush1.msra.mxu0 0.0
      %2026 = vmatprep.subr.mxu0 0.0
      %2027 = vmatpush1.msra.mxu0 0.0
      %2028 = vmatprep.subr.mxu0 0.0
      %2029 = vmatpush1.msra.mxu0 0.0
      %2030 = vmatprep.subr.mxu0 0.0
      %2031 = vmatpush1.msra.mxu0 0.0
      %2032 = vmatprep.mubr.f32.mxu0 0.0
      %2033 = vmatmul.mubr.f32.gmra.mrb[0].mxu0 %v1966
      %v2034 = vpop.f32.mrb[0].mxu0
      %v2035 = vadd.f32 %v1942, %v2034
      %v2036 = vpop.f32.mrb[0].mxu0
      %2037 = vdwg.mxu0
      %v2038 = vmax.f32 %v2035, 0.0
      %v2039 = vld [vmem:[%s45] sm:$0xf]
      %v2040 = vld [vmem:[%s37] sm:$0x1]
      %v2042 = vlaneseq
      %v2043 = vshrl.u32 %v2042, 7
      %v2044 = vsub.s32 0, %v2043
      %v2045 = vrot.slane %v2040, %v2044
      %vm2047 = vcmask 31744
      %v2049 = vsel %vm2047, %v2038, 0
      %v2052 = vsel %vm1597, %v2039, 0
      %2054 = vmatprep.subr.mxu0 0.0
      %2055 = vmatpush1.msra.mxu0 %v2052
      %2056 = vmatprep.subr.mxu0 0.0
      %2057 = vmatpush1.msra.mxu0 0.0
      %2058 = vmatprep.subr.mxu0 0.0
      %2059 = vmatpush1.msra.mxu0 0.0
      %2060 = vmatprep.subr.mxu0 0.0
      %2061 = vmatpush1.msra.mxu0 0.0
      %2062 = vmatprep.subr.mxu0 0.0
      %2063 = vmatpush1.msra.mxu0 0.0
      %2064 = vmatprep.subr.mxu0 0.0
      %2065 = vmatpush1.msra.mxu0 0.0
      %2066 = vmatprep.subr.mxu0 0.0
      %2067 = vmatpush1.msra.mxu0 0.0
      %2068 = vmatprep.subr.mxu0 0.0
      %2069 = vmatpush1.msra.mxu0 0.0
      %2070 = vmatprep.subr.mxu0 0.0
      %2071 = vmatpush1.msra.mxu0 0.0
      %2072 = vmatprep.subr.mxu0 0.0
      %2073 = vmatpush1.msra.mxu0 0.0
      %2074 = vmatprep.subr.mxu0 0.0
      %2075 = vmatpush1.msra.mxu0 0.0
      %2076 = vmatprep.subr.mxu0 0.0
      %2077 = vmatpush1.msra.mxu0 0.0
      %2078 = vmatprep.subr.mxu0 0.0
      %2079 = vmatpush1.msra.mxu0 0.0
      %2080 = vmatprep.subr.mxu0 0.0
      %2081 = vmatpush1.msra.mxu0 0.0
      %2082 = vmatprep.subr.mxu0 0.0
      %2083 = vmatpush1.msra.mxu0 0.0
      %2084 = vmatprep.subr.mxu0 0.0
      %2085 = vmatpush1.msra.mxu0 0.0
      %2086 = vmatprep.subr.mxu0 0.0
      %2087 = vmatpush1.msra.mxu0 0.0
      %2088 = vmatprep.subr.mxu0 0.0
      %2089 = vmatpush1.msra.mxu0 0.0
      %2090 = vmatprep.subr.mxu0 0.0
      %2091 = vmatpush1.msra.mxu0 0.0
      %2092 = vmatprep.subr.mxu0 0.0
      %2093 = vmatpush1.msra.mxu0 0.0
      %2094 = vmatprep.subr.mxu0 0.0
      %2095 = vmatpush1.msra.mxu0 0.0
      %2096 = vmatprep.subr.mxu0 0.0
      %2097 = vmatpush1.msra.mxu0 0.0
      %2098 = vmatprep.subr.mxu0 0.0
      %2099 = vmatpush1.msra.mxu0 0.0
      %2100 = vmatprep.subr.mxu0 0.0
      %2101 = vmatpush1.msra.mxu0 0.0
      %2102 = vmatprep.subr.mxu0 0.0
      %2103 = vmatpush1.msra.mxu0 0.0
      %2104 = vmatprep.subr.mxu0 0.0
      %2105 = vmatpush1.msra.mxu0 0.0
      %2106 = vmatprep.subr.mxu0 0.0
      %2107 = vmatpush1.msra.mxu0 0.0
      %2108 = vmatprep.subr.mxu0 0.0
      %2109 = vmatpush1.msra.mxu0 0.0
      %2110 = vmatprep.subr.mxu0 0.0
      %2111 = vmatpush1.msra.mxu0 0.0
      %2112 = vmatprep.subr.mxu0 0.0
      %2113 = vmatpush1.msra.mxu0 0.0
      %2114 = vmatprep.subr.mxu0 0.0
      %2115 = vmatpush1.msra.mxu0 0.0
      %2116 = vmatprep.subr.mxu0 0.0
      %2117 = vmatpush1.msra.mxu0 0.0
      %2118 = vmatprep.mubr.f32.mxu0 0.0
      %2119 = vmatmul.mubr.f32.gmra.mrb[0].mxu0 %v2049
      %v2120 = vpop.f32.mrb[0].mxu0
      %v2121 = vadd.f32 %v2045, %v2120
      %v2122 = vpop.f32.mrb[0].mxu0
      %2123 = vdwg.mxu0
      %v2124 = vtanh.pop %v2121
      %2126 = vrot.lane.b32.xlu0 %v2124, 4
      %v2127 = vpop.permute.xlu0 %2126
      %v2129 = vsel %vm2047, %v1935, %v2127
      %v2130 = vmul.f32 %v2129, %v2129
      %v2131 = vsel %vm1233, %v2130, 0.0
      %2132 = vadd.xlane.f32.xlu0 %v2131
      %v2133 = vpop.xlane.xlu0 %2132
      %v2134 = vadd.f32 %v2133, 1e-12
      %v2135 = vrsqrt.pop %v2134
      %v2136 = vmul.f32 %v2129, %v2135
      %v2137 = vld [vmem:[%s53] sm:$0xff]
      %v2138 = vld [vmem:[%s47] sm:$0x1]
      %v2140 = vlaneseq
      %v2141 = vshrl.u32 %v2140, 7
      %v2142 = vsub.s32 0, %v2141
      %v2143 = vrot.slane %v2138, %v2142
      %2145 = vmatprep.subr.mxu0 0.0
      %2146 = vmatpush1.msra.mxu0 %v2137
      %2147 = vmatprep.subr.mxu0 0.0
      %2148 = vmatpush1.msra.mxu0 0.0
      %2149 = vmatprep.subr.mxu0 0.0
      %2150 = vmatpush1.msra.mxu0 0.0
      %2151 = vmatprep.subr.mxu0 0.0
      %2152 = vmatpush1.msra.mxu0 0.0
      %2153 = vmatprep.subr.mxu0 0.0
      %2154 = vmatpush1.msra.mxu0 0.0
      %2155 = vmatprep.subr.mxu0 0.0
      %2156 = vmatpush1.msra.mxu0 0.0
      %2157 = vmatprep.subr.mxu0 0.0
      %2158 = vmatpush1.msra.mxu0 0.0
      %2159 = vmatprep.subr.mxu0 0.0
      %2160 = vmatpush1.msra.mxu0 0.0
      %2161 = vmatprep.subr.mxu0 0.0
      %2162 = vmatpush1.msra.mxu0 0.0
      %2163 = vmatprep.subr.mxu0 0.0
      %2164 = vmatpush1.msra.mxu0 0.0
      %2165 = vmatprep.subr.mxu0 0.0
      %2166 = vmatpush1.msra.mxu0 0.0
      %2167 = vmatprep.subr.mxu0 0.0
      %2168 = vmatpush1.msra.mxu0 0.0
      %2169 = vmatprep.subr.mxu0 0.0
      %2170 = vmatpush1.msra.mxu0 0.0
      %2171 = vmatprep.subr.mxu0 0.0
      %2172 = vmatpush1.msra.mxu0 0.0
      %2173 = vmatprep.subr.mxu0 0.0
      %2174 = vmatpush1.msra.mxu0 0.0
      %2175 = vmatprep.subr.mxu0 0.0
      %2176 = vmatpush1.msra.mxu0 0.0
      %2177 = vmatprep.subr.mxu0 0.0
      %2178 = vmatpush1.msra.mxu0 0.0
      %2179 = vmatprep.subr.mxu0 0.0
      %2180 = vmatpush1.msra.mxu0 0.0
      %2181 = vmatprep.subr.mxu0 0.0
      %2182 = vmatpush1.msra.mxu0 0.0
      %2183 = vmatprep.subr.mxu0 0.0
      %2184 = vmatpush1.msra.mxu0 0.0
      %2185 = vmatprep.subr.mxu0 0.0
      %2186 = vmatpush1.msra.mxu0 0.0
      %2187 = vmatprep.subr.mxu0 0.0
      %2188 = vmatpush1.msra.mxu0 0.0
      %2189 = vmatprep.subr.mxu0 0.0
      %2190 = vmatpush1.msra.mxu0 0.0
      %2191 = vmatprep.subr.mxu0 0.0
      %2192 = vmatpush1.msra.mxu0 0.0
      %2193 = vmatprep.subr.mxu0 0.0
      %2194 = vmatpush1.msra.mxu0 0.0
      %2195 = vmatprep.subr.mxu0 0.0
      %2196 = vmatpush1.msra.mxu0 0.0
      %2197 = vmatprep.subr.mxu0 0.0
      %2198 = vmatpush1.msra.mxu0 0.0
      %2199 = vmatprep.subr.mxu0 0.0
      %2200 = vmatpush1.msra.mxu0 0.0
      %2201 = vmatprep.subr.mxu0 0.0
      %2202 = vmatpush1.msra.mxu0 0.0
      %2203 = vmatprep.subr.mxu0 0.0
      %2204 = vmatpush1.msra.mxu0 0.0
      %2205 = vmatprep.subr.mxu0 0.0
      %2206 = vmatpush1.msra.mxu0 0.0
      %2207 = vmatprep.subr.mxu0 0.0
      %2208 = vmatpush1.msra.mxu0 0.0
      %2209 = vmatprep.mubr.f32.mxu0 0.0
      %2210 = vmatmul.mubr.f32.gmra.mrb[0].mxu0 %v1235
      %v2211 = vpop.f32.mrb[0].mxu0
      %v2212 = vadd.f32 %v2143, %v2211
      %v2213 = vpop.f32.mrb[0].mxu0
      %2214 = vdwg.mxu0
      %v2215 = vld [vmem:[%s59] sm:$0xff]
      %v2216 = vld [vmem:[%s51] sm:$0xff]
      %v2218 = vsel %vm1233, %v2136, 0
      %2220 = vmatprep.subr.mxu0 0.0
      %2221 = vmatpush1.msra.mxu0 %v2216
      %2222 = vmatprep.subr.mxu0 0.0
      %2223 = vmatpush1.msra.mxu0 0.0
      %2224 = vmatprep.subr.mxu0 0.0
      %2225 = vmatpush1.msra.mxu0 0.0
      %2226 = vmatprep.subr.mxu0 0.0
      %2227 = vmatpush1.msra.mxu0 0.0
      %2228 = vmatprep.subr.mxu0 0.0
      %2229 = vmatpush1.msra.mxu0 0.0
      %2230 = vmatprep.subr.mxu0 0.0
      %2231 = vmatpush1.msra.mxu0 0.0
      %2232 = vmatprep.subr.mxu0 0.0
      %2233 = vmatpush1.msra.mxu0 0.0
      %2234 = vmatprep.subr.mxu0 0.0
      %2235 = vmatpush1.msra.mxu0 0.0
      %2236 = vmatprep.subr.mxu0 0.0
      %2237 = vmatpush1.msra.mxu0 0.0
      %2238 = vmatprep.subr.mxu0 0.0
      %2239 = vmatpush1.msra.mxu0 0.0
      %2240 = vmatprep.subr.mxu0 0.0
      %2241 = vmatpush1.msra.mxu0 0.0
      %2242 = vmatprep.subr.mxu0 0.0
      %2243 = vmatpush1.msra.mxu0 0.0
      %2244 = vmatprep.subr.mxu0 0.0
      %2245 = vmatpush1.msra.mxu0 0.0
      %2246 = vmatprep.subr.mxu0 0.0
      %2247 = vmatpush1.msra.mxu0 0.0
      %2248 = vmatprep.subr.mxu0 0.0
      %2249 = vmatpush1.msra.mxu0 0.0
      %2250 = vmatprep.subr.mxu0 0.0
      %2251 = vmatpush1.msra.mxu0 0.0
      %2252 = vmatprep.subr.mxu0 0.0
      %2253 = vmatpush1.msra.mxu0 0.0
      %2254 = vmatprep.subr.mxu0 0.0
      %2255 = vmatpush1.msra.mxu0 0.0
      %2256 = vmatprep.subr.mxu0 0.0
      %2257 = vmatpush1.msra.mxu0 0.0
      %2258 = vmatprep.subr.mxu0 0.0
      %2259 = vmatpush1.msra.mxu0 0.0
      %2260 = vmatprep.subr.mxu0 0.0
      %2261 = vmatpush1.msra.mxu0 0.0
      %2262 = vmatprep.subr.mxu0 0.0
      %2263 = vmatpush1.msra.mxu0 0.0
      %2264 = vmatprep.subr.mxu0 0.0
      %2265 = vmatpush1.msra.mxu0 0.0
      %2266 = vmatprep.subr.mxu0 0.0
      %2267 = vmatpush1.msra.mxu0 0.0
      %2268 = vmatprep.subr.mxu0 0.0
      %2269 = vmatpush1.msra.mxu0 0.0
      %2270 = vmatprep.subr.mxu0 0.0
      %2271 = vmatpush1.msra.mxu0 0.0
      %2272 = vmatprep.subr.mxu0 0.0
      %2273 = vmatpush1.msra.mxu0 0.0
      %2274 = vmatprep.subr.mxu0 0.0
      %2275 = vmatpush1.msra.mxu0 0.0
      %2276 = vmatprep.subr.mxu0 0.0
      %2277 = vmatpush1.msra.mxu0 0.0
      %2278 = vmatprep.subr.mxu0 0.0
      %2279 = vmatpush1.msra.mxu0 0.0
      %2280 = vmatprep.subr.mxu0 0.0
      %2281 = vmatpush1.msra.mxu0 0.0
      %2282 = vmatprep.subr.mxu0 0.0
      %2283 = vmatpush1.msra.mxu0 0.0
      %2284 = vmatprep.mubr.f32.mxu0 0.0
      %2285 = vmatmul.mubr.f32.gmra.mrb[0].mxu0 %v2218
      %v2286 = vpop.f32.mrb[0].mxu0
      %v2287 = vadd.f32 0.0, %v2286
      %v2288 = vpop.f32.mrb[0].mxu0
      %2289 = vdwg.mxu0
      %v2290 = vadd.f32 %v2212, %v2287
      %v2291 = vld [vmem:[%s57] sm:$0xff]
      %2292 = vmatprep.subr.mxu0 0.0
      %2293 = vmatpush1.msra.mxu0 %v2291
      %2294 = vmatprep.subr.mxu0 0.0
      %2295 = vmatpush1.msra.mxu0 0.0
      %2296 = vmatprep.subr.mxu0 0.0
      %2297 = vmatpush1.msra.mxu0 0.0
      %2298 = vmatprep.subr.mxu0 0.0
      %2299 = vmatpush1.msra.mxu0 0.0
      %2300 = vmatprep.subr.mxu0 0.0
      %2301 = vmatpush1.msra.mxu0 0.0
      %2302 = vmatprep.subr.mxu0 0.0
      %2303 = vmatpush1.msra.mxu0 0.0
      %2304 = vmatprep.subr.mxu0 0.0
      %2305 = vmatpush1.msra.mxu0 0.0
      %2306 = vmatprep.subr.mxu0 0.0
      %2307 = vmatpush1.msra.mxu0 0.0
      %2308 = vmatprep.subr.mxu0 0.0
      %2309 = vmatpush1.msra.mxu0 0.0
      %2310 = vmatprep.subr.mxu0 0.0
      %2311 = vmatpush1.msra.mxu0 0.0
      %2312 = vmatprep.subr.mxu0 0.0
      %2313 = vmatpush1.msra.mxu0 0.0
      %2314 = vmatprep.subr.mxu0 0.0
      %2315 = vmatpush1.msra.mxu0 0.0
      %2316 = vmatprep.subr.mxu0 0.0
      %2317 = vmatpush1.msra.mxu0 0.0
      %2318 = vmatprep.subr.mxu0 0.0
      %2319 = vmatpush1.msra.mxu0 0.0
      %2320 = vmatprep.subr.mxu0 0.0
      %2321 = vmatpush1.msra.mxu0 0.0
      %2322 = vmatprep.subr.mxu0 0.0
      %2323 = vmatpush1.msra.mxu0 0.0
      %2324 = vmatprep.subr.mxu0 0.0
      %2325 = vmatpush1.msra.mxu0 0.0
      %2326 = vmatprep.subr.mxu0 0.0
      %2327 = vmatpush1.msra.mxu0 0.0
      %2328 = vmatprep.subr.mxu0 0.0
      %2329 = vmatpush1.msra.mxu0 0.0
      %2330 = vmatprep.subr.mxu0 0.0
      %2331 = vmatpush1.msra.mxu0 0.0
      %2332 = vmatprep.subr.mxu0 0.0
      %2333 = vmatpush1.msra.mxu0 0.0
      %2334 = vmatprep.subr.mxu0 0.0
      %2335 = vmatpush1.msra.mxu0 0.0
      %2336 = vmatprep.subr.mxu0 0.0
      %2337 = vmatpush1.msra.mxu0 0.0
      %2338 = vmatprep.subr.mxu0 0.0
      %2339 = vmatpush1.msra.mxu0 0.0
      %2340 = vmatprep.subr.mxu0 0.0
      %2341 = vmatpush1.msra.mxu0 0.0
      %2342 = vmatprep.subr.mxu0 0.0
      %2343 = vmatpush1.msra.mxu0 0.0
      %2344 = vmatprep.subr.mxu0 0.0
      %2345 = vmatpush1.msra.mxu0 0.0
      %2346 = vmatprep.subr.mxu0 0.0
      %2347 = vmatpush1.msra.mxu0 0.0
      %2348 = vmatprep.subr.mxu0 0.0
      %2349 = vmatpush1.msra.mxu0 0.0
      %2350 = vmatprep.subr.mxu0 0.0
      %2351 = vmatpush1.msra.mxu0 0.0
      %2352 = vmatprep.subr.mxu0 0.0
      %2353 = vmatpush1.msra.mxu0 0.0
      %2354 = vmatprep.subr.mxu0 0.0
      %2355 = vmatpush1.msra.mxu0 0.0
      %2356 = vmatprep.mubr.f32.mxu0 0.0
      %2357 = vmatmul.mubr.f32.gmra.mrb[0].mxu0 %v2218
      %v2358 = vpop.f32.mrb[0].mxu0
      %v2359 = vadd.f32 0.0, %v2358
      %v2360 = vpop.f32.mrb[0].mxu0
      %2361 = vdwg.mxu0
      %2362 = vmatprep.subr.mxu0 0.0
      %2363 = vmatpush1.msra.mxu0 %v2215
      %2364 = vmatprep.subr.mxu0 0.0
      %2365 = vmatpush1.msra.mxu0 0.0
      %2366 = vmatprep.subr.mxu0 0.0
      %2367 = vmatpush1.msra.mxu0 0.0
      %2368 = vmatprep.subr.mxu0 0.0
      %2369 = vmatpush1.msra.mxu0 0.0
      %2370 = vmatprep.subr.mxu0 0.0
      %2371 = vmatpush1.msra.mxu0 0.0
      %2372 = vmatprep.subr.mxu0 0.0
      %2373 = vmatpush1.msra.mxu0 0.0
      %2374 = vmatprep.subr.mxu0 0.0
      %2375 = vmatpush1.msra.mxu0 0.0
      %2376 = vmatprep.subr.mxu0 0.0
      %2377 = vmatpush1.msra.mxu0 0.0
      %2378 = vmatprep.subr.mxu0 0.0
      %2379 = vmatpush1.msra.mxu0 0.0
      %2380 = vmatprep.subr.mxu0 0.0
      %2381 = vmatpush1.msra.mxu0 0.0
      %2382 = vmatprep.subr.mxu0 0.0
      %2383 = vmatpush1.msra.mxu0 0.0
      %2384 = vmatprep.subr.mxu0 0.0
      %2385 = vmatpush1.msra.mxu0 0.0
      %2386 = vmatprep.subr.mxu0 0.0
      %2387 = vmatpush1.msra.mxu0 0.0
      %2388 = vmatprep.subr.mxu0 0.0
      %2389 = vmatpush1.msra.mxu0 0.0
      %2390 = vmatprep.subr.mxu0 0.0
      %2391 = vmatpush1.msra.mxu0 0.0
      %2392 = vmatprep.subr.mxu0 0.0
      %2393 = vmatpush1.msra.mxu0 0.0
      %2394 = vmatprep.subr.mxu0 0.0
      %2395 = vmatpush1.msra.mxu0 0.0
      %2396 = vmatprep.subr.mxu0 0.0
      %2397 = vmatpush1.msra.mxu0 0.0
      %2398 = vmatprep.subr.mxu0 0.0
      %2399 = vmatpush1.msra.mxu0 0.0
      %2400 = vmatprep.subr.mxu0 0.0
      %2401 = vmatpush1.msra.mxu0 0.0
      %2402 = vmatprep.subr.mxu0 0.0
      %2403 = vmatpush1.msra.mxu0 0.0
      %2404 = vmatprep.subr.mxu0 0.0
      %2405 = vmatpush1.msra.mxu0 0.0
      %2406 = vmatprep.subr.mxu0 0.0
      %2407 = vmatpush1.msra.mxu0 0.0
      %2408 = vmatprep.subr.mxu0 0.0
      %2409 = vmatpush1.msra.mxu0 0.0
      %2410 = vmatprep.subr.mxu0 0.0
      %2411 = vmatpush1.msra.mxu0 0.0
      %2412 = vmatprep.subr.mxu0 0.0
      %2413 = vmatpush1.msra.mxu0 0.0
      %2414 = vmatprep.subr.mxu0 0.0
      %2415 = vmatpush1.msra.mxu0 0.0
      %2416 = vmatprep.subr.mxu0 0.0
      %2417 = vmatpush1.msra.mxu0 0.0
      %2418 = vmatprep.subr.mxu0 0.0
      %2419 = vmatpush1.msra.mxu0 0.0
      %2420 = vmatprep.subr.mxu0 0.0
      %2421 = vmatpush1.msra.mxu0 0.0
      %2422 = vmatprep.subr.mxu0 0.0
      %2423 = vmatpush1.msra.mxu0 0.0
      %2424 = vmatprep.subr.mxu0 0.0
      %2425 = vmatpush1.msra.mxu0 0.0
      %2426 = vmatprep.mubr.f32.mxu0 0.0
      %2427 = vmatmul.mubr.f32.gmra.mrb[0].mxu0 %v1235
      %v2428 = vpop.f32.mrb[0].mxu0
      %v2429 = vadd.f32 %v2359, %v2428
      %v2430 = vpop.f32.mrb[0].mxu0
      %2431 = vdwg.mxu0
      %v2432 = vld [vmem:[%s55] sm:$0x1]
      %v2434 = vcombine.high %v2290, %v2290
      %v2436 = vunpack.c.l.s4 1966171168
      %v2437 = vunpack.c.0.s8 %v2436
      %v2438 = vlaneseq
      %v2439 = vshrl.u32 %v2438, 7
      %v2440 = vsub.s32 %v2437, %v2439
      %v2441 = vrot.slane %v2290, %v2440
      %v2443 = vunpack.c.l.s4 1966171168
      %v2444 = vunpack.c.0.s8 %v2443
      %v2445 = vlaneseq
      %v2446 = vshrl.u32 %v2445, 7
      %v2447 = vsub.s32 %v2444, %v2446
      %v2448 = vrot.slane %v2434, %v2447
      %v2449 = vcombine.high %v2441, %v2441
      %v2450 = vcombine.high %v2448, %v2448
      %v2452 = vunpack.c.l.s4 1966171168
      %v2453 = vunpack.c.0.s8 %v2452
      %v2454 = vlaneseq
      %v2455 = vshrl.u32 %v2454, 7
      %v2456 = vsub.s32 %v2453, %v2455
      %v2457 = vrot.slane %v2441, %v2456
      %v2459 = vunpack.c.l.s4 1966171168
      %v2460 = vunpack.c.0.s8 %v2459
      %v2461 = vlaneseq
      %v2462 = vshrl.u32 %v2461, 7
      %v2463 = vsub.s32 %v2460, %v2462
      %v2464 = vrot.slane %v2448, %v2463
      %v2466 = vunpack.c.l.s4 1966171168
      %v2467 = vunpack.c.0.s8 %v2466
      %v2468 = vlaneseq
      %v2469 = vshrl.u32 %v2468, 7
      %v2470 = vsub.s32 %v2467, %v2469
      %v2471 = vrot.slane %v2449, %v2470
      %v2473 = vunpack.c.l.s4 1966171168
      %v2474 = vunpack.c.0.s8 %v2473
      %v2475 = vlaneseq
      %v2476 = vshrl.u32 %v2475, 7
      %v2477 = vsub.s32 %v2474, %v2476
      %v2478 = vrot.slane %v2450, %v2477
      %v2479 = vcombine.high %v2457, %v2457
      %v2480 = vcombine.high %v2464, %v2464
      %v2481 = vcombine.high %v2471, %v2471
      %v2482 = vcombine.high %v2478, %v2478
      %v2483 = vlaneseq
      %v2484 = vshrl.u32 %v2483, 7
      %v2485 = vsub.s32 0, %v2484
      %v2486 = vrot.slane %v2457, %v2485
      %v2487 = vlaneseq
      %v2488 = vshrl.u32 %v2487, 7
      %v2489 = vsub.s32 0, %v2488
      %v2490 = vrot.slane %v2471, %v2489
      %v2491 = vlaneseq
      %v2492 = vshrl.u32 %v2491, 7
      %v2493 = vsub.s32 0, %v2492
      %v2494 = vrot.slane %v2479, %v2493
      %v2495 = vlaneseq
      %v2496 = vshrl.u32 %v2495, 7
      %v2497 = vsub.s32 0, %v2496
      %v2498 = vrot.slane %v2481, %v2497
      %v2499 = vlaneseq
      %v2500 = vshrl.u32 %v2499, 7
      %v2501 = vsub.s32 0, %v2500
      %v2502 = vrot.slane %v2464, %v2501
      %v2503 = vlaneseq
      %v2504 = vshrl.u32 %v2503, 7
      %v2505 = vsub.s32 0, %v2504
      %v2506 = vrot.slane %v2478, %v2505
      %v2507 = vlaneseq
      %v2508 = vshrl.u32 %v2507, 7
      %v2509 = vsub.s32 0, %v2508
      %v2510 = vrot.slane %v2480, %v2509
      %v2511 = vlaneseq
      %v2512 = vshrl.u32 %v2511, 7
      %v2513 = vsub.s32 0, %v2512
      %v2514 = vrot.slane %v2482, %v2513
      %v2523 = vadd.f32 %v2486, %v2429
      %v2524 = vadd.f32 %v2490, %v2429
      %v2525 = vadd.f32 %v2494, %v2429
      %v2526 = vadd.f32 %v2498, %v2429
      %v2527 = vadd.f32 %v2502, %v2429
      %v2528 = vadd.f32 %v2506, %v2429
      %v2529 = vadd.f32 %v2510, %v2429
      %v2530 = vadd.f32 %v2514, %v2429
      %v2532 = vlaneseq
      %v2533 = vshrl.u32 %v2532, 7
      %v2534 = vsub.s32 0, %v2533
      %v2535 = vrot.slane %v2432, %v2534
      %v2537 = vmul.f32 %v1483, %v2535
      %v2538 = vmul.f32 %v1490, %v2535
      %v2539 = vmul.f32 %v1497, %v2535
      %v2540 = vmul.f32 %v1504, %v2535
      %v2541 = vmul.f32 %v1511, %v2535
      %v2542 = vmul.f32 %v1518, %v2535
      %v2543 = vmul.f32 %v1525, %v2535
      %v2544 = vmul.f32 %v1532, %v2535
      %v2545 = vadd.f32 %v2523, %v2537
      %v2546 = vadd.f32 %v2524, %v2538
      %v2547 = vadd.f32 %v2525, %v2539
      %v2548 = vadd.f32 %v2526, %v2540
      %v2549 = vadd.f32 %v2527, %v2541
      %v2550 = vadd.f32 %v2528, %v2542
      %v2551 = vadd.f32 %v2529, %v2543
      %v2552 = vadd.f32 %v2530, %v2544
      %v2553 = vmax.f32 %v2545, 0.0
      %v2554 = vmax.f32 %v2546, 0.0
      %v2555 = vmax.f32 %v2547, 0.0
      %v2556 = vmax.f32 %v2548, 0.0
      %v2557 = vmax.f32 %v2549, 0.0
      %v2558 = vmax.f32 %v2550, 0.0
      %v2559 = vmax.f32 %v2551, 0.0
      %v2560 = vmax.f32 %v2552, 0.0
      %v2561 = vld [vmem:[%s61] sm:$0xff]
      %v2562 = vld [vmem:[%s61 + $0x8] sm:$0xff]
      %v2563 = vld [vmem:[%s61 + $0x10] sm:$0xf]
      %v2564 = vld [vmem:[%s49] sm:$0x1]
      %v2566 = vlaneseq
      %v2567 = vshrl.u32 %v2566, 7
      %v2568 = vsub.s32 0, %v2567
      %v2569 = vrot.slane %v2564, %v2568
      %vm2571 = vcmask 162816
      %v2573 = vsel %vm2571, %v2553, 0
      %v2576 = vsel %vm2571, %v2554, 0
      %v2579 = vsel %vm2571, %v2555, 0
      %v2582 = vsel %vm2571, %v2556, 0
      %v2585 = vsel %vm2571, %v2557, 0
      %v2588 = vsel %vm2571, %v2558, 0
      %v2591 = vsel %vm2571, %v2559, 0
      %v2594 = vsel %vm2571, %v2560, 0
      %v2597 = vsel %vm1597, %v2563, 0
      %2599 = vmatprep.subr.mxu0 0.0
      %2600 = vmatpush1.msra.mxu0 %v2561
      %2601 = vmatprep.subr.mxu0 0.0
      %2602 = vmatpush1.msra.mxu0 %v2562
      %2603 = vmatprep.subr.mxu0 0.0
      %2604 = vmatpush1.msra.mxu0 %v2597
      %2605 = vmatprep.subr.mxu0 0.0
      %2606 = vmatpush1.msra.mxu0 0.0
      %2607 = vmatprep.subr.mxu0 0.0
      %2608 = vmatpush1.msra.mxu0 0.0
      %2609 = vmatprep.subr.mxu0 0.0
      %2610 = vmatpush1.msra.mxu0 0.0
      %2611 = vmatprep.subr.mxu0 0.0
      %2612 = vmatpush1.msra.mxu0 0.0
      %2613 = vmatprep.subr.mxu0 0.0
      %2614 = vmatpush1.msra.mxu0 0.0
      %2615 = vmatprep.subr.mxu0 0.0
      %2616 = vmatpush1.msra.mxu0 0.0
      %2617 = vmatprep.subr.mxu0 0.0
      %2618 = vmatpush1.msra.mxu0 0.0
      %2619 = vmatprep.subr.mxu0 0.0
      %2620 = vmatpush1.msra.mxu0 0.0
      %2621 = vmatprep.subr.mxu0 0.0
      %2622 = vmatpush1.msra.mxu0 0.0
      %2623 = vmatprep.subr.mxu0 0.0
      %2624 = vmatpush1.msra.mxu0 0.0
      %2625 = vmatprep.subr.mxu0 0.0
      %2626 = vmatpush1.msra.mxu0 0.0
      %2627 = vmatprep.subr.mxu0 0.0
      %2628 = vmatpush1.msra.mxu0 0.0
      %2629 = vmatprep.subr.mxu0 0.0
      %2630 = vmatpush1.msra.mxu0 0.0
      %2631 = vmatprep.subr.mxu0 0.0
      %2632 = vmatpush1.msra.mxu0 0.0
      %2633 = vmatprep.subr.mxu0 0.0
      %2634 = vmatpush1.msra.mxu0 0.0
      %2635 = vmatprep.subr.mxu0 0.0
      %2636 = vmatpush1.msra.mxu0 0.0
      %2637 = vmatprep.subr.mxu0 0.0
      %2638 = vmatpush1.msra.mxu0 0.0
      %2639 = vmatprep.subr.mxu0 0.0
      %2640 = vmatpush1.msra.mxu0 0.0
      %2641 = vmatprep.subr.mxu0 0.0
      %2642 = vmatpush1.msra.mxu0 0.0
      %2643 = vmatprep.subr.mxu0 0.0
      %2644 = vmatpush1.msra.mxu0 0.0
      %2645 = vmatprep.subr.mxu0 0.0
      %2646 = vmatpush1.msra.mxu0 0.0
      %2647 = vmatprep.subr.mxu0 0.0
      %2648 = vmatpush1.msra.mxu0 0.0
      %2649 = vmatprep.subr.mxu0 0.0
      %2650 = vmatpush1.msra.mxu0 0.0
      %2651 = vmatprep.subr.mxu0 0.0
      %2652 = vmatpush1.msra.mxu0 0.0
      %2653 = vmatprep.subr.mxu0 0.0
      %2654 = vmatpush1.msra.mxu0 0.0
      %2655 = vmatprep.subr.mxu0 0.0
      %2656 = vmatpush1.msra.mxu0 0.0
      %2657 = vmatprep.subr.mxu0 0.0
      %2658 = vmatpush1.msra.mxu0 0.0
      %2659 = vmatprep.subr.mxu0 0.0
      %2660 = vmatpush1.msra.mxu0 0.0
      %2661 = vmatprep.subr.mxu0 0.0
      %2662 = vmatpush1.msra.mxu0 0.0
      %2663 = vmatprep.mubr.f32.mxu0 0.0
      %2664 = vmatmul.mubr.f32.gmra.mrb[0].mxu0 %v2573
      %v2665 = vpop.f32.mrb[0].mxu0
      %v2666 = vadd.f32 %v2569, %v2665
      %v2667 = vpop.f32.mrb[0].mxu0
      %2668 = vmatprep.mubr.f32.mxu0 0.0
      %2669 = vmatmul.mubr.f32.gmra.mrb[0].mxu0 %v2576
      %v2670 = vpop.f32.mrb[0].mxu0
      %v2671 = vadd.f32 %v2569, %v2670
      %v2672 = vpop.f32.mrb[0].mxu0
      %2673 = vmatprep.mubr.f32.mxu0 0.0
      %2674 = vmatmul.mubr.f32.gmra.mrb[0].mxu0 %v2579
      %v2675 = vpop.f32.mrb[0].mxu0
      %v2676 = vadd.f32 %v2569, %v2675
      %v2677 = vpop.f32.mrb[0].mxu0
      %2678 = vmatprep.mubr.f32.mxu0 0.0
      %2679 = vmatmul.mubr.f32.gmra.mrb[0].mxu0 %v2582
      %v2680 = vpop.f32.mrb[0].mxu0
      %v2681 = vadd.f32 %v2569, %v2680
      %v2682 = vpop.f32.mrb[0].mxu0
      %2683 = vmatprep.mubr.f32.mxu0 0.0
      %2684 = vmatmul.mubr.f32.gmra.mrb[0].mxu0 %v2585
      %v2685 = vpop.f32.mrb[0].mxu0
      %v2686 = vadd.f32 %v2569, %v2685
      %v2687 = vpop.f32.mrb[0].mxu0
      %2688 = vmatprep.mubr.f32.mxu0 0.0
      %2689 = vmatmul.mubr.f32.gmra.mrb[0].mxu0 %v2588
      %v2690 = vpop.f32.mrb[0].mxu0
      %v2691 = vadd.f32 %v2569, %v2690
      %v2692 = vpop.f32.mrb[0].mxu0
      %2693 = vmatprep.mubr.f32.mxu0 0.0
      %2694 = vmatmul.mubr.f32.gmra.mrb[0].mxu0 %v2591
      %v2695 = vpop.f32.mrb[0].mxu0
      %v2696 = vadd.f32 %v2569, %v2695
      %v2697 = vpop.f32.mrb[0].mxu0
      %2698 = vmatprep.mubr.f32.mxu0 0.0
      %2699 = vmatmul.mubr.f32.gmra.mrb[0].mxu0 %v2594
      %v2700 = vpop.f32.mrb[0].mxu0
      %v2701 = vadd.f32 %v2569, %v2700
      %v2702 = vpop.f32.mrb[0].mxu0
      %2703 = vdwg.mxu0
      %v2704 = vtanh.pop %v2666
      %v2705 = vtanh.pop %v2671
      %v2706 = vtanh.pop %v2676
      %v2707 = vtanh.pop %v2681
      %v2708 = vtanh.pop %v2686
      %v2709 = vtanh.pop %v2691
      %v2710 = vtanh.pop %v2696
      %v2711 = vtanh.pop %v2701
      %v2712 = vsel %vm1233, %v2704, 0.0
      %v2713 = vrot.slane %v2712, 4
      %v2714 = vadd.f32 %v2712, %v2713
      %v2715 = vrot.slane %v2714, 2
      %v2716 = vadd.f32 %v2714, %v2715
      %v2717 = vrot.slane %v2716, 1
      %v2718 = vadd.f32 %v2716, %v2717
      %v2719 = vsel %vm1233, %v2705, 0.0
      %v2720 = vrot.slane %v2719, 4
      %v2721 = vadd.f32 %v2719, %v2720
      %v2722 = vrot.slane %v2721, 2
      %v2723 = vadd.f32 %v2721, %v2722
      %v2724 = vrot.slane %v2723, 1
      %v2725 = vadd.f32 %v2723, %v2724
      %v2726 = vsel %vm1233, %v2706, 0.0
      %v2727 = vrot.slane %v2726, 4
      %v2728 = vadd.f32 %v2726, %v2727
      %v2729 = vrot.slane %v2728, 2
      %v2730 = vadd.f32 %v2728, %v2729
      %v2731 = vrot.slane %v2730, 1
      %v2732 = vadd.f32 %v2730, %v2731
      %v2733 = vsel %vm1233, %v2707, 0.0
      %v2734 = vrot.slane %v2733, 4
      %v2735 = vadd.f32 %v2733, %v2734
      %v2736 = vrot.slane %v2735, 2
      %v2737 = vadd.f32 %v2735, %v2736
      %v2738 = vrot.slane %v2737, 1
      %v2739 = vadd.f32 %v2737, %v2738
      %v2740 = vsel %vm1233, %v2708, 0.0
      %v2741 = vrot.slane %v2740, 4
      %v2742 = vadd.f32 %v2740, %v2741
      %v2743 = vrot.slane %v2742, 2
      %v2744 = vadd.f32 %v2742, %v2743
      %v2745 = vrot.slane %v2744, 1
      %v2746 = vadd.f32 %v2744, %v2745
      %v2747 = vsel %vm1233, %v2709, 0.0
      %v2748 = vrot.slane %v2747, 4
      %v2749 = vadd.f32 %v2747, %v2748
      %v2750 = vrot.slane %v2749, 2
      %v2751 = vadd.f32 %v2749, %v2750
      %v2752 = vrot.slane %v2751, 1
      %v2753 = vadd.f32 %v2751, %v2752
      %v2754 = vsel %vm1233, %v2710, 0.0
      %v2755 = vrot.slane %v2754, 4
      %v2756 = vadd.f32 %v2754, %v2755
      %v2757 = vrot.slane %v2756, 2
      %v2758 = vadd.f32 %v2756, %v2757
      %v2759 = vrot.slane %v2758, 1
      %v2760 = vadd.f32 %v2758, %v2759
      %v2761 = vsel %vm1233, %v2711, 0.0
      %v2762 = vrot.slane %v2761, 4
      %v2763 = vadd.f32 %v2761, %v2762
      %v2764 = vrot.slane %v2763, 2
      %v2765 = vadd.f32 %v2763, %v2764
      %v2766 = vrot.slane %v2765, 1
      %v2767 = vadd.f32 %v2765, %v2766
      %v2768 = vld [vmem:[%s73] sm:$0xff]
      %v2769 = vld [vmem:[%s63] sm:$0x1]
      %v2771 = vlaneseq
      %v2772 = vshrl.u32 %v2771, 7
      %v2773 = vsub.s32 0, %v2772
      %v2774 = vrot.slane %v2769, %v2773
      %2776 = vmatprep.subr.mxu0 0.0
      %2777 = vmatpush1.msra.mxu0 %v2768
      %2778 = vmatprep.subr.mxu0 0.0
      %2779 = vmatpush1.msra.mxu0 0.0
      %2780 = vmatprep.subr.mxu0 0.0
      %2781 = vmatpush1.msra.mxu0 0.0
      %2782 = vmatprep.subr.mxu0 0.0
      %2783 = vmatpush1.msra.mxu0 0.0
      %2784 = vmatprep.subr.mxu0 0.0
      %2785 = vmatpush1.msra.mxu0 0.0
      %2786 = vmatprep.subr.mxu0 0.0
      %2787 = vmatpush1.msra.mxu0 0.0
      %2788 = vmatprep.subr.mxu0 0.0
      %2789 = vmatpush1.msra.mxu0 0.0
      %2790 = vmatprep.subr.mxu0 0.0
      %2791 = vmatpush1.msra.mxu0 0.0
      %2792 = vmatprep.subr.mxu0 0.0
      %2793 = vmatpush1.msra.mxu0 0.0
      %2794 = vmatprep.subr.mxu0 0.0
      %2795 = vmatpush1.msra.mxu0 0.0
      %2796 = vmatprep.subr.mxu0 0.0
      %2797 = vmatpush1.msra.mxu0 0.0
      %2798 = vmatprep.subr.mxu0 0.0
      %2799 = vmatpush1.msra.mxu0 0.0
      %2800 = vmatprep.subr.mxu0 0.0
      %2801 = vmatpush1.msra.mxu0 0.0
      %2802 = vmatprep.subr.mxu0 0.0
      %2803 = vmatpush1.msra.mxu0 0.0
      %2804 = vmatprep.subr.mxu0 0.0
      %2805 = vmatpush1.msra.mxu0 0.0
      %2806 = vmatprep.subr.mxu0 0.0
      %2807 = vmatpush1.msra.mxu0 0.0
      %2808 = vmatprep.subr.mxu0 0.0
      %2809 = vmatpush1.msra.mxu0 0.0
      %2810 = vmatprep.subr.mxu0 0.0
      %2811 = vmatpush1.msra.mxu0 0.0
      %2812 = vmatprep.subr.mxu0 0.0
      %2813 = vmatpush1.msra.mxu0 0.0
      %2814 = vmatprep.subr.mxu0 0.0
      %2815 = vmatpush1.msra.mxu0 0.0
      %2816 = vmatprep.subr.mxu0 0.0
      %2817 = vmatpush1.msra.mxu0 0.0
      %2818 = vmatprep.subr.mxu0 0.0
      %2819 = vmatpush1.msra.mxu0 0.0
      %2820 = vmatprep.subr.mxu0 0.0
      %2821 = vmatpush1.msra.mxu0 0.0
      %2822 = vmatprep.subr.mxu0 0.0
      %2823 = vmatpush1.msra.mxu0 0.0
      %2824 = vmatprep.subr.mxu0 0.0
      %2825 = vmatpush1.msra.mxu0 0.0
      %2826 = vmatprep.subr.mxu0 0.0
      %2827 = vmatpush1.msra.mxu0 0.0
      %2828 = vmatprep.subr.mxu0 0.0
      %2829 = vmatpush1.msra.mxu0 0.0
      %2830 = vmatprep.subr.mxu0 0.0
      %2831 = vmatpush1.msra.mxu0 0.0
      %2832 = vmatprep.subr.mxu0 0.0
      %2833 = vmatpush1.msra.mxu0 0.0
      %2834 = vmatprep.subr.mxu0 0.0
      %2835 = vmatpush1.msra.mxu0 0.0
      %2836 = vmatprep.subr.mxu0 0.0
      %2837 = vmatpush1.msra.mxu0 0.0
      %2838 = vmatprep.subr.mxu0 0.0
      %2839 = vmatpush1.msra.mxu0 0.0
      %2840 = vmatprep.mubr.f32.mxu0 0.0
      %2841 = vmatmul.mubr.f32.gmra.mrb[0].mxu0 %v1235
      %v2842 = vpop.f32.mrb[0].mxu0
      %v2843 = vadd.f32 %v2774, %v2842
      %v2844 = vpop.f32.mrb[0].mxu0
      %2845 = vdwg.mxu0
      %v2846 = vld [vmem:[%s71] sm:$0xff]
      %2847 = vmatprep.subr.mxu0 0.0
      %2848 = vmatpush1.msra.mxu0 %v2846
      %2849 = vmatprep.subr.mxu0 0.0
      %2850 = vmatpush1.msra.mxu0 0.0
      %2851 = vmatprep.subr.mxu0 0.0
      %2852 = vmatpush1.msra.mxu0 0.0
      %2853 = vmatprep.subr.mxu0 0.0
      %2854 = vmatpush1.msra.mxu0 0.0
      %2855 = vmatprep.subr.mxu0 0.0
      %2856 = vmatpush1.msra.mxu0 0.0
      %2857 = vmatprep.subr.mxu0 0.0
      %2858 = vmatpush1.msra.mxu0 0.0
      %2859 = vmatprep.subr.mxu0 0.0
      %2860 = vmatpush1.msra.mxu0 0.0
      %2861 = vmatprep.subr.mxu0 0.0
      %2862 = vmatpush1.msra.mxu0 0.0
      %2863 = vmatprep.subr.mxu0 0.0
      %2864 = vmatpush1.msra.mxu0 0.0
      %2865 = vmatprep.subr.mxu0 0.0
      %2866 = vmatpush1.msra.mxu0 0.0
      %2867 = vmatprep.subr.mxu0 0.0
      %2868 = vmatpush1.msra.mxu0 0.0
      %2869 = vmatprep.subr.mxu0 0.0
      %2870 = vmatpush1.msra.mxu0 0.0
      %2871 = vmatprep.subr.mxu0 0.0
      %2872 = vmatpush1.msra.mxu0 0.0
      %2873 = vmatprep.subr.mxu0 0.0
      %2874 = vmatpush1.msra.mxu0 0.0
      %2875 = vmatprep.subr.mxu0 0.0
      %2876 = vmatpush1.msra.mxu0 0.0
      %2877 = vmatprep.subr.mxu0 0.0
      %2878 = vmatpush1.msra.mxu0 0.0
      %2879 = vmatprep.subr.mxu0 0.0
      %2880 = vmatpush1.msra.mxu0 0.0
      %2881 = vmatprep.subr.mxu0 0.0
      %2882 = vmatpush1.msra.mxu0 0.0
      %2883 = vmatprep.subr.mxu0 0.0
      %2884 = vmatpush1.msra.mxu0 0.0
      %2885 = vmatprep.subr.mxu0 0.0
      %2886 = vmatpush1.msra.mxu0 0.0
      %2887 = vmatprep.subr.mxu0 0.0
      %2888 = vmatpush1.msra.mxu0 0.0
      %2889 = vmatprep.subr.mxu0 0.0
      %2890 = vmatpush1.msra.mxu0 0.0
      %2891 = vmatprep.subr.mxu0 0.0
      %2892 = vmatpush1.msra.mxu0 0.0
      %2893 = vmatprep.subr.mxu0 0.0
      %2894 = vmatpush1.msra.mxu0 0.0
      %2895 = vmatprep.subr.mxu0 0.0
      %2896 = vmatpush1.msra.mxu0 0.0
      %2897 = vmatprep.subr.mxu0 0.0
      %2898 = vmatpush1.msra.mxu0 0.0
      %2899 = vmatprep.subr.mxu0 0.0
      %2900 = vmatpush1.msra.mxu0 0.0
      %2901 = vmatprep.subr.mxu0 0.0
      %2902 = vmatpush1.msra.mxu0 0.0
      %2903 = vmatprep.subr.mxu0 0.0
      %2904 = vmatpush1.msra.mxu0 0.0
      %2905 = vmatprep.subr.mxu0 0.0
      %2906 = vmatpush1.msra.mxu0 0.0
      %2907 = vmatprep.subr.mxu0 0.0
      %2908 = vmatpush1.msra.mxu0 0.0
      %2909 = vmatprep.subr.mxu0 0.0
      %2910 = vmatpush1.msra.mxu0 0.0
      %2911 = vmatprep.mubr.f32.mxu0 0.0
      %2912 = vmatmul.mubr.f32.gmra.mrb[0].mxu0 %v2218
      %v2913 = vpop.f32.mrb[0].mxu0
      %v2914 = vadd.f32 0.0, %v2913
      %v2915 = vpop.f32.mrb[0].mxu0
      %2916 = vdwg.mxu0
      %v2917 = vadd.f32 %v2843, %v2914
      %v2918 = vmax.f32 %v2917, 0.0
      %v2919 = vld [vmem:[%s75] sm:$0xff]
      %v2920 = vld [vmem:[%s75 + $0x8] sm:$0x3]
      %v2921 = vld [vmem:[%s65] sm:$0x1]
      %v2923 = vlaneseq
      %v2924 = vshrl.u32 %v2923, 7
      %v2925 = vsub.s32 0, %v2924
      %v2926 = vrot.slane %v2921, %v2925
      %vm2928 = vcmask 80896
      %v2930 = vsel %vm2928, %v2918, 0
      %vm2932 = vcmask 1041408
      %v2934 = vsel %vm2932, %v2920, 0
      %2936 = vmatprep.subr.mxu0 0.0
      %2937 = vmatpush1.msra.mxu0 %v2919
      %2938 = vmatprep.subr.mxu0 0.0
      %2939 = vmatpush1.msra.mxu0 %v2934
      %2940 = vmatprep.subr.mxu0 0.0
      %2941 = vmatpush1.msra.mxu0 0.0
      %2942 = vmatprep.subr.mxu0 0.0
      %2943 = vmatpush1.msra.mxu0 0.0
      %2944 = vmatprep.subr.mxu0 0.0
      %2945 = vmatpush1.msra.mxu0 0.0
      %2946 = vmatprep.subr.mxu0 0.0
      %2947 = vmatpush1.msra.mxu0 0.0
      %2948 = vmatprep.subr.mxu0 0.0
      %2949 = vmatpush1.msra.mxu0 0.0
      %2950 = vmatprep.subr.mxu0 0.0
      %2951 = vmatpush1.msra.mxu0 0.0
      %2952 = vmatprep.subr.mxu0 0.0
      %2953 = vmatpush1.msra.mxu0 0.0
      %2954 = vmatprep.subr.mxu0 0.0
      %2955 = vmatpush1.msra.mxu0 0.0
      %2956 = vmatprep.subr.mxu0 0.0
      %2957 = vmatpush1.msra.mxu0 0.0
      %2958 = vmatprep.subr.mxu0 0.0
      %2959 = vmatpush1.msra.mxu0 0.0
      %2960 = vmatprep.subr.mxu0 0.0
      %2961 = vmatpush1.msra.mxu0 0.0
      %2962 = vmatprep.subr.mxu0 0.0
      %2963 = vmatpush1.msra.mxu0 0.0
      %2964 = vmatprep.subr.mxu0 0.0
      %2965 = vmatpush1.msra.mxu0 0.0
      %2966 = vmatprep.subr.mxu0 0.0
      %2967 = vmatpush1.msra.mxu0 0.0
      %2968 = vmatprep.subr.mxu0 0.0
      %2969 = vmatpush1.msra.mxu0 0.0
      %2970 = vmatprep.subr.mxu0 0.0
      %2971 = vmatpush1.msra.mxu0 0.0
      %2972 = vmatprep.subr.mxu0 0.0
      %2973 = vmatpush1.msra.mxu0 0.0
      %2974 = vmatprep.subr.mxu0 0.0
      %2975 = vmatpush1.msra.mxu0 0.0
      %2976 = vmatprep.subr.mxu0 0.0
      %2977 = vmatpush1.msra.mxu0 0.0
      %2978 = vmatprep.subr.mxu0 0.0
      %2979 = vmatpush1.msra.mxu0 0.0
      %2980 = vmatprep.subr.mxu0 0.0
      %2981 = vmatpush1.msra.mxu0 0.0
      %2982 = vmatprep.subr.mxu0 0.0
      %2983 = vmatpush1.msra.mxu0 0.0
      %2984 = vmatprep.subr.mxu0 0.0
      %2985 = vmatpush1.msra.mxu0 0.0
      %2986 = vmatprep.subr.mxu0 0.0
      %2987 = vmatpush1.msra.mxu0 0.0
      %2988 = vmatprep.subr.mxu0 0.0
      %2989 = vmatpush1.msra.mxu0 0.0
      %2990 = vmatprep.subr.mxu0 0.0
      %2991 = vmatpush1.msra.mxu0 0.0
      %2992 = vmatprep.subr.mxu0 0.0
      %2993 = vmatpush1.msra.mxu0 0.0
      %2994 = vmatprep.subr.mxu0 0.0
      %2995 = vmatpush1.msra.mxu0 0.0
      %2996 = vmatprep.subr.mxu0 0.0
      %2997 = vmatpush1.msra.mxu0 0.0
      %2998 = vmatprep.subr.mxu0 0.0
      %2999 = vmatpush1.msra.mxu0 0.0
      %3000 = vmatprep.mubr.f32.mxu0 0.0
      %3001 = vmatmul.mubr.f32.gmra.mrb[0].mxu0 %v2930
      %v3002 = vpop.f32.mrb[0].mxu0
      %v3003 = vadd.f32 %v2926, %v3002
      %v3004 = vpop.f32.mrb[0].mxu0
      %3005 = vdwg.mxu0
      %v3006 = vtanh.pop %v3003
      %v3007 = vld [vmem:[%s77] sm:$0xff]
      %v3008 = vld [vmem:[%s67] sm:$0x1]
      %v3010 = vlaneseq
      %v3011 = vshrl.u32 %v3010, 7
      %v3012 = vsub.s32 0, %v3011
      %v3013 = vrot.slane %v3008, %v3012
      %v3023 = vsel %vm1952, %v2725, %v2718
      %v3024 = vsel %vm1954, %v2732, %v3023
      %v3025 = vsel %vm1956, %v2739, %v3024
      %v3026 = vsel %vm1958, %v2746, %v3025
      %v3027 = vsel %vm1960, %v2753, %v3026
      %v3028 = vsel %vm1962, %v2760, %v3027
      %v3029 = vsel %vm1964, %v2767, %v3028
      %v3030 = vsel %vm1233, %v3029, 0
      %3032 = vmatprep.subr.mxu0 0.0
      %3033 = vmatpush1.msra.mxu0 %v3007
      %3034 = vmatprep.subr.mxu0 0.0
      %3035 = vmatpush1.msra.mxu0 0.0
      %3036 = vmatprep.subr.mxu0 0.0
      %3037 = vmatpush1.msra.mxu0 0.0
      %3038 = vmatprep.subr.mxu0 0.0
      %3039 = vmatpush1.msra.mxu0 0.0
      %3040 = vmatprep.subr.mxu0 0.0
      %3041 = vmatpush1.msra.mxu0 0.0
      %3042 = vmatprep.subr.mxu0 0.0
      %3043 = vmatpush1.msra.mxu0 0.0
      %3044 = vmatprep.subr.mxu0 0.0
      %3045 = vmatpush1.msra.mxu0 0.0
      %3046 = vmatprep.subr.mxu0 0.0
      %3047 = vmatpush1.msra.mxu0 0.0
      %3048 = vmatprep.subr.mxu0 0.0
      %3049 = vmatpush1.msra.mxu0 0.0
      %3050 = vmatprep.subr.mxu0 0.0
      %3051 = vmatpush1.msra.mxu0 0.0
      %3052 = vmatprep.subr.mxu0 0.0
      %3053 = vmatpush1.msra.mxu0 0.0
      %3054 = vmatprep.subr.mxu0 0.0
      %3055 = vmatpush1.msra.mxu0 0.0
      %3056 = vmatprep.subr.mxu0 0.0
      %3057 = vmatpush1.msra.mxu0 0.0
      %3058 = vmatprep.subr.mxu0 0.0
      %3059 = vmatpush1.msra.mxu0 0.0
      %3060 = vmatprep.subr.mxu0 0.0
      %3061 = vmatpush1.msra.mxu0 0.0
      %3062 = vmatprep.subr.mxu0 0.0
      %3063 = vmatpush1.msra.mxu0 0.0
      %3064 = vmatprep.subr.mxu0 0.0
      %3065 = vmatpush1.msra.mxu0 0.0
      %3066 = vmatprep.subr.mxu0 0.0
      %3067 = vmatpush1.msra.mxu0 0.0
      %3068 = vmatprep.subr.mxu0 0.0
      %3069 = vmatpush1.msra.mxu0 0.0
      %3070 = vmatprep.subr.mxu0 0.0
      %3071 = vmatpush1.msra.mxu0 0.0
      %3072 = vmatprep.subr.mxu0 0.0
      %3073 = vmatpush1.msra.mxu0 0.0
      %3074 = vmatprep.subr.mxu0 0.0
      %3075 = vmatpush1.msra.mxu0 0.0
      %3076 = vmatprep.subr.mxu0 0.0
      %3077 = vmatpush1.msra.mxu0 0.0
      %3078 = vmatprep.subr.mxu0 0.0
      %3079 = vmatpush1.msra.mxu0 0.0
      %3080 = vmatprep.subr.mxu0 0.0
      %3081 = vmatpush1.msra.mxu0 0.0
      %3082 = vmatprep.subr.mxu0 0.0
      %3083 = vmatpush1.msra.mxu0 0.0
      %3084 = vmatprep.subr.mxu0 0.0
      %3085 = vmatpush1.msra.mxu0 0.0
      %3086 = vmatprep.subr.mxu0 0.0
      %3087 = vmatpush1.msra.mxu0 0.0
      %3088 = vmatprep.subr.mxu0 0.0
      %3089 = vmatpush1.msra.mxu0 0.0
      %3090 = vmatprep.subr.mxu0 0.0
      %3091 = vmatpush1.msra.mxu0 0.0
      %3092 = vmatprep.subr.mxu0 0.0
      %3093 = vmatpush1.msra.mxu0 0.0
      %3094 = vmatprep.subr.mxu0 0.0
      %3095 = vmatpush1.msra.mxu0 0.0
      %3096 = vmatprep.mubr.f32.mxu0 0.0
      %3097 = vmatmul.mubr.f32.gmra.mrb[0].mxu0 %v3030
      %v3098 = vpop.f32.mrb[0].mxu0
      %v3099 = vadd.f32 %v3013, %v3098
      %v3100 = vpop.f32.mrb[0].mxu0
      %3101 = vdwg.mxu0
      %v3102 = vmax.f32 %v3099, 0.0
      %v3103 = vld [vmem:[%s79] sm:$0xf]
      %v3104 = vld [vmem:[%s69] sm:$0x1]
      %v3106 = vlaneseq
      %v3107 = vshrl.u32 %v3106, 7
      %v3108 = vsub.s32 0, %v3107
      %v3109 = vrot.slane %v3104, %v3108
      %v3112 = vsel %vm2047, %v3102, 0
      %v3115 = vsel %vm1597, %v3103, 0
      %3117 = vmatprep.subr.mxu0 0.0
      %3118 = vmatpush1.msra.mxu0 %v3115
      %3119 = vmatprep.subr.mxu0 0.0
      %3120 = vmatpush1.msra.mxu0 0.0
      %3121 = vmatprep.subr.mxu0 0.0
      %3122 = vmatpush1.msra.mxu0 0.0
      %3123 = vmatprep.subr.mxu0 0.0
      %3124 = vmatpush1.msra.mxu0 0.0
      %3125 = vmatprep.subr.mxu0 0.0
      %3126 = vmatpush1.msra.mxu0 0.0
      %3127 = vmatprep.subr.mxu0 0.0
      %3128 = vmatpush1.msra.mxu0 0.0
      %3129 = vmatprep.subr.mxu0 0.0
      %3130 = vmatpush1.msra.mxu0 0.0
      %3131 = vmatprep.subr.mxu0 0.0
      %3132 = vmatpush1.msra.mxu0 0.0
      %3133 = vmatprep.subr.mxu0 0.0
      %3134 = vmatpush1.msra.mxu0 0.0
      %3135 = vmatprep.subr.mxu0 0.0
      %3136 = vmatpush1.msra.mxu0 0.0
      %3137 = vmatprep.subr.mxu0 0.0
      %3138 = vmatpush1.msra.mxu0 0.0
      %3139 = vmatprep.subr.mxu0 0.0
      %3140 = vmatpush1.msra.mxu0 0.0
      %3141 = vmatprep.subr.mxu0 0.0
      %3142 = vmatpush1.msra.mxu0 0.0
      %3143 = vmatprep.subr.mxu0 0.0
      %3144 = vmatpush1.msra.mxu0 0.0
      %3145 = vmatprep.subr.mxu0 0.0
      %3146 = vmatpush1.msra.mxu0 0.0
      %3147 = vmatprep.subr.mxu0 0.0
      %3148 = vmatpush1.msra.mxu0 0.0
      %3149 = vmatprep.subr.mxu0 0.0
      %3150 = vmatpush1.msra.mxu0 0.0
      %3151 = vmatprep.subr.mxu0 0.0
      %3152 = vmatpush1.msra.mxu0 0.0
      %3153 = vmatprep.subr.mxu0 0.0
      %3154 = vmatpush1.msra.mxu0 0.0
      %3155 = vmatprep.subr.mxu0 0.0
      %3156 = vmatpush1.msra.mxu0 0.0
      %3157 = vmatprep.subr.mxu0 0.0
      %3158 = vmatpush1.msra.mxu0 0.0
      %3159 = vmatprep.subr.mxu0 0.0
      %3160 = vmatpush1.msra.mxu0 0.0
      %3161 = vmatprep.subr.mxu0 0.0
      %3162 = vmatpush1.msra.mxu0 0.0
      %3163 = vmatprep.subr.mxu0 0.0
      %3164 = vmatpush1.msra.mxu0 0.0
      %3165 = vmatprep.subr.mxu0 0.0
      %3166 = vmatpush1.msra.mxu0 0.0
      %3167 = vmatprep.subr.mxu0 0.0
      %3168 = vmatpush1.msra.mxu0 0.0
      %3169 = vmatprep.subr.mxu0 0.0
      %3170 = vmatpush1.msra.mxu0 0.0
      %3171 = vmatprep.subr.mxu0 0.0
      %3172 = vmatpush1.msra.mxu0 0.0
      %3173 = vmatprep.subr.mxu0 0.0
      %3174 = vmatpush1.msra.mxu0 0.0
      %3175 = vmatprep.subr.mxu0 0.0
      %3176 = vmatpush1.msra.mxu0 0.0
      %3177 = vmatprep.subr.mxu0 0.0
      %3178 = vmatpush1.msra.mxu0 0.0
      %3179 = vmatprep.subr.mxu0 0.0
      %3180 = vmatpush1.msra.mxu0 0.0
      %3181 = vmatprep.mubr.f32.mxu0 0.0
      %3182 = vmatmul.mubr.f32.gmra.mrb[0].mxu0 %v3112
      %v3183 = vpop.f32.mrb[0].mxu0
      %v3184 = vadd.f32 %v3109, %v3183
      %v3185 = vpop.f32.mrb[0].mxu0
      %3186 = vdwg.mxu0
      %v3187 = vtanh.pop %v3184
      %3189 = vrot.lane.b32.xlu0 %v3187, 4
      %v3190 = vpop.permute.xlu0 %3189
      %v3192 = vsel %vm2047, %v3006, %v3190
      %v3193 = vmul.f32 %v3192, %v3192
      %v3194 = vsel %vm1233, %v3193, 0.0
      %3195 = vadd.xlane.f32.xlu0 %v3194
      %v3196 = vpop.xlane.xlu0 %3195
      %v3197 = vadd.f32 %v3196, 1e-12
      %v3198 = vrsqrt.pop %v3197
      %v3199 = vmul.f32 %v3192, %v3198
      %v3200 = vld [vmem:[%s9] sm:$0xff]
      %v3201 = vld [vmem:[%s7] sm:$0xff]
      %v3203 = vsel %vm1233, %v3199, 0
      %3205 = vmatprep.subr.mxu0 0.0
      %3206 = vmatpush1.msra.mxu0 %v3201
      %3207 = vmatprep.subr.mxu0 0.0
      %3208 = vmatpush1.msra.mxu0 0.0
      %3209 = vmatprep.subr.mxu0 0.0
      %3210 = vmatpush1.msra.mxu0 0.0
      %3211 = vmatprep.subr.mxu0 0.0
      %3212 = vmatpush1.msra.mxu0 0.0
      %3213 = vmatprep.subr.mxu0 0.0
      %3214 = vmatpush1.msra.mxu0 0.0
      %3215 = vmatprep.subr.mxu0 0.0
      %3216 = vmatpush1.msra.mxu0 0.0
      %3217 = vmatprep.subr.mxu0 0.0
      %3218 = vmatpush1.msra.mxu0 0.0
      %3219 = vmatprep.subr.mxu0 0.0
      %3220 = vmatpush1.msra.mxu0 0.0
      %3221 = vmatprep.subr.mxu0 0.0
      %3222 = vmatpush1.msra.mxu0 0.0
      %3223 = vmatprep.subr.mxu0 0.0
      %3224 = vmatpush1.msra.mxu0 0.0
      %3225 = vmatprep.subr.mxu0 0.0
      %3226 = vmatpush1.msra.mxu0 0.0
      %3227 = vmatprep.subr.mxu0 0.0
      %3228 = vmatpush1.msra.mxu0 0.0
      %3229 = vmatprep.subr.mxu0 0.0
      %3230 = vmatpush1.msra.mxu0 0.0
      %3231 = vmatprep.subr.mxu0 0.0
      %3232 = vmatpush1.msra.mxu0 0.0
      %3233 = vmatprep.subr.mxu0 0.0
      %3234 = vmatpush1.msra.mxu0 0.0
      %3235 = vmatprep.subr.mxu0 0.0
      %3236 = vmatpush1.msra.mxu0 0.0
      %3237 = vmatprep.subr.mxu0 0.0
      %3238 = vmatpush1.msra.mxu0 0.0
      %3239 = vmatprep.subr.mxu0 0.0
      %3240 = vmatpush1.msra.mxu0 0.0
      %3241 = vmatprep.subr.mxu0 0.0
      %3242 = vmatpush1.msra.mxu0 0.0
      %3243 = vmatprep.subr.mxu0 0.0
      %3244 = vmatpush1.msra.mxu0 0.0
      %3245 = vmatprep.subr.mxu0 0.0
      %3246 = vmatpush1.msra.mxu0 0.0
      %3247 = vmatprep.subr.mxu0 0.0
      %3248 = vmatpush1.msra.mxu0 0.0
      %3249 = vmatprep.subr.mxu0 0.0
      %3250 = vmatpush1.msra.mxu0 0.0
      %3251 = vmatprep.subr.mxu0 0.0
      %3252 = vmatpush1.msra.mxu0 0.0
      %3253 = vmatprep.subr.mxu0 0.0
      %3254 = vmatpush1.msra.mxu0 0.0
      %3255 = vmatprep.subr.mxu0 0.0
      %3256 = vmatpush1.msra.mxu0 0.0
      %3257 = vmatprep.subr.mxu0 0.0
      %3258 = vmatpush1.msra.mxu0 0.0
      %3259 = vmatprep.subr.mxu0 0.0
      %3260 = vmatpush1.msra.mxu0 0.0
      %3261 = vmatprep.subr.mxu0 0.0
      %3262 = vmatpush1.msra.mxu0 0.0
      %3263 = vmatprep.subr.mxu0 0.0
      %3264 = vmatpush1.msra.mxu0 0.0
      %3265 = vmatprep.subr.mxu0 0.0
      %3266 = vmatpush1.msra.mxu0 0.0
      %3267 = vmatprep.subr.mxu0 0.0
      %3268 = vmatpush1.msra.mxu0 0.0
      %3269 = vmatprep.mubr.f32.mxu0 0.0
      %3270 = vmatmul.mubr.f32.gmra.mrb[0].mxu0 %v3203
      %v3271 = vpop.f32.mrb[0].mxu0
      %v3272 = vadd.f32 0.0, %v3271
      %v3273 = vpop.f32.mrb[0].mxu0
      %3274 = vdwg.mxu0
      %3275 = vmatprep.subr.mxu0 0.0
      %3276 = vmatpush1.msra.mxu0 %v3200
      %3277 = vmatprep.subr.mxu0 0.0
      %3278 = vmatpush1.msra.mxu0 0.0
      %3279 = vmatprep.subr.mxu0 0.0
      %3280 = vmatpush1.msra.mxu0 0.0
      %3281 = vmatprep.subr.mxu0 0.0
      %3282 = vmatpush1.msra.mxu0 0.0
      %3283 = vmatprep.subr.mxu0 0.0
      %3284 = vmatpush1.msra.mxu0 0.0
      %3285 = vmatprep.subr.mxu0 0.0
      %3286 = vmatpush1.msra.mxu0 0.0
      %3287 = vmatprep.subr.mxu0 0.0
      %3288 = vmatpush1.msra.mxu0 0.0
      %3289 = vmatprep.subr.mxu0 0.0
      %3290 = vmatpush1.msra.mxu0 0.0
      %3291 = vmatprep.subr.mxu0 0.0
      %3292 = vmatpush1.msra.mxu0 0.0
      %3293 = vmatprep.subr.mxu0 0.0
      %3294 = vmatpush1.msra.mxu0 0.0
      %3295 = vmatprep.subr.mxu0 0.0
      %3296 = vmatpush1.msra.mxu0 0.0
      %3297 = vmatprep.subr.mxu0 0.0
      %3298 = vmatpush1.msra.mxu0 0.0
      %3299 = vmatprep.subr.mxu0 0.0
      %3300 = vmatpush1.msra.mxu0 0.0
      %3301 = vmatprep.subr.mxu0 0.0
      %3302 = vmatpush1.msra.mxu0 0.0
      %3303 = vmatprep.subr.mxu0 0.0
      %3304 = vmatpush1.msra.mxu0 0.0
      %3305 = vmatprep.subr.mxu0 0.0
      %3306 = vmatpush1.msra.mxu0 0.0
      %3307 = vmatprep.subr.mxu0 0.0
      %3308 = vmatpush1.msra.mxu0 0.0
      %3309 = vmatprep.subr.mxu0 0.0
      %3310 = vmatpush1.msra.mxu0 0.0
      %3311 = vmatprep.subr.mxu0 0.0
      %3312 = vmatpush1.msra.mxu0 0.0
      %3313 = vmatprep.subr.mxu0 0.0
      %3314 = vmatpush1.msra.mxu0 0.0
      %3315 = vmatprep.subr.mxu0 0.0
      %3316 = vmatpush1.msra.mxu0 0.0
      %3317 = vmatprep.subr.mxu0 0.0
      %3318 = vmatpush1.msra.mxu0 0.0
      %3319 = vmatprep.subr.mxu0 0.0
      %3320 = vmatpush1.msra.mxu0 0.0
      %3321 = vmatprep.subr.mxu0 0.0
      %3322 = vmatpush1.msra.mxu0 0.0
      %3323 = vmatprep.subr.mxu0 0.0
      %3324 = vmatpush1.msra.mxu0 0.0
      %3325 = vmatprep.subr.mxu0 0.0
      %3326 = vmatpush1.msra.mxu0 0.0
      %3327 = vmatprep.subr.mxu0 0.0
      %3328 = vmatpush1.msra.mxu0 0.0
      %3329 = vmatprep.subr.mxu0 0.0
      %3330 = vmatpush1.msra.mxu0 0.0
      %3331 = vmatprep.subr.mxu0 0.0
      %3332 = vmatpush1.msra.mxu0 0.0
      %3333 = vmatprep.subr.mxu0 0.0
      %3334 = vmatpush1.msra.mxu0 0.0
      %3335 = vmatprep.subr.mxu0 0.0
      %3336 = vmatpush1.msra.mxu0 0.0
      %3337 = vmatprep.subr.mxu0 0.0
      %3338 = vmatpush1.msra.mxu0 0.0
      %3339 = vmatprep.mubr.f32.mxu0 0.0
      %3340 = vmatmul.mubr.f32.gmra.mrb[0].mxu0 %v1235
      %v3341 = vpop.f32.mrb[0].mxu0
      %v3342 = vadd.f32 %v3272, %v3341
      %v3343 = vpop.f32.mrb[0].mxu0
      %3344 = vdwg.mxu0
      %v3345 = vld [vmem:[%s5] sm:$0x1]
      %v3347 = vlaneseq
      %v3348 = vshrl.u32 %v3347, 7
      %v3349 = vsub.s32 0, %v3348
      %v3350 = vrot.slane %v3345, %v3349
      %v3352 = vadd.f32 %v3342, %v3350
      %v3353 = vmax.f32 %v3352, 0.0
      %v3354 = vld [vmem:[%s13] sm:$0xff]
      %v3355 = vld [vmem:[%s13 + $0x8] sm:$0xff]
      %v3356 = vld [vmem:[%s11] sm:$0x1]
      %v3358 = vlaneseq
      %v3359 = vshrl.u32 %v3358, 7
      %v3360 = vsub.s32 0, %v3359
      %v3361 = vrot.slane %v3356, %v3360
      %vm3363 = vcmask 130048
      %v3365 = vsel %vm3363, %v3353, 0
      %3367 = vmatprep.subr.mxu0 0.0
      %3368 = vmatpush1.msra.mxu0 %v3354
      %3369 = vmatprep.subr.mxu0 0.0
      %3370 = vmatpush1.msra.mxu0 %v3355
      %3371 = vmatprep.subr.mxu0 0.0
      %3372 = vmatpush1.msra.mxu0 0.0
      %3373 = vmatprep.subr.mxu0 0.0
      %3374 = vmatpush1.msra.mxu0 0.0
      %3375 = vmatprep.subr.mxu0 0.0
      %3376 = vmatpush1.msra.mxu0 0.0
      %3377 = vmatprep.subr.mxu0 0.0
      %3378 = vmatpush1.msra.mxu0 0.0
      %3379 = vmatprep.subr.mxu0 0.0
      %3380 = vmatpush1.msra.mxu0 0.0
      %3381 = vmatprep.subr.mxu0 0.0
      %3382 = vmatpush1.msra.mxu0 0.0
      %3383 = vmatprep.subr.mxu0 0.0
      %3384 = vmatpush1.msra.mxu0 0.0
      %3385 = vmatprep.subr.mxu0 0.0
      %3386 = vmatpush1.msra.mxu0 0.0
      %3387 = vmatprep.subr.mxu0 0.0
      %3388 = vmatpush1.msra.mxu0 0.0
      %3389 = vmatprep.subr.mxu0 0.0
      %3390 = vmatpush1.msra.mxu0 0.0
      %3391 = vmatprep.subr.mxu0 0.0
      %3392 = vmatpush1.msra.mxu0 0.0
      %3393 = vmatprep.subr.mxu0 0.0
      %3394 = vmatpush1.msra.mxu0 0.0
      %3395 = vmatprep.subr.mxu0 0.0
      %3396 = vmatpush1.msra.mxu0 0.0
      %3397 = vmatprep.subr.mxu0 0.0
      %3398 = vmatpush1.msra.mxu0 0.0
      %3399 = vmatprep.subr.mxu0 0.0
      %3400 = vmatpush1.msra.mxu0 0.0
      %3401 = vmatprep.subr.mxu0 0.0
      %3402 = vmatpush1.msra.mxu0 0.0
      %3403 = vmatprep.subr.mxu0 0.0
      %3404 = vmatpush1.msra.mxu0 0.0
      %3405 = vmatprep.subr.mxu0 0.0
      %3406 = vmatpush1.msra.mxu0 0.0
      %3407 = vmatprep.subr.mxu0 0.0
      %3408 = vmatpush1.msra.mxu0 0.0
      %3409 = vmatprep.subr.mxu0 0.0
      %3410 = vmatpush1.msra.mxu0 0.0
      %3411 = vmatprep.subr.mxu0 0.0
      %3412 = vmatpush1.msra.mxu0 0.0
      %3413 = vmatprep.subr.mxu0 0.0
      %3414 = vmatpush1.msra.mxu0 0.0
      %3415 = vmatprep.subr.mxu0 0.0
      %3416 = vmatpush1.msra.mxu0 0.0
      %3417 = vmatprep.subr.mxu0 0.0
      %3418 = vmatpush1.msra.mxu0 0.0
      %3419 = vmatprep.subr.mxu0 0.0
      %3420 = vmatpush1.msra.mxu0 0.0
      %3421 = vmatprep.subr.mxu0 0.0
      %3422 = vmatpush1.msra.mxu0 0.0
      %3423 = vmatprep.subr.mxu0 0.0
      %3424 = vmatpush1.msra.mxu0 0.0
      %3425 = vmatprep.subr.mxu0 0.0
      %3426 = vmatpush1.msra.mxu0 0.0
      %3427 = vmatprep.subr.mxu0 0.0
      %3428 = vmatpush1.msra.mxu0 0.0
      %3429 = vmatprep.subr.mxu0 0.0
      %3430 = vmatpush1.msra.mxu0 0.0
      %3431 = vmatprep.mubr.f32.mxu0 0.0
      %3432 = vmatmul.mubr.f32.gmra.mrb[0].mxu0 %v3365
      %v3433 = vpop.f32.mrb[0].mxu0
      %v3434 = vadd.f32 %v3361, %v3433
      %v3435 = vpop.f32.mrb[0].mxu0
      %3436 = vdwg.mxu0
      %v3437 = vmax.f32 %v3434, 0.0
      %v3438 = vld [vmem:[%s17] sm:$0xff]
      %v3439 = vld [vmem:[%s15] sm:$0x1]
      %v3441 = vlaneseq
      %v3442 = vshrl.u32 %v3441, 7
      %v3443 = vsub.s32 0, %v3442
      %v3444 = vrot.slane %v3439, %v3443
      %v3447 = vsel %vm1233, %v3437, 0
      %3449 = vmatprep.subr.mxu0 0.0
      %3450 = vmatpush1.msra.mxu0 %v3438
      %3451 = vmatprep.subr.mxu0 0.0
      %3452 = vmatpush1.msra.mxu0 0.0
      %3453 = vmatprep.subr.mxu0 0.0
      %3454 = vmatpush1.msra.mxu0 0.0
      %3455 = vmatprep.subr.mxu0 0.0
      %3456 = vmatpush1.msra.mxu0 0.0
      %3457 = vmatprep.subr.mxu0 0.0
      %3458 = vmatpush1.msra.mxu0 0.0
      %3459 = vmatprep.subr.mxu0 0.0
      %3460 = vmatpush1.msra.mxu0 0.0
      %3461 = vmatprep.subr.mxu0 0.0
      %3462 = vmatpush1.msra.mxu0 0.0
      %3463 = vmatprep.subr.mxu0 0.0
      %3464 = vmatpush1.msra.mxu0 0.0
      %3465 = vmatprep.subr.mxu0 0.0
      %3466 = vmatpush1.msra.mxu0 0.0
      %3467 = vmatprep.subr.mxu0 0.0
      %3468 = vmatpush1.msra.mxu0 0.0
      %3469 = vmatprep.subr.mxu0 0.0
      %3470 = vmatpush1.msra.mxu0 0.0
      %3471 = vmatprep.subr.mxu0 0.0
      %3472 = vmatpush1.msra.mxu0 0.0
      %3473 = vmatprep.subr.mxu0 0.0
      %3474 = vmatpush1.msra.mxu0 0.0
      %3475 = vmatprep.subr.mxu0 0.0
      %3476 = vmatpush1.msra.mxu0 0.0
      %3477 = vmatprep.subr.mxu0 0.0
      %3478 = vmatpush1.msra.mxu0 0.0
      %3479 = vmatprep.subr.mxu0 0.0
      %3480 = vmatpush1.msra.mxu0 0.0
      %3481 = vmatprep.subr.mxu0 0.0
      %3482 = vmatpush1.msra.mxu0 0.0
      %3483 = vmatprep.subr.mxu0 0.0
      %3484 = vmatpush1.msra.mxu0 0.0
      %3485 = vmatprep.subr.mxu0 0.0
      %3486 = vmatpush1.msra.mxu0 0.0
      %3487 = vmatprep.subr.mxu0 0.0
      %3488 = vmatpush1.msra.mxu0 0.0
      %3489 = vmatprep.subr.mxu0 0.0
      %3490 = vmatpush1.msra.mxu0 0.0
      %3491 = vmatprep.subr.mxu0 0.0
      %3492 = vmatpush1.msra.mxu0 0.0
      %3493 = vmatprep.subr.mxu0 0.0
      %3494 = vmatpush1.msra.mxu0 0.0
      %3495 = vmatprep.subr.mxu0 0.0
      %3496 = vmatpush1.msra.mxu0 0.0
      %3497 = vmatprep.subr.mxu0 0.0
      %3498 = vmatpush1.msra.mxu0 0.0
      %3499 = vmatprep.subr.mxu0 0.0
      %3500 = vmatpush1.msra.mxu0 0.0
      %3501 = vmatprep.subr.mxu0 0.0
      %3502 = vmatpush1.msra.mxu0 0.0
      %3503 = vmatprep.subr.mxu0 0.0
      %3504 = vmatpush1.msra.mxu0 0.0
      %3505 = vmatprep.subr.mxu0 0.0
      %3506 = vmatpush1.msra.mxu0 0.0
      %3507 = vmatprep.subr.mxu0 0.0
      %3508 = vmatpush1.msra.mxu0 0.0
      %3509 = vmatprep.subr.mxu0 0.0
      %3510 = vmatpush1.msra.mxu0 0.0
      %3511 = vmatprep.subr.mxu0 0.0
      %3512 = vmatpush1.msra.mxu0 0.0
      %3513 = vmatprep.mubr.f32.mxu0 0.0
      %3514 = vmatmul.mubr.f32.gmra.mrb[0].mxu0 %v3447
      %v3515 = vpop.f32.mrb[0].mxu0
      %v3516 = vadd.f32 %v3444, %v3515
      %v3517 = vpop.f32.mrb[0].mxu0
      %3518 = vdwg.mxu0
      %vm3519 = vcmask 23552
      %3520 = vst.msk [vmem:[%s1222] sm:$0xff] %vm3519, %v3516
      %p3521 = scmp.lt.s32.totalorder %s92, 1
      %s3522 = scalar_select %p3521, %s92, 1
      %s3523 = smul.addr %s3522, 8
      %s3524 = scalar_lea.vmem %s81, %s3523
      // Predicated region
      $region181: #{gnn_forward.1} parent=179 // pred_check
        %p3525 = pneg %p960
      $region182: #{gnn_forward.1} parent=179 // pred_check_branch
        %3527 = sbr.rel (%p3525) target = $region184
      $region183: #{gnn_forward.1} parent=179 // pred_region
        _
      $region184: #{gnn_forward.1} parent=179 // pred_fallthru
        _
    $region180: #{gnn_forward.1} parent=5 // pred_fallthru
      _
    %p3528 = scmp.le.s32.totalorder 2, %s87
    // Predicated region
    $region185: #{gnn_forward.1} parent=5 // pred_check
      %p3529 = pneg %p3528
    $region186: #{gnn_forward.1} parent=5 // pred_check_branch
      %3531 = sbr.rel (%p3529) target = $region188
    $region187: #{gnn_forward.1} parent=5 // pred_region
      %s3532 = ssub.s32 %s87, 2
      // Predicated region
      $region189: #{gnn_forward.1} parent=187 // pred_check
        %p3533 = pneg %p966
      $region190: #{gnn_forward.1} parent=187 // pred_check_branch
        %3535 = sbr.rel (%p3533) target = $region192
      $region191: #{gnn_forward.1} parent=187 // pred_region
        %p3536 = scmp.lt.s32.totalorder %s93, 1
        %s3537 = scalar_select %p3536, %s93, 1
        %s3538 = smul.addr %s3537, 8
        %s3539 = scalar_lea.vmem %s81, %s3538
      $region192: #{gnn_forward.1} parent=187 // pred_fallthru
        _
    $region188: #{gnn_forward.1} parent=5 // pred_fallthru
      _
  $region6: #{gnn_forward.1} parent=0 // loop_footer
    %s91 = sadd.s32 1, %s87
  $region7: #{gnn_forward.1} parent=0 // loop_footer_branch
    %86 = sbr.rel target = $region3
  $region8: #{gnn_forward.1} parent=0 // loop_exit
    _

</llo_original>
